<compile_context>
chip_gen: v7x
topology: tpu7x:2x2x1
jax: 0.10.0
libtpu: 0.0.40
codegen_flags: <defaults>
</compile_context>

<pallas_src>
import functools

import jax
import jax.numpy as jnp
from jax import lax
from jax.experimental import pallas as pl
from jax.experimental.pallas import tpu as pltpu


# ----------------------------------------------------------------------------
# Fused Pallas kernel: 2-layer bidirectional LSTM + classifier
# ----------------------------------------------------------------------------
def _lstm4ts_kernel(x2_ref,        # (T*B, Din)  time-major flattened input
                    w0ih_ref,      # (Din, 8H)   [W_ih_fwd^T | W_ih_rev^T]
                    b0_ref,        # (1, 8H)     [b_fwd | b_rev]
                    w0hhf_ref,     # (H, 4H)     layer-0 fwd W_hh^T (bf16)
                    w0hhr_ref,     # (H, 4H)     layer-0 rev W_hh^T (bf16)
                    w1f_ih_ref,    # (2H, 4H)    layer-1 fwd W_ih^T
                    b1f_ref,       # (1, 4H)
                    w1r_ih_ref,    # (2H, 4H)    layer-1 rev W_ih^T
                    w1r_hh_ref,    # (H, 4H)     layer-1 rev W_hh^T (bf16)
                    b1r_ref,       # (1, 4H)
                    wc_ref,        # (2H, CPAD)  classifier W^T (lane padded)
                    bc_ref,        # (1, CPAD)
                    out_ref,       # (B, CPAD)
                    h01_ref,       # VMEM scratch (T*B, 2H): layer-0 outputs
                    *, hidden, seq_len, batch):
    H = hidden
    T = seq_len
    B = batch
    f32 = jnp.float32
    bf16 = jnp.bfloat16

    def cell(gates, c_prev):
        # PyTorch gate order [i, f, g, o].
        i = jax.nn.sigmoid(gates[:, 0:H])
        f = jax.nn.sigmoid(gates[:, H:2 * H])
        g = jnp.tanh(gates[:, 2 * H:3 * H])
        o = jax.nn.sigmoid(gates[:, 3 * H:4 * H])
        c = f * c_prev + i * g
        h = o * jnp.tanh(c)
        return h, c

    # ----- layer 0: batched input projection (hoisted off the recurrence) ---
    x2 = x2_ref[...]
    w0ih = w0ih_ref[...]
    b0 = b0_ref[...]
    if x2.shape[1] == 1:
        # Din == 1: a K=1 matmul is just a broadcast multiply -> keep it on
        # the VPU instead of wasting an MXU push/pop.
        xw0 = x2 * w0ih + b0                                     # (T*B, 8H)
    else:
        xw0 = jnp.dot(x2, w0ih, preferred_element_type=f32) + b0
    xw0_f = xw0[:, 0:4 * H]                                      # (T*B, 4H)
    xw0_r = xw0[:, 4 * H:8 * H]                                  # (T*B, 4H)

    # ----- layer 0: fwd + rev recurrences, fully unrolled (T static) --------
    w0hh_f = w0hhf_ref[...]                                      # bf16
    w0hh_r = w0hhr_ref[...]                                      # bf16
    h_f = jnp.zeros((B, H), f32)
    c_f = jnp.zeros((B, H), f32)
    h_r = jnp.zeros((B, H), f32)
    c_r = jnp.zeros((B, H), f32)
    for s in range(T):
        rec_f = jnp.dot(h_f.astype(bf16), w0hh_f, preferred_element_type=f32)
        rec_r = jnp.dot(h_r.astype(bf16), w0hh_r, preferred_element_type=f32)
        h_f, c_f = cell(xw0_f[s * B:(s + 1) * B, :] + rec_f, c_f)
        h_r, c_r = cell(xw0_r[(T - 1 - s) * B:(T - s) * B, :] + rec_r, c_r)
        # History writeback (layer-1 input), time-major rows; these stores do
        # not feed the next step so they sit off the recurrent chain.
        h01_ref[s * B:(s + 1) * B, 0:H] = h_f
        h01_ref[(T - 1 - s) * B:(T - s) * B, H:2 * H] = h_r

    # ----- layer 1: only what the classifier (out[:, 0, :]) needs -----------
    h01 = h01_ref[...]                                           # (T*B, 2H)

    # Forward direction: single step at t=0 from zero state (h_prev@W_hh = 0).
    g1f = (jnp.dot(h01[0:B, :], w1f_ih_ref[...], preferred_element_type=f32)
           + b1f_ref[...])
    h1_f0, _ = cell(g1f, jnp.zeros((B, H), f32))

    # Reverse direction: one batched input projection, then a serial reverse
    # pass keeping only the final hidden state (time 0).
    xw1r = (jnp.dot(h01, w1r_ih_ref[...], preferred_element_type=f32)
            + b1r_ref[...])                                      # (T*B, 4H)
    w1r_hh = w1r_hh_ref[...]                                     # bf16
    h = jnp.zeros((B, H), f32)
    c = jnp.zeros((B, H), f32)
    for s in range(T):
        t = T - 1 - s
        g = (xw1r[t * B:(t + 1) * B, :]
             + jnp.dot(h.astype(bf16), w1r_hh, preferred_element_type=f32))
        h, c = cell(g, c)
    h1_r0 = h

    # ----- classifier (lane-dense padded output, no lane concat) ------------
    out_ref[...] = (jnp.dot(h1_f0, wc_ref[0:H, :], preferred_element_type=f32)
                    + jnp.dot(h1_r0, wc_ref[H:2 * H, :],
                              preferred_element_type=f32)
                    + bc_ref[...])


# ----------------------------------------------------------------------------
# Wrapper
# ----------------------------------------------------------------------------
@functools.partial(jax.jit, static_argnames=("hidden", "num_classes"))
def lstm4ts_forward(x, kw, hidden, num_classes):
    """x: (B, T, Din) batch_first -> logits (B, num_classes)."""
    B, T, Din = x.shape
    H = hidden
    CPAD = kw["wc_pad"].shape[1]
    # Time-major, 2-D lane-dense input (row = t*B + b).
    x2 = jnp.transpose(x, (1, 0, 2)).reshape(T * B, Din).astype(jnp.float32)

    def full(shape):
        return pl.BlockSpec(shape, lambda i, n=len(shape): (0,) * n)

    kernel = functools.partial(_lstm4ts_kernel, hidden=H, seq_len=T, batch=B)
    logits_pad = pl.pallas_call(
        kernel,
        out_shape=jax.ShapeDtypeStruct((B, CPAD), jnp.float32),
        grid=(1,),
        in_specs=[
            full((T * B, Din)),
            full((Din, 8 * H)),
            full((1, 8 * H)),
            full((H, 4 * H)),
            full((H, 4 * H)),
            full((2 * H, 4 * H)),
            full((1, 4 * H)),
            full((2 * H, 4 * H)),
            full((H, 4 * H)),
            full((1, 4 * H)),
            full((2 * H, CPAD)),
            full((1, CPAD)),
        ],
        out_specs=full((B, CPAD)),
        scratch_shapes=[pltpu.VMEM((T * B, 2 * H), jnp.float32)],
        compiler_params=pltpu.CompilerParams(
            dimension_semantics=("arbitrary",)),
    )(x2, kw["w0_ih"], kw["b0"], kw["w0hh_f"], kw["w0hh_r"],
      kw["w1f_ih"], kw["b1f"], kw["w1r_ih"], kw["w1r_hh"], kw["b1r"],
      kw["wc_pad"], kw["bc_pad"])
    return logits_pad[:, :num_classes]


# ----------------------------------------------------------------------------
# Parameter init (deterministic, PyTorch-style uniform(-1/sqrt(H), 1/sqrt(H)))
# ----------------------------------------------------------------------------
def init_params(key, input_dim, hidden, num_layers, num_classes):
    bound = 1.0 / jnp.sqrt(jnp.float32(hidden))
    params = {}
    for layer in range(num_layers):
        in_dim = input_dim if layer == 0 else 2 * hidden
        layer_p = {}
        for direction in ("fwd", "rev"):
            key, k1, k2, k3, k4 = jax.random.split(key, 5)
            w_ih = jax.random.uniform(k1, (4 * hidden, in_dim), jnp.float32,
                                      -bound, bound)
            w_hh = jax.random.uniform(k2, (4 * hidden, hidden), jnp.float32,
                                      -bound, bound)
            b_ih = jax.random.uniform(k3, (4 * hidden,), jnp.float32,
                                      -bound, bound)
            b_hh = jax.random.uniform(k4, (4 * hidden,), jnp.float32,
                                      -bound, bound)
            layer_p[direction] = {
                "wih_t": w_ih.T,                       # (in_dim, 4H)
                "whh_t": w_hh.T,                       # (H, 4H)
                "bias": (b_ih + b_hh)[None, :],        # (1, 4H)
            }
        params[f"layer{layer}"] = layer_p

    key, k1, k2 = jax.random.split(key, 3)
    cls_bound = 1.0 / jnp.sqrt(jnp.float32(2 * hidden))
    w_cls = jax.random.uniform(k1, (num_classes, 2 * hidden), jnp.float32,
                               -cls_bound, cls_bound)
    b_cls = jax.random.uniform(k2, (num_classes,), jnp.float32,
                               -cls_bound, cls_bound)
    params["cls_w_t"] = w_cls.T                        # (2H, C)
    params["cls_b"] = b_cls[None, :]                   # (1, C)
    return params


def prepare_kernel_weights(params, hidden, num_layers, num_classes):
    """Pack per-layer/direction weights into the fused-kernel layout."""
    assert num_layers == 2, "fused kernel is specialized to 2 LSTM layers"
    H = hidden
    l0, l1 = params["layer0"], params["layer1"]

    # layer 0: concat directions along gate axis for the input projection.
    w0_ih = jnp.concatenate([l0["fwd"]["wih_t"], l0["rev"]["wih_t"]], axis=1)
    b0 = jnp.concatenate([l0["fwd"]["bias"], l0["rev"]["bias"]], axis=1)

    # classifier: pad output lanes to a multiple of 128 (lane-dense store).
    cpad = max(128, ((num_classes + 127) // 128) * 128)
    wc_pad = jnp.zeros((2 * H, cpad), jnp.float32)
    wc_pad = wc_pad.at[:, :num_classes].set(params["cls_w_t"])
    bc_pad = jnp.zeros((1, cpad), jnp.float32)
    bc_pad = bc_pad.at[:, :num_classes].set(params["cls_b"])

    return {
        "w0_ih": w0_ih, "b0": b0,
        # Recurrent weights cast to bf16 once -> single MXU pass per step.
        "w0hh_f": l0["fwd"]["whh_t"].astype(jnp.bfloat16),
        "w0hh_r": l0["rev"]["whh_t"].astype(jnp.bfloat16),
        "w1f_ih": l1["fwd"]["wih_t"], "b1f": l1["fwd"]["bias"],
        "w1r_ih": l1["rev"]["wih_t"],
        "w1r_hh": l1["rev"]["whh_t"].astype(jnp.bfloat16),
        "b1r": l1["rev"]["bias"],
        "wc_pad": wc_pad, "bc_pad": bc_pad,
    }


# ----------------------------------------------------------------------------
# Pure-JAX reference (correctness check only, f32 with explicit precision)
# ----------------------------------------------------------------------------
def _ref_lstm_dir(x_tm, wih_t, whh_t, bias, hidden):
    T, B, _ = x_tm.shape
    H = hidden
    hi = jax.lax.Precision.HIGHEST

    def step(carry, x_t):
        h_prev, c_prev = carry
        gates = (jnp.dot(x_t, wih_t, precision=hi)
                 + jnp.dot(h_prev, whh_t, precision=hi) + bias)
        i = jax.nn.sigmoid(gates[:, 0:H])
        f = jax.nn.sigmoid(gates[:, H:2 * H])
        g = jnp.tanh(gates[:, 2 * H:3 * H])
        o = jax.nn.sigmoid(gates[:, 3 * H:4 * H])
        c = f * c_prev + i * g
        h = o * jnp.tanh(c)
        return (h, c), h

    init = (jnp.zeros((B, H), jnp.float32), jnp.zeros((B, H), jnp.float32))
    _, hs = lax.scan(step, init, x_tm)
    return hs


def lstm4ts_reference(x, params, hidden, num_layers):
    h = jnp.transpose(x, (1, 0, 2)).astype(jnp.float32)
    for layer in range(num_layers):
        p = params[f"layer{layer}"]
        h_fwd = _ref_lstm_dir(h, p["fwd"]["wih_t"], p["fwd"]["whh_t"],
                              p["fwd"]["bias"], hidden)
        h_rev = jnp.flip(_ref_lstm_dir(jnp.flip(h, 0), p["rev"]["wih_t"],
                                       p["rev"]["whh_t"], p["rev"]["bias"],
                                       hidden), 0)
        h = jnp.concatenate([h_fwd, h_rev], axis=-1)
    return (jnp.dot(h[0], params["cls_w_t"],
                    precision=jax.lax.Precision.HIGHEST) + params["cls_b"])


# ----------------------------------------------------------------------------
if __name__ == "__main__":
    INPUT_DIM = 1
    SEQ_LEN = 8
    HIDDEN = 32
    NUM_LAYERS = 2
    NUM_CLASSES = 4
    BATCH = 2

    key = jax.random.PRNGKey(0)
    key, pkey, xkey = jax.random.split(key, 3)
    params = init_params(pkey, INPUT_DIM, HIDDEN, NUM_LAYERS, NUM_CLASSES)
    kernel_weights = prepare_kernel_weights(params, HIDDEN, NUM_LAYERS,
                                            NUM_CLASSES)
    x = jax.random.normal(xkey, (BATCH, SEQ_LEN, INPUT_DIM), jnp.float32)

    logits = lstm4ts_forward(x, kernel_weights, HIDDEN, NUM_CLASSES)
    logits = jax.block_until_ready(logits)

    ref = lstm4ts_reference(x, params, HIDDEN, NUM_LAYERS)
    assert logits.shape == (BATCH, NUM_CLASSES)
    # bf16 recurrent operands in the kernel (f32 everywhere else) -> allow a
    # small drift vs. the full-f32 reference.
    err = float(jnp.max(jnp.abs(logits - ref)))
    assert err < 2e-2, (err, logits, ref)

    print("KERNEL_OK")
</pallas_src>

<mosaic_0001>
module attributes {stable_mosaic.version = 11 : i64} {
  func.func @_lstm4ts_kernel(%arg0: i32, %arg1: memref<16x1xf32, #tpu.memory_space<vmem>>, %arg2: memref<1x256xf32, #tpu.memory_space<vmem>>, %arg3: memref<1x256xf32, #tpu.memory_space<vmem>>, %arg4: memref<32x128xbf16, #tpu.memory_space<vmem>>, %arg5: memref<32x128xbf16, #tpu.memory_space<vmem>>, %arg6: memref<64x128xf32, #tpu.memory_space<vmem>>, %arg7: memref<1x128xf32, #tpu.memory_space<vmem>>, %arg8: memref<64x128xf32, #tpu.memory_space<vmem>>, %arg9: memref<32x128xbf16, #tpu.memory_space<vmem>>, %arg10: memref<1x128xf32, #tpu.memory_space<vmem>>, %arg11: memref<64x128xf32, #tpu.memory_space<vmem>>, %arg12: memref<1x128xf32, #tpu.memory_space<vmem>>, %arg13: memref<2x128xf32, #tpu.memory_space<vmem>>, %arg14: memref<16x64xf32, #tpu.memory_space<vmem>>) attributes {dimension_semantics = [#tpu.dimension_semantics<arbitrary>], iteration_bounds = array<i64: 1>, scalar_prefetch = 0 : i64, scratch_operands = 1 : i64, tpu.core_type = #tpu.core_type<tc>, window_params = [{pipeline_mode = #tpu.pipeline_mode<synchronous>, transform_indices = @transform_0, window_bounds = array<i64: 16, 1>}, {pipeline_mode = #tpu.pipeline_mode<synchronous>, transform_indices = @transform_1, window_bounds = array<i64: 1, 256>}, {pipeline_mode = #tpu.pipeline_mode<synchronous>, transform_indices = @transform_2, window_bounds = array<i64: 1, 256>}, {pipeline_mode = #tpu.pipeline_mode<synchronous>, transform_indices = @transform_3, window_bounds = array<i64: 32, 128>}, {pipeline_mode = #tpu.pipeline_mode<synchronous>, transform_indices = @transform_4, window_bounds = array<i64: 32, 128>}, {pipeline_mode = #tpu.pipeline_mode<synchronous>, transform_indices = @transform_5, window_bounds = array<i64: 64, 128>}, {pipeline_mode = #tpu.pipeline_mode<synchronous>, transform_indices = @transform_6, window_bounds = array<i64: 1, 128>}, {pipeline_mode = #tpu.pipeline_mode<synchronous>, transform_indices = @transform_7, window_bounds = array<i64: 64, 128>}, {pipeline_mode = #tpu.pipeline_mode<synchronous>, transform_indices = @transform_8, window_bounds = array<i64: 32, 128>}, {pipeline_mode = #tpu.pipeline_mode<synchronous>, transform_indices = @transform_9, window_bounds = array<i64: 1, 128>}, {pipeline_mode = #tpu.pipeline_mode<synchronous>, transform_indices = @transform_10, window_bounds = array<i64: 64, 128>}, {pipeline_mode = #tpu.pipeline_mode<synchronous>, transform_indices = @transform_11, window_bounds = array<i64: 1, 128>}, {pipeline_mode = #tpu.pipeline_mode<synchronous>, transform_indices = @transform_12, window_bounds = array<i64: 2, 128>}]} {
    %c0 = arith.constant 0 : index
    %c0_0 = arith.constant 0 : index
    %0 = vector.load %arg1[%c0, %c0_0] : memref<16x1xf32, #tpu.memory_space<vmem>>, vector<16x1xf32>
    %c0_1 = arith.constant 0 : index
    %c0_2 = arith.constant 0 : index
    %1 = vector.load %arg2[%c0_1, %c0_2] : memref<1x256xf32, #tpu.memory_space<vmem>>, vector<1x256xf32>
    %c0_3 = arith.constant 0 : index
    %c0_4 = arith.constant 0 : index
    %2 = vector.load %arg3[%c0_3, %c0_4] : memref<1x256xf32, #tpu.memory_space<vmem>>, vector<1x256xf32>
    %3 = vector.broadcast %0 : vector<16x1xf32> to vector<16x256xf32>
    %4 = vector.broadcast %1 : vector<1x256xf32> to vector<16x256xf32>
    %5 = arith.mulf %3, %4 : vector<16x256xf32>
    %6 = vector.broadcast %2 : vector<1x256xf32> to vector<16x256xf32>
    %7 = arith.addf %5, %6 : vector<16x256xf32>
    %8 = vector.extract_strided_slice %7 {offsets = [0, 0], sizes = [16, 128], strides = [1, 1]} : vector<16x256xf32> to vector<16x128xf32>
    %9 = vector.extract_strided_slice %7 {offsets = [0, 128], sizes = [16, 128], strides = [1, 1]} : vector<16x256xf32> to vector<16x128xf32>
    %c0_5 = arith.constant 0 : index
    %c0_6 = arith.constant 0 : index
    %10 = vector.load %arg4[%c0_5, %c0_6] : memref<32x128xbf16, #tpu.memory_space<vmem>>, vector<32x128xbf16>
    %c0_7 = arith.constant 0 : index
    %c0_8 = arith.constant 0 : index
    %11 = vector.load %arg5[%c0_7, %c0_8] : memref<32x128xbf16, #tpu.memory_space<vmem>>, vector<32x128xbf16>
    %cst = arith.constant 0.000000e+00 : f32
    %12 = vector.broadcast %cst : f32 to vector<2x32xf32>
    %cst_9 = arith.constant 0.000000e+00 : f32
    %13 = vector.broadcast %cst_9 : f32 to vector<2x32xf32>
    %cst_10 = arith.constant 0.000000e+00 : f32
    %14 = vector.broadcast %cst_10 : f32 to vector<2x32xf32>
    %cst_11 = arith.constant 0.000000e+00 : f32
    %15 = vector.broadcast %cst_11 : f32 to vector<2x32xf32>
    %16 = arith.truncf %12 : vector<2x32xf32> to vector<2x32xbf16>
    %cst_12 = arith.constant dense<0.000000e+00> : vector<2x128xf32>
    %17 = tpu.matmul %16, %10, %cst_12 {dimension_numbers = #tpu.dot_dimension_numbers<[1], [0], [0], [1], [0, 0, 1, 1], [], []>} : vector<2x32xbf16>, vector<32x128xbf16>, vector<2x128xf32> -> vector<2x128xf32>
    %18 = arith.truncf %14 : vector<2x32xf32> to vector<2x32xbf16>
    %cst_13 = arith.constant dense<0.000000e+00> : vector<2x128xf32>
    %19 = tpu.matmul %18, %11, %cst_13 {dimension_numbers = #tpu.dot_dimension_numbers<[1], [0], [0], [1], [0, 0, 1, 1], [], []>} : vector<2x32xbf16>, vector<32x128xbf16>, vector<2x128xf32> -> vector<2x128xf32>
    %20 = vector.extract_strided_slice %8 {offsets = [0, 0], sizes = [2, 128], strides = [1, 1]} : vector<16x128xf32> to vector<2x128xf32>
    %21 = arith.addf %20, %17 : vector<2x128xf32>
    %22 = vector.extract_strided_slice %21 {offsets = [0, 0], sizes = [2, 32], strides = [1, 1]} : vector<2x128xf32> to vector<2x32xf32>
    %23 = arith.negf %22 : vector<2x32xf32>
    %24 = math.exp %23 : vector<2x32xf32>
    %cst_14 = arith.constant 1.000000e+00 : f32
    %25 = vector.broadcast %cst_14 : f32 to vector<2x32xf32>
    %26 = arith.addf %25, %24 : vector<2x32xf32>
    %27 = arith.divf %25, %26 : vector<2x32xf32>
    %28 = vector.extract_strided_slice %21 {offsets = [0, 32], sizes = [2, 32], strides = [1, 1]} : vector<2x128xf32> to vector<2x32xf32>
    %29 = arith.negf %28 : vector<2x32xf32>
    %30 = math.exp %29 : vector<2x32xf32>
    %cst_15 = arith.constant 1.000000e+00 : f32
    %31 = vector.broadcast %cst_15 : f32 to vector<2x32xf32>
    %32 = arith.addf %31, %30 : vector<2x32xf32>
    %33 = arith.divf %31, %32 : vector<2x32xf32>
    %34 = vector.extract_strided_slice %21 {offsets = [0, 64], sizes = [2, 32], strides = [1, 1]} : vector<2x128xf32> to vector<2x32xf32>
    %35 = math.tanh %34 : vector<2x32xf32>
    %36 = vector.extract_strided_slice %21 {offsets = [0, 96], sizes = [2, 32], strides = [1, 1]} : vector<2x128xf32> to vector<2x32xf32>
    %37 = arith.negf %36 : vector<2x32xf32>
    %38 = math.exp %37 : vector<2x32xf32>
    %cst_16 = arith.constant 1.000000e+00 : f32
    %39 = vector.broadcast %cst_16 : f32 to vector<2x32xf32>
    %40 = arith.addf %39, %38 : vector<2x32xf32>
    %41 = arith.divf %39, %40 : vector<2x32xf32>
    %42 = arith.mulf %33, %13 : vector<2x32xf32>
    %43 = arith.mulf %27, %35 : vector<2x32xf32>
    %44 = arith.addf %42, %43 : vector<2x32xf32>
    %45 = math.tanh %44 : vector<2x32xf32>
    %46 = arith.mulf %41, %45 : vector<2x32xf32>
    %47 = vector.extract_strided_slice %9 {offsets = [14, 0], sizes = [2, 128], strides = [1, 1]} : vector<16x128xf32> to vector<2x128xf32>
    %48 = arith.addf %47, %19 : vector<2x128xf32>
    %49 = vector.extract_strided_slice %48 {offsets = [0, 0], sizes = [2, 32], strides = [1, 1]} : vector<2x128xf32> to vector<2x32xf32>
    %50 = arith.negf %49 : vector<2x32xf32>
    %51 = math.exp %50 : vector<2x32xf32>
    %cst_17 = arith.constant 1.000000e+00 : f32
    %52 = vector.broadcast %cst_17 : f32 to vector<2x32xf32>
    %53 = arith.addf %52, %51 : vector<2x32xf32>
    %54 = arith.divf %52, %53 : vector<2x32xf32>
    %55 = vector.extract_strided_slice %48 {offsets = [0, 32], sizes = [2, 32], strides = [1, 1]} : vector<2x128xf32> to vector<2x32xf32>
    %56 = arith.negf %55 : vector<2x32xf32>
    %57 = math.exp %56 : vector<2x32xf32>
    %cst_18 = arith.constant 1.000000e+00 : f32
    %58 = vector.broadcast %cst_18 : f32 to vector<2x32xf32>
    %59 = arith.addf %58, %57 : vector<2x32xf32>
    %60 = arith.divf %58, %59 : vector<2x32xf32>
    %61 = vector.extract_strided_slice %48 {offsets = [0, 64], sizes = [2, 32], strides = [1, 1]} : vector<2x128xf32> to vector<2x32xf32>
    %62 = math.tanh %61 : vector<2x32xf32>
    %63 = vector.extract_strided_slice %48 {offsets = [0, 96], sizes = [2, 32], strides = [1, 1]} : vector<2x128xf32> to vector<2x32xf32>
    %64 = arith.negf %63 : vector<2x32xf32>
    %65 = math.exp %64 : vector<2x32xf32>
    %cst_19 = arith.constant 1.000000e+00 : f32
    %66 = vector.broadcast %cst_19 : f32 to vector<2x32xf32>
    %67 = arith.addf %66, %65 : vector<2x32xf32>
    %68 = arith.divf %66, %67 : vector<2x32xf32>
    %69 = arith.mulf %60, %15 : vector<2x32xf32>
    %70 = arith.mulf %54, %62 : vector<2x32xf32>
    %71 = arith.addf %69, %70 : vector<2x32xf32>
    %72 = math.tanh %71 : vector<2x32xf32>
    %73 = arith.mulf %68, %72 : vector<2x32xf32>
    %c0_20 = arith.constant 0 : index
    %c0_21 = arith.constant 0 : index
    %74 = vector.load %arg14[%c0_20, %c0_21] : memref<16x64xf32, #tpu.memory_space<vmem>>, vector<2x32xf32>
    tpu.vector_store %arg14[%c0_20, %c0_21], %46 {strides = array<i32>} : memref<16x64xf32, #tpu.memory_space<vmem>>, vector<2x32xf32>,
    %c14 = arith.constant 14 : index
    %c32 = arith.constant 32 : index
    %75 = vector.load %arg14[%c14, %c32] : memref<16x64xf32, #tpu.memory_space<vmem>>, vector<2x32xf32>
    tpu.vector_store %arg14[%c14, %c32], %73 {strides = array<i32>} : memref<16x64xf32, #tpu.memory_space<vmem>>, vector<2x32xf32>,
    %76 = arith.truncf %46 : vector<2x32xf32> to vector<2x32xbf16>
    %cst_22 = arith.constant dense<0.000000e+00> : vector<2x128xf32>
    %77 = tpu.matmul %76, %10, %cst_22 {dimension_numbers = #tpu.dot_dimension_numbers<[1], [0], [0], [1], [0, 0, 1, 1], [], []>} : vector<2x32xbf16>, vector<32x128xbf16>, vector<2x128xf32> -> vector<2x128xf32>
    %78 = arith.truncf %73 : vector<2x32xf32> to vector<2x32xbf16>
    %cst_23 = arith.constant dense<0.000000e+00> : vector<2x128xf32>
    %79 = tpu.matmul %78, %11, %cst_23 {dimension_numbers = #tpu.dot_dimension_numbers<[1], [0], [0], [1], [0, 0, 1, 1], [], []>} : vector<2x32xbf16>, vector<32x128xbf16>, vector<2x128xf32> -> vector<2x128xf32>
    %80 = vector.extract_strided_slice %8 {offsets = [2, 0], sizes = [2, 128], strides = [1, 1]} : vector<16x128xf32> to vector<2x128xf32>
    %81 = arith.addf %80, %77 : vector<2x128xf32>
    %82 = vector.extract_strided_slice %81 {offsets = [0, 0], sizes = [2, 32], strides = [1, 1]} : vector<2x128xf32> to vector<2x32xf32>
    %83 = arith.negf %82 : vector<2x32xf32>
    %84 = math.exp %83 : vector<2x32xf32>
    %cst_24 = arith.constant 1.000000e+00 : f32
    %85 = vector.broadcast %cst_24 : f32 to vector<2x32xf32>
    %86 = arith.addf %85, %84 : vector<2x32xf32>
    %87 = arith.divf %85, %86 : vector<2x32xf32>
    %88 = vector.extract_strided_slice %81 {offsets = [0, 32], sizes = [2, 32], strides = [1, 1]} : vector<2x128xf32> to vector<2x32xf32>
    %89 = arith.negf %88 : vector<2x32xf32>
    %90 = math.exp %89 : vector<2x32xf32>
    %cst_25 = arith.constant 1.000000e+00 : f32
    %91 = vector.broadcast %cst_25 : f32 to vector<2x32xf32>
    %92 = arith.addf %91, %90 : vector<2x32xf32>
    %93 = arith.divf %91, %92 : vector<2x32xf32>
    %94 = vector.extract_strided_slice %81 {offsets = [0, 64], sizes = [2, 32], strides = [1, 1]} : vector<2x128xf32> to vector<2x32xf32>
    %95 = math.tanh %94 : vector<2x32xf32>
    %96 = vector.extract_strided_slice %81 {offsets = [0, 96], sizes = [2, 32], strides = [1, 1]} : vector<2x128xf32> to vector<2x32xf32>
    %97 = arith.negf %96 : vector<2x32xf32>
    %98 = math.exp %97 : vector<2x32xf32>
    %cst_26 = arith.constant 1.000000e+00 : f32
    %99 = vector.broadcast %cst_26 : f32 to vector<2x32xf32>
    %100 = arith.addf %99, %98 : vector<2x32xf32>
    %101 = arith.divf %99, %100 : vector<2x32xf32>
    %102 = arith.mulf %93, %44 : vector<2x32xf32>
    %103 = arith.mulf %87, %95 : vector<2x32xf32>
    %104 = arith.addf %102, %103 : vector<2x32xf32>
    %105 = math.tanh %104 : vector<2x32xf32>
    %106 = arith.mulf %101, %105 : vector<2x32xf32>
    %107 = vector.extract_strided_slice %9 {offsets = [12, 0], sizes = [2, 128], strides = [1, 1]} : vector<16x128xf32> to vector<2x128xf32>
    %108 = arith.addf %107, %79 : vector<2x128xf32>
    %109 = vector.extract_strided_slice %108 {offsets = [0, 0], sizes = [2, 32], strides = [1, 1]} : vector<2x128xf32> to vector<2x32xf32>
    %110 = arith.negf %109 : vector<2x32xf32>
    %111 = math.exp %110 : vector<2x32xf32>
    %cst_27 = arith.constant 1.000000e+00 : f32
    %112 = vector.broadcast %cst_27 : f32 to vector<2x32xf32>
    %113 = arith.addf %112, %111 : vector<2x32xf32>
    %114 = arith.divf %112, %113 : vector<2x32xf32>
    %115 = vector.extract_strided_slice %108 {offsets = [0, 32], sizes = [2, 32], strides = [1, 1]} : vector<2x128xf32> to vector<2x32xf32>
    %116 = arith.negf %115 : vector<2x32xf32>
    %117 = math.exp %116 : vector<2x32xf32>
    %cst_28 = arith.constant 1.000000e+00 : f32
    %118 = vector.broadcast %cst_28 : f32 to vector<2x32xf32>
    %119 = arith.addf %118, %117 : vector<2x32xf32>
    %120 = arith.divf %118, %119 : vector<2x32xf32>
    %121 = vector.extract_strided_slice %108 {offsets = [0, 64], sizes = [2, 32], strides = [1, 1]} : vector<2x128xf32> to vector<2x32xf32>
    %122 = math.tanh %121 : vector<2x32xf32>
    %123 = vector.extract_strided_slice %108 {offsets = [0, 96], sizes = [2, 32], strides = [1, 1]} : vector<2x128xf32> to vector<2x32xf32>
    %124 = arith.negf %123 : vector<2x32xf32>
    %125 = math.exp %124 : vector<2x32xf32>
    %cst_29 = arith.constant 1.000000e+00 : f32
    %126 = vector.broadcast %cst_29 : f32 to vector<2x32xf32>
    %127 = arith.addf %126, %125 : vector<2x32xf32>
    %128 = arith.divf %126, %127 : vector<2x32xf32>
    %129 = arith.mulf %120, %71 : vector<2x32xf32>
    %130 = arith.mulf %114, %122 : vector<2x32xf32>
    %131 = arith.addf %129, %130 : vector<2x32xf32>
    %132 = math.tanh %131 : vector<2x32xf32>
    %133 = arith.mulf %128, %132 : vector<2x32xf32>
    %c2 = arith.constant 2 : index
    %c0_30 = arith.constant 0 : index
    %134 = vector.load %arg14[%c2, %c0_30] : memref<16x64xf32, #tpu.memory_space<vmem>>, vector<2x32xf32>
    tpu.vector_store %arg14[%c2, %c0_30], %106 {strides = array<i32>} : memref<16x64xf32, #tpu.memory_space<vmem>>, vector<2x32xf32>,
    %c12 = arith.constant 12 : index
    %c32_31 = arith.constant 32 : index
    %135 = vector.load %arg14[%c12, %c32_31] : memref<16x64xf32, #tpu.memory_space<vmem>>, vector<2x32xf32>
    tpu.vector_store %arg14[%c12, %c32_31], %133 {strides = array<i32>} : memref<16x64xf32, #tpu.memory_space<vmem>>, vector<2x32xf32>,
    %136 = arith.truncf %106 : vector<2x32xf32> to vector<2x32xbf16>
    %cst_32 = arith.constant dense<0.000000e+00> : vector<2x128xf32>
    %137 = tpu.matmul %136, %10, %cst_32 {dimension_numbers = #tpu.dot_dimension_numbers<[1], [0], [0], [1], [0, 0, 1, 1], [], []>} : vector<2x32xbf16>, vector<32x128xbf16>, vector<2x128xf32> -> vector<2x128xf32>
    %138 = arith.truncf %133 : vector<2x32xf32> to vector<2x32xbf16>
    %cst_33 = arith.constant dense<0.000000e+00> : vector<2x128xf32>
    %139 = tpu.matmul %138, %11, %cst_33 {dimension_numbers = #tpu.dot_dimension_numbers<[1], [0], [0], [1], [0, 0, 1, 1], [], []>} : vector<2x32xbf16>, vector<32x128xbf16>, vector<2x128xf32> -> vector<2x128xf32>
    %140 = vector.extract_strided_slice %8 {offsets = [4, 0], sizes = [2, 128], strides = [1, 1]} : vector<16x128xf32> to vector<2x128xf32>
    %141 = arith.addf %140, %137 : vector<2x128xf32>
    %142 = vector.extract_strided_slice %141 {offsets = [0, 0], sizes = [2, 32], strides = [1, 1]} : vector<2x128xf32> to vector<2x32xf32>
    %143 = arith.negf %142 : vector<2x32xf32>
    %144 = math.exp %143 : vector<2x32xf32>
    %cst_34 = arith.constant 1.000000e+00 : f32
    %145 = vector.broadcast %cst_34 : f32 to vector<2x32xf32>
    %146 = arith.addf %145, %144 : vector<2x32xf32>
    %147 = arith.divf %145, %146 : vector<2x32xf32>
    %148 = vector.extract_strided_slice %141 {offsets = [0, 32], sizes = [2, 32], strides = [1, 1]} : vector<2x128xf32> to vector<2x32xf32>
    %149 = arith.negf %148 : vector<2x32xf32>
    %150 = math.exp %149 : vector<2x32xf32>
    %cst_35 = arith.constant 1.000000e+00 : f32
    %151 = vector.broadcast %cst_35 : f32 to vector<2x32xf32>
    %152 = arith.addf %151, %150 : vector<2x32xf32>
    %153 = arith.divf %151, %152 : vector<2x32xf32>
    %154 = vector.extract_strided_slice %141 {offsets = [0, 64], sizes = [2, 32], strides = [1, 1]} : vector<2x128xf32> to vector<2x32xf32>
    %155 = math.tanh %154 : vector<2x32xf32>
    %156 = vector.extract_strided_slice %141 {offsets = [0, 96], sizes = [2, 32], strides = [1, 1]} : vector<2x128xf32> to vector<2x32xf32>
    %157 = arith.negf %156 : vector<2x32xf32>
    %158 = math.exp %157 : vector<2x32xf32>
    %cst_36 = arith.constant 1.000000e+00 : f32
    %159 = vector.broadcast %cst_36 : f32 to vector<2x32xf32>
    %160 = arith.addf %159, %158 : vector<2x32xf32>
    %161 = arith.divf %159, %160 : vector<2x32xf32>
    %162 = arith.mulf %153, %104 : vector<2x32xf32>
    %163 = arith.mulf %147, %155 : vector<2x32xf32>
    %164 = arith.addf %162, %163 : vector<2x32xf32>
    %165 = math.tanh %164 : vector<2x32xf32>
    %166 = arith.mulf %161, %165 : vector<2x32xf32>
    %167 = vector.extract_strided_slice %9 {offsets = [10, 0], sizes = [2, 128], strides = [1, 1]} : vector<16x128xf32> to vector<2x128xf32>
    %168 = arith.addf %167, %139 : vector<2x128xf32>
    %169 = vector.extract_strided_slice %168 {offsets = [0, 0], sizes = [2, 32], strides = [1, 1]} : vector<2x128xf32> to vector<2x32xf32>
    %170 = arith.negf %169 : vector<2x32xf32>
    %171 = math.exp %170 : vector<2x32xf32>
    %cst_37 = arith.constant 1.000000e+00 : f32
    %172 = vector.broadcast %cst_37 : f32 to vector<2x32xf32>
    %173 = arith.addf %172, %171 : vector<2x32xf32>
    %174 = arith.divf %172, %173 : vector<2x32xf32>
    %175 = vector.extract_strided_slice %168 {offsets = [0, 32], sizes = [2, 32], strides = [1, 1]} : vector<2x128xf32> to vector<2x32xf32>
    %176 = arith.negf %175 : vector<2x32xf32>
    %177 = math.exp %176 : vector<2x32xf32>
    %cst_38 = arith.constant 1.000000e+00 : f32
    %178 = vector.broadcast %cst_38 : f32 to vector<2x32xf32>
    %179 = arith.addf %178, %177 : vector<2x32xf32>
    %180 = arith.divf %178, %179 : vector<2x32xf32>
    %181 = vector.extract_strided_slice %168 {offsets = [0, 64], sizes = [2, 32], strides = [1, 1]} : vector<2x128xf32> to vector<2x32xf32>
    %182 = math.tanh %181 : vector<2x32xf32>
    %183 = vector.extract_strided_slice %168 {offsets = [0, 96], sizes = [2, 32], strides = [1, 1]} : vector<2x128xf32> to vector<2x32xf32>
    %184 = arith.negf %183 : vector<2x32xf32>
    %185 = math.exp %184 : vector<2x32xf32>
    %cst_39 = arith.constant 1.000000e+00 : f32
    %186 = vector.broadcast %cst_39 : f32 to vector<2x32xf32>
    %187 = arith.addf %186, %185 : vector<2x32xf32>
    %188 = arith.divf %186, %187 : vector<2x32xf32>
    %189 = arith.mulf %180, %131 : vector<2x32xf32>
    %190 = arith.mulf %174, %182 : vector<2x32xf32>
    %191 = arith.addf %189, %190 : vector<2x32xf32>
    %192 = math.tanh %191 : vector<2x32xf32>
    %193 = arith.mulf %188, %192 : vector<2x32xf32>
    %c4 = arith.constant 4 : index
    %c0_40 = arith.constant 0 : index
    %194 = vector.load %arg14[%c4, %c0_40] : memref<16x64xf32, #tpu.memory_space<vmem>>, vector<2x32xf32>
    tpu.vector_store %arg14[%c4, %c0_40], %166 {strides = array<i32>} : memref<16x64xf32, #tpu.memory_space<vmem>>, vector<2x32xf32>,
    %c10 = arith.constant 10 : index
    %c32_41 = arith.constant 32 : index
    %195 = vector.load %arg14[%c10, %c32_41] : memref<16x64xf32, #tpu.memory_space<vmem>>, vector<2x32xf32>
    tpu.vector_store %arg14[%c10, %c32_41], %193 {strides = array<i32>} : memref<16x64xf32, #tpu.memory_space<vmem>>, vector<2x32xf32>,
    %196 = arith.truncf %166 : vector<2x32xf32> to vector<2x32xbf16>
    %cst_42 = arith.constant dense<0.000000e+00> : vector<2x128xf32>
    %197 = tpu.matmul %196, %10, %cst_42 {dimension_numbers = #tpu.dot_dimension_numbers<[1], [0], [0], [1], [0, 0, 1, 1], [], []>} : vector<2x32xbf16>, vector<32x128xbf16>, vector<2x128xf32> -> vector<2x128xf32>
    %198 = arith.truncf %193 : vector<2x32xf32> to vector<2x32xbf16>
    %cst_43 = arith.constant dense<0.000000e+00> : vector<2x128xf32>
    %199 = tpu.matmul %198, %11, %cst_43 {dimension_numbers = #tpu.dot_dimension_numbers<[1], [0], [0], [1], [0, 0, 1, 1], [], []>} : vector<2x32xbf16>, vector<32x128xbf16>, vector<2x128xf32> -> vector<2x128xf32>
    %200 = vector.extract_strided_slice %8 {offsets = [6, 0], sizes = [2, 128], strides = [1, 1]} : vector<16x128xf32> to vector<2x128xf32>
    %201 = arith.addf %200, %197 : vector<2x128xf32>
    %202 = vector.extract_strided_slice %201 {offsets = [0, 0], sizes = [2, 32], strides = [1, 1]} : vector<2x128xf32> to vector<2x32xf32>
    %203 = arith.negf %202 : vector<2x32xf32>
    %204 = math.exp %203 : vector<2x32xf32>
    %cst_44 = arith.constant 1.000000e+00 : f32
    %205 = vector.broadcast %cst_44 : f32 to vector<2x32xf32>
    %206 = arith.addf %205, %204 : vector<2x32xf32>
    %207 = arith.divf %205, %206 : vector<2x32xf32>
    %208 = vector.extract_strided_slice %201 {offsets = [0, 32], sizes = [2, 32], strides = [1, 1]} : vector<2x128xf32> to vector<2x32xf32>
    %209 = arith.negf %208 : vector<2x32xf32>
    %210 = math.exp %209 : vector<2x32xf32>
    %cst_45 = arith.constant 1.000000e+00 : f32
    %211 = vector.broadcast %cst_45 : f32 to vector<2x32xf32>
    %212 = arith.addf %211, %210 : vector<2x32xf32>
    %213 = arith.divf %211, %212 : vector<2x32xf32>
    %214 = vector.extract_strided_slice %201 {offsets = [0, 64], sizes = [2, 32], strides = [1, 1]} : vector<2x128xf32> to vector<2x32xf32>
    %215 = math.tanh %214 : vector<2x32xf32>
    %216 = vector.extract_strided_slice %201 {offsets = [0, 96], sizes = [2, 32], strides = [1, 1]} : vector<2x128xf32> to vector<2x32xf32>
    %217 = arith.negf %216 : vector<2x32xf32>
    %218 = math.exp %217 : vector<2x32xf32>
    %cst_46 = arith.constant 1.000000e+00 : f32
    %219 = vector.broadcast %cst_46 : f32 to vector<2x32xf32>
    %220 = arith.addf %219, %218 : vector<2x32xf32>
    %221 = arith.divf %219, %220 : vector<2x32xf32>
    %222 = arith.mulf %213, %164 : vector<2x32xf32>
    %223 = arith.mulf %207, %215 : vector<2x32xf32>
    %224 = arith.addf %222, %223 : vector<2x32xf32>
    %225 = math.tanh %224 : vector<2x32xf32>
    %226 = arith.mulf %221, %225 : vector<2x32xf32>
    %227 = vector.extract_strided_slice %9 {offsets = [8, 0], sizes = [2, 128], strides = [1, 1]} : vector<16x128xf32> to vector<2x128xf32>
    %228 = arith.addf %227, %199 : vector<2x128xf32>
    %229 = vector.extract_strided_slice %228 {offsets = [0, 0], sizes = [2, 32], strides = [1, 1]} : vector<2x128xf32> to vector<2x32xf32>
    %230 = arith.negf %229 : vector<2x32xf32>
    %231 = math.exp %230 : vector<2x32xf32>
    %cst_47 = arith.constant 1.000000e+00 : f32
    %232 = vector.broadcast %cst_47 : f32 to vector<2x32xf32>
    %233 = arith.addf %232, %231 : vector<2x32xf32>
    %234 = arith.divf %232, %233 : vector<2x32xf32>
    %235 = vector.extract_strided_slice %228 {offsets = [0, 32], sizes = [2, 32], strides = [1, 1]} : vector<2x128xf32> to vector<2x32xf32>
    %236 = arith.negf %235 : vector<2x32xf32>
    %237 = math.exp %236 : vector<2x32xf32>
    %cst_48 = arith.constant 1.000000e+00 : f32
    %238 = vector.broadcast %cst_48 : f32 to vector<2x32xf32>
    %239 = arith.addf %238, %237 : vector<2x32xf32>
    %240 = arith.divf %238, %239 : vector<2x32xf32>
    %241 = vector.extract_strided_slice %228 {offsets = [0, 64], sizes = [2, 32], strides = [1, 1]} : vector<2x128xf32> to vector<2x32xf32>
    %242 = math.tanh %241 : vector<2x32xf32>
    %243 = vector.extract_strided_slice %228 {offsets = [0, 96], sizes = [2, 32], strides = [1, 1]} : vector<2x128xf32> to vector<2x32xf32>
    %244 = arith.negf %243 : vector<2x32xf32>
    %245 = math.exp %244 : vector<2x32xf32>
    %cst_49 = arith.constant 1.000000e+00 : f32
    %246 = vector.broadcast %cst_49 : f32 to vector<2x32xf32>
    %247 = arith.addf %246, %245 : vector<2x32xf32>
    %248 = arith.divf %246, %247 : vector<2x32xf32>
    %249 = arith.mulf %240, %191 : vector<2x32xf32>
    %250 = arith.mulf %234, %242 : vector<2x32xf32>
    %251 = arith.addf %249, %250 : vector<2x32xf32>
    %252 = math.tanh %251 : vector<2x32xf32>
    %253 = arith.mulf %248, %252 : vector<2x32xf32>
    %c6 = arith.constant 6 : index
    %c0_50 = arith.constant 0 : index
    %254 = vector.load %arg14[%c6, %c0_50] : memref<16x64xf32, #tpu.memory_space<vmem>>, vector<2x32xf32>
    tpu.vector_store %arg14[%c6, %c0_50], %226 {strides = array<i32>} : memref<16x64xf32, #tpu.memory_space<vmem>>, vector<2x32xf32>,
    %c8 = arith.constant 8 : index
    %c32_51 = arith.constant 32 : index
    %255 = vector.load %arg14[%c8, %c32_51] : memref<16x64xf32, #tpu.memory_space<vmem>>, vector<2x32xf32>
    tpu.vector_store %arg14[%c8, %c32_51], %253 {strides = array<i32>} : memref<16x64xf32, #tpu.memory_space<vmem>>, vector<2x32xf32>,
    %256 = arith.truncf %226 : vector<2x32xf32> to vector<2x32xbf16>
    %cst_52 = arith.constant dense<0.000000e+00> : vector<2x128xf32>
    %257 = tpu.matmul %256, %10, %cst_52 {dimension_numbers = #tpu.dot_dimension_numbers<[1], [0], [0], [1], [0, 0, 1, 1], [], []>} : vector<2x32xbf16>, vector<32x128xbf16>, vector<2x128xf32> -> vector<2x128xf32>
    %258 = arith.truncf %253 : vector<2x32xf32> to vector<2x32xbf16>
    %cst_53 = arith.constant dense<0.000000e+00> : vector<2x128xf32>
    %259 = tpu.matmul %258, %11, %cst_53 {dimension_numbers = #tpu.dot_dimension_numbers<[1], [0], [0], [1], [0, 0, 1, 1], [], []>} : vector<2x32xbf16>, vector<32x128xbf16>, vector<2x128xf32> -> vector<2x128xf32>
    %260 = vector.extract_strided_slice %8 {offsets = [8, 0], sizes = [2, 128], strides = [1, 1]} : vector<16x128xf32> to vector<2x128xf32>
    %261 = arith.addf %260, %257 : vector<2x128xf32>
    %262 = vector.extract_strided_slice %261 {offsets = [0, 0], sizes = [2, 32], strides = [1, 1]} : vector<2x128xf32> to vector<2x32xf32>
    %263 = arith.negf %262 : vector<2x32xf32>
    %264 = math.exp %263 : vector<2x32xf32>
    %cst_54 = arith.constant 1.000000e+00 : f32
    %265 = vector.broadcast %cst_54 : f32 to vector<2x32xf32>
    %266 = arith.addf %265, %264 : vector<2x32xf32>
    %267 = arith.divf %265, %266 : vector<2x32xf32>
    %268 = vector.extract_strided_slice %261 {offsets = [0, 32], sizes = [2, 32], strides = [1, 1]} : vector<2x128xf32> to vector<2x32xf32>
    %269 = arith.negf %268 : vector<2x32xf32>
    %270 = math.exp %269 : vector<2x32xf32>
    %cst_55 = arith.constant 1.000000e+00 : f32
    %271 = vector.broadcast %cst_55 : f32 to vector<2x32xf32>
    %272 = arith.addf %271, %270 : vector<2x32xf32>
    %273 = arith.divf %271, %272 : vector<2x32xf32>
    %274 = vector.extract_strided_slice %261 {offsets = [0, 64], sizes = [2, 32], strides = [1, 1]} : vector<2x128xf32> to vector<2x32xf32>
    %275 = math.tanh %274 : vector<2x32xf32>
    %276 = vector.extract_strided_slice %261 {offsets = [0, 96], sizes = [2, 32], strides = [1, 1]} : vector<2x128xf32> to vector<2x32xf32>
    %277 = arith.negf %276 : vector<2x32xf32>
    %278 = math.exp %277 : vector<2x32xf32>
    %cst_56 = arith.constant 1.000000e+00 : f32
    %279 = vector.broadcast %cst_56 : f32 to vector<2x32xf32>
    %280 = arith.addf %279, %278 : vector<2x32xf32>
    %281 = arith.divf %279, %280 : vector<2x32xf32>
    %282 = arith.mulf %273, %224 : vector<2x32xf32>
    %283 = arith.mulf %267, %275 : vector<2x32xf32>
    %284 = arith.addf %282, %283 : vector<2x32xf32>
    %285 = math.tanh %284 : vector<2x32xf32>
    %286 = arith.mulf %281, %285 : vector<2x32xf32>
    %287 = vector.extract_strided_slice %9 {offsets = [6, 0], sizes = [2, 128], strides = [1, 1]} : vector<16x128xf32> to vector<2x128xf32>
    %288 = arith.addf %287, %259 : vector<2x128xf32>
    %289 = vector.extract_strided_slice %288 {offsets = [0, 0], sizes = [2, 32], strides = [1, 1]} : vector<2x128xf32> to vector<2x32xf32>
    %290 = arith.negf %289 : vector<2x32xf32>
    %291 = math.exp %290 : vector<2x32xf32>
    %cst_57 = arith.constant 1.000000e+00 : f32
    %292 = vector.broadcast %cst_57 : f32 to vector<2x32xf32>
    %293 = arith.addf %292, %291 : vector<2x32xf32>
    %294 = arith.divf %292, %293 : vector<2x32xf32>
    %295 = vector.extract_strided_slice %288 {offsets = [0, 32], sizes = [2, 32], strides = [1, 1]} : vector<2x128xf32> to vector<2x32xf32>
    %296 = arith.negf %295 : vector<2x32xf32>
    %297 = math.exp %296 : vector<2x32xf32>
    %cst_58 = arith.constant 1.000000e+00 : f32
    %298 = vector.broadcast %cst_58 : f32 to vector<2x32xf32>
    %299 = arith.addf %298, %297 : vector<2x32xf32>
    %300 = arith.divf %298, %299 : vector<2x32xf32>
    %301 = vector.extract_strided_slice %288 {offsets = [0, 64], sizes = [2, 32], strides = [1, 1]} : vector<2x128xf32> to vector<2x32xf32>
    %302 = math.tanh %301 : vector<2x32xf32>
    %303 = vector.extract_strided_slice %288 {offsets = [0, 96], sizes = [2, 32], strides = [1, 1]} : vector<2x128xf32> to vector<2x32xf32>
    %304 = arith.negf %303 : vector<2x32xf32>
    %305 = math.exp %304 : vector<2x32xf32>
    %cst_59 = arith.constant 1.000000e+00 : f32
    %306 = vector.broadcast %cst_59 : f32 to vector<2x32xf32>
    %307 = arith.addf %306, %305 : vector<2x32xf32>
    %308 = arith.divf %306, %307 : vector<2x32xf32>
    %309 = arith.mulf %300, %251 : vector<2x32xf32>
    %310 = arith.mulf %294, %302 : vector<2x32xf32>
    %311 = arith.addf %309, %310 : vector<2x32xf32>
    %312 = math.tanh %311 : vector<2x32xf32>
    %313 = arith.mulf %308, %312 : vector<2x32xf32>
    %c8_60 = arith.constant 8 : index
    %c0_61 = arith.constant 0 : index
    %314 = vector.load %arg14[%c8_60, %c0_61] : memref<16x64xf32, #tpu.memory_space<vmem>>, vector<2x32xf32>
    tpu.vector_store %arg14[%c8_60, %c0_61], %286 {strides = array<i32>} : memref<16x64xf32, #tpu.memory_space<vmem>>, vector<2x32xf32>,
    %c6_62 = arith.constant 6 : index
    %c32_63 = arith.constant 32 : index
    %315 = vector.load %arg14[%c6_62, %c32_63] : memref<16x64xf32, #tpu.memory_space<vmem>>, vector<2x32xf32>
    tpu.vector_store %arg14[%c6_62, %c32_63], %313 {strides = array<i32>} : memref<16x64xf32, #tpu.memory_space<vmem>>, vector<2x32xf32>,
    %316 = arith.truncf %286 : vector<2x32xf32> to vector<2x32xbf16>
    %cst_64 = arith.constant dense<0.000000e+00> : vector<2x128xf32>
    %317 = tpu.matmul %316, %10, %cst_64 {dimension_numbers = #tpu.dot_dimension_numbers<[1], [0], [0], [1], [0, 0, 1, 1], [], []>} : vector<2x32xbf16>, vector<32x128xbf16>, vector<2x128xf32> -> vector<2x128xf32>
    %318 = arith.truncf %313 : vector<2x32xf32> to vector<2x32xbf16>
    %cst_65 = arith.constant dense<0.000000e+00> : vector<2x128xf32>
    %319 = tpu.matmul %318, %11, %cst_65 {dimension_numbers = #tpu.dot_dimension_numbers<[1], [0], [0], [1], [0, 0, 1, 1], [], []>} : vector<2x32xbf16>, vector<32x128xbf16>, vector<2x128xf32> -> vector<2x128xf32>
    %320 = vector.extract_strided_slice %8 {offsets = [10, 0], sizes = [2, 128], strides = [1, 1]} : vector<16x128xf32> to vector<2x128xf32>
    %321 = arith.addf %320, %317 : vector<2x128xf32>
    %322 = vector.extract_strided_slice %321 {offsets = [0, 0], sizes = [2, 32], strides = [1, 1]} : vector<2x128xf32> to vector<2x32xf32>
    %323 = arith.negf %322 : vector<2x32xf32>
    %324 = math.exp %323 : vector<2x32xf32>
    %cst_66 = arith.constant 1.000000e+00 : f32
    %325 = vector.broadcast %cst_66 : f32 to vector<2x32xf32>
    %326 = arith.addf %325, %324 : vector<2x32xf32>
    %327 = arith.divf %325, %326 : vector<2x32xf32>
    %328 = vector.extract_strided_slice %321 {offsets = [0, 32], sizes = [2, 32], strides = [1, 1]} : vector<2x128xf32> to vector<2x32xf32>
    %329 = arith.negf %328 : vector<2x32xf32>
    %330 = math.exp %329 : vector<2x32xf32>
    %cst_67 = arith.constant 1.000000e+00 : f32
    %331 = vector.broadcast %cst_67 : f32 to vector<2x32xf32>
    %332 = arith.addf %331, %330 : vector<2x32xf32>
    %333 = arith.divf %331, %332 : vector<2x32xf32>
    %334 = vector.extract_strided_slice %321 {offsets = [0, 64], sizes = [2, 32], strides = [1, 1]} : vector<2x128xf32> to vector<2x32xf32>
    %335 = math.tanh %334 : vector<2x32xf32>
    %336 = vector.extract_strided_slice %321 {offsets = [0, 96], sizes = [2, 32], strides = [1, 1]} : vector<2x128xf32> to vector<2x32xf32>
    %337 = arith.negf %336 : vector<2x32xf32>
    %338 = math.exp %337 : vector<2x32xf32>
    %cst_68 = arith.constant 1.000000e+00 : f32
    %339 = vector.broadcast %cst_68 : f32 to vector<2x32xf32>
    %340 = arith.addf %339, %338 : vector<2x32xf32>
    %341 = arith.divf %339, %340 : vector<2x32xf32>
    %342 = arith.mulf %333, %284 : vector<2x32xf32>
    %343 = arith.mulf %327, %335 : vector<2x32xf32>
    %344 = arith.addf %342, %343 : vector<2x32xf32>
    %345 = math.tanh %344 : vector<2x32xf32>
    %346 = arith.mulf %341, %345 : vector<2x32xf32>
    %347 = vector.extract_strided_slice %9 {offsets = [4, 0], sizes = [2, 128], strides = [1, 1]} : vector<16x128xf32> to vector<2x128xf32>
    %348 = arith.addf %347, %319 : vector<2x128xf32>
    %349 = vector.extract_strided_slice %348 {offsets = [0, 0], sizes = [2, 32], strides = [1, 1]} : vector<2x128xf32> to vector<2x32xf32>
    %350 = arith.negf %349 : vector<2x32xf32>
    %351 = math.exp %350 : vector<2x32xf32>
    %cst_69 = arith.constant 1.000000e+00 : f32
    %352 = vector.broadcast %cst_69 : f32 to vector<2x32xf32>
    %353 = arith.addf %352, %351 : vector<2x32xf32>
    %354 = arith.divf %352, %353 : vector<2x32xf32>
    %355 = vector.extract_strided_slice %348 {offsets = [0, 32], sizes = [2, 32], strides = [1, 1]} : vector<2x128xf32> to vector<2x32xf32>
    %356 = arith.negf %355 : vector<2x32xf32>
    %357 = math.exp %356 : vector<2x32xf32>
    %cst_70 = arith.constant 1.000000e+00 : f32
    %358 = vector.broadcast %cst_70 : f32 to vector<2x32xf32>
    %359 = arith.addf %358, %357 : vector<2x32xf32>
    %360 = arith.divf %358, %359 : vector<2x32xf32>
    %361 = vector.extract_strided_slice %348 {offsets = [0, 64], sizes = [2, 32], strides = [1, 1]} : vector<2x128xf32> to vector<2x32xf32>
    %362 = math.tanh %361 : vector<2x32xf32>
    %363 = vector.extract_strided_slice %348 {offsets = [0, 96], sizes = [2, 32], strides = [1, 1]} : vector<2x128xf32> to vector<2x32xf32>
    %364 = arith.negf %363 : vector<2x32xf32>
    %365 = math.exp %364 : vector<2x32xf32>
    %cst_71 = arith.constant 1.000000e+00 : f32
    %366 = vector.broadcast %cst_71 : f32 to vector<2x32xf32>
    %367 = arith.addf %366, %365 : vector<2x32xf32>
    %368 = arith.divf %366, %367 : vector<2x32xf32>
    %369 = arith.mulf %360, %311 : vector<2x32xf32>
    %370 = arith.mulf %354, %362 : vector<2x32xf32>
    %371 = arith.addf %369, %370 : vector<2x32xf32>
    %372 = math.tanh %371 : vector<2x32xf32>
    %373 = arith.mulf %368, %372 : vector<2x32xf32>
    %c10_72 = arith.constant 10 : index
    %c0_73 = arith.constant 0 : index
    %374 = vector.load %arg14[%c10_72, %c0_73] : memref<16x64xf32, #tpu.memory_space<vmem>>, vector<2x32xf32>
    tpu.vector_store %arg14[%c10_72, %c0_73], %346 {strides = array<i32>} : memref<16x64xf32, #tpu.memory_space<vmem>>, vector<2x32xf32>,
    %c4_74 = arith.constant 4 : index
    %c32_75 = arith.constant 32 : index
    %375 = vector.load %arg14[%c4_74, %c32_75] : memref<16x64xf32, #tpu.memory_space<vmem>>, vector<2x32xf32>
    tpu.vector_store %arg14[%c4_74, %c32_75], %373 {strides = array<i32>} : memref<16x64xf32, #tpu.memory_space<vmem>>, vector<2x32xf32>,
    %376 = arith.truncf %346 : vector<2x32xf32> to vector<2x32xbf16>
    %cst_76 = arith.constant dense<0.000000e+00> : vector<2x128xf32>
    %377 = tpu.matmul %376, %10, %cst_76 {dimension_numbers = #tpu.dot_dimension_numbers<[1], [0], [0], [1], [0, 0, 1, 1], [], []>} : vector<2x32xbf16>, vector<32x128xbf16>, vector<2x128xf32> -> vector<2x128xf32>
    %378 = arith.truncf %373 : vector<2x32xf32> to vector<2x32xbf16>
    %cst_77 = arith.constant dense<0.000000e+00> : vector<2x128xf32>
    %379 = tpu.matmul %378, %11, %cst_77 {dimension_numbers = #tpu.dot_dimension_numbers<[1], [0], [0], [1], [0, 0, 1, 1], [], []>} : vector<2x32xbf16>, vector<32x128xbf16>, vector<2x128xf32> -> vector<2x128xf32>
    %380 = vector.extract_strided_slice %8 {offsets = [12, 0], sizes = [2, 128], strides = [1, 1]} : vector<16x128xf32> to vector<2x128xf32>
    %381 = arith.addf %380, %377 : vector<2x128xf32>
    %382 = vector.extract_strided_slice %381 {offsets = [0, 0], sizes = [2, 32], strides = [1, 1]} : vector<2x128xf32> to vector<2x32xf32>
    %383 = arith.negf %382 : vector<2x32xf32>
    %384 = math.exp %383 : vector<2x32xf32>
    %cst_78 = arith.constant 1.000000e+00 : f32
    %385 = vector.broadcast %cst_78 : f32 to vector<2x32xf32>
    %386 = arith.addf %385, %384 : vector<2x32xf32>
    %387 = arith.divf %385, %386 : vector<2x32xf32>
    %388 = vector.extract_strided_slice %381 {offsets = [0, 32], sizes = [2, 32], strides = [1, 1]} : vector<2x128xf32> to vector<2x32xf32>
    %389 = arith.negf %388 : vector<2x32xf32>
    %390 = math.exp %389 : vector<2x32xf32>
    %cst_79 = arith.constant 1.000000e+00 : f32
    %391 = vector.broadcast %cst_79 : f32 to vector<2x32xf32>
    %392 = arith.addf %391, %390 : vector<2x32xf32>
    %393 = arith.divf %391, %392 : vector<2x32xf32>
    %394 = vector.extract_strided_slice %381 {offsets = [0, 64], sizes = [2, 32], strides = [1, 1]} : vector<2x128xf32> to vector<2x32xf32>
    %395 = math.tanh %394 : vector<2x32xf32>
    %396 = vector.extract_strided_slice %381 {offsets = [0, 96], sizes = [2, 32], strides = [1, 1]} : vector<2x128xf32> to vector<2x32xf32>
    %397 = arith.negf %396 : vector<2x32xf32>
    %398 = math.exp %397 : vector<2x32xf32>
    %cst_80 = arith.constant 1.000000e+00 : f32
    %399 = vector.broadcast %cst_80 : f32 to vector<2x32xf32>
    %400 = arith.addf %399, %398 : vector<2x32xf32>
    %401 = arith.divf %399, %400 : vector<2x32xf32>
    %402 = arith.mulf %393, %344 : vector<2x32xf32>
    %403 = arith.mulf %387, %395 : vector<2x32xf32>
    %404 = arith.addf %402, %403 : vector<2x32xf32>
    %405 = math.tanh %404 : vector<2x32xf32>
    %406 = arith.mulf %401, %405 : vector<2x32xf32>
    %407 = vector.extract_strided_slice %9 {offsets = [2, 0], sizes = [2, 128], strides = [1, 1]} : vector<16x128xf32> to vector<2x128xf32>
    %408 = arith.addf %407, %379 : vector<2x128xf32>
    %409 = vector.extract_strided_slice %408 {offsets = [0, 0], sizes = [2, 32], strides = [1, 1]} : vector<2x128xf32> to vector<2x32xf32>
    %410 = arith.negf %409 : vector<2x32xf32>
    %411 = math.exp %410 : vector<2x32xf32>
    %cst_81 = arith.constant 1.000000e+00 : f32
    %412 = vector.broadcast %cst_81 : f32 to vector<2x32xf32>
    %413 = arith.addf %412, %411 : vector<2x32xf32>
    %414 = arith.divf %412, %413 : vector<2x32xf32>
    %415 = vector.extract_strided_slice %408 {offsets = [0, 32], sizes = [2, 32], strides = [1, 1]} : vector<2x128xf32> to vector<2x32xf32>
    %416 = arith.negf %415 : vector<2x32xf32>
    %417 = math.exp %416 : vector<2x32xf32>
    %cst_82 = arith.constant 1.000000e+00 : f32
    %418 = vector.broadcast %cst_82 : f32 to vector<2x32xf32>
    %419 = arith.addf %418, %417 : vector<2x32xf32>
    %420 = arith.divf %418, %419 : vector<2x32xf32>
    %421 = vector.extract_strided_slice %408 {offsets = [0, 64], sizes = [2, 32], strides = [1, 1]} : vector<2x128xf32> to vector<2x32xf32>
    %422 = math.tanh %421 : vector<2x32xf32>
    %423 = vector.extract_strided_slice %408 {offsets = [0, 96], sizes = [2, 32], strides = [1, 1]} : vector<2x128xf32> to vector<2x32xf32>
    %424 = arith.negf %423 : vector<2x32xf32>
    %425 = math.exp %424 : vector<2x32xf32>
    %cst_83 = arith.constant 1.000000e+00 : f32
    %426 = vector.broadcast %cst_83 : f32 to vector<2x32xf32>
    %427 = arith.addf %426, %425 : vector<2x32xf32>
    %428 = arith.divf %426, %427 : vector<2x32xf32>
    %429 = arith.mulf %420, %371 : vector<2x32xf32>
    %430 = arith.mulf %414, %422 : vector<2x32xf32>
    %431 = arith.addf %429, %430 : vector<2x32xf32>
    %432 = math.tanh %431 : vector<2x32xf32>
    %433 = arith.mulf %428, %432 : vector<2x32xf32>
    %c12_84 = arith.constant 12 : index
    %c0_85 = arith.constant 0 : index
    %434 = vector.load %arg14[%c12_84, %c0_85] : memref<16x64xf32, #tpu.memory_space<vmem>>, vector<2x32xf32>
    tpu.vector_store %arg14[%c12_84, %c0_85], %406 {strides = array<i32>} : memref<16x64xf32, #tpu.memory_space<vmem>>, vector<2x32xf32>,
    %c2_86 = arith.constant 2 : index
    %c32_87 = arith.constant 32 : index
    %435 = vector.load %arg14[%c2_86, %c32_87] : memref<16x64xf32, #tpu.memory_space<vmem>>, vector<2x32xf32>
    tpu.vector_store %arg14[%c2_86, %c32_87], %433 {strides = array<i32>} : memref<16x64xf32, #tpu.memory_space<vmem>>, vector<2x32xf32>,
    %436 = arith.truncf %406 : vector<2x32xf32> to vector<2x32xbf16>
    %cst_88 = arith.constant dense<0.000000e+00> : vector<2x128xf32>
    %437 = tpu.matmul %436, %10, %cst_88 {dimension_numbers = #tpu.dot_dimension_numbers<[1], [0], [0], [1], [0, 0, 1, 1], [], []>} : vector<2x32xbf16>, vector<32x128xbf16>, vector<2x128xf32> -> vector<2x128xf32>
    %438 = arith.truncf %433 : vector<2x32xf32> to vector<2x32xbf16>
    %cst_89 = arith.constant dense<0.000000e+00> : vector<2x128xf32>
    %439 = tpu.matmul %438, %11, %cst_89 {dimension_numbers = #tpu.dot_dimension_numbers<[1], [0], [0], [1], [0, 0, 1, 1], [], []>} : vector<2x32xbf16>, vector<32x128xbf16>, vector<2x128xf32> -> vector<2x128xf32>
    %440 = vector.extract_strided_slice %8 {offsets = [14, 0], sizes = [2, 128], strides = [1, 1]} : vector<16x128xf32> to vector<2x128xf32>
    %441 = arith.addf %440, %437 : vector<2x128xf32>
    %442 = vector.extract_strided_slice %441 {offsets = [0, 0], sizes = [2, 32], strides = [1, 1]} : vector<2x128xf32> to vector<2x32xf32>
    %443 = arith.negf %442 : vector<2x32xf32>
    %444 = math.exp %443 : vector<2x32xf32>
    %cst_90 = arith.constant 1.000000e+00 : f32
    %445 = vector.broadcast %cst_90 : f32 to vector<2x32xf32>
    %446 = arith.addf %445, %444 : vector<2x32xf32>
    %447 = arith.divf %445, %446 : vector<2x32xf32>
    %448 = vector.extract_strided_slice %441 {offsets = [0, 32], sizes = [2, 32], strides = [1, 1]} : vector<2x128xf32> to vector<2x32xf32>
    %449 = arith.negf %448 : vector<2x32xf32>
    %450 = math.exp %449 : vector<2x32xf32>
    %cst_91 = arith.constant 1.000000e+00 : f32
    %451 = vector.broadcast %cst_91 : f32 to vector<2x32xf32>
    %452 = arith.addf %451, %450 : vector<2x32xf32>
    %453 = arith.divf %451, %452 : vector<2x32xf32>
    %454 = vector.extract_strided_slice %441 {offsets = [0, 64], sizes = [2, 32], strides = [1, 1]} : vector<2x128xf32> to vector<2x32xf32>
    %455 = math.tanh %454 : vector<2x32xf32>
    %456 = vector.extract_strided_slice %441 {offsets = [0, 96], sizes = [2, 32], strides = [1, 1]} : vector<2x128xf32> to vector<2x32xf32>
    %457 = arith.negf %456 : vector<2x32xf32>
    %458 = math.exp %457 : vector<2x32xf32>
    %cst_92 = arith.constant 1.000000e+00 : f32
    %459 = vector.broadcast %cst_92 : f32 to vector<2x32xf32>
    %460 = arith.addf %459, %458 : vector<2x32xf32>
    %461 = arith.divf %459, %460 : vector<2x32xf32>
    %462 = arith.mulf %453, %404 : vector<2x32xf32>
    %463 = arith.mulf %447, %455 : vector<2x32xf32>
    %464 = arith.addf %462, %463 : vector<2x32xf32>
    %465 = math.tanh %464 : vector<2x32xf32>
    %466 = arith.mulf %461, %465 : vector<2x32xf32>
    %467 = vector.extract_strided_slice %9 {offsets = [0, 0], sizes = [2, 128], strides = [1, 1]} : vector<16x128xf32> to vector<2x128xf32>
    %468 = arith.addf %467, %439 : vector<2x128xf32>
    %469 = vector.extract_strided_slice %468 {offsets = [0, 0], sizes = [2, 32], strides = [1, 1]} : vector<2x128xf32> to vector<2x32xf32>
    %470 = arith.negf %469 : vector<2x32xf32>
    %471 = math.exp %470 : vector<2x32xf32>
    %cst_93 = arith.constant 1.000000e+00 : f32
    %472 = vector.broadcast %cst_93 : f32 to vector<2x32xf32>
    %473 = arith.addf %472, %471 : vector<2x32xf32>
    %474 = arith.divf %472, %473 : vector<2x32xf32>
    %475 = vector.extract_strided_slice %468 {offsets = [0, 32], sizes = [2, 32], strides = [1, 1]} : vector<2x128xf32> to vector<2x32xf32>
    %476 = arith.negf %475 : vector<2x32xf32>
    %477 = math.exp %476 : vector<2x32xf32>
    %cst_94 = arith.constant 1.000000e+00 : f32
    %478 = vector.broadcast %cst_94 : f32 to vector<2x32xf32>
    %479 = arith.addf %478, %477 : vector<2x32xf32>
    %480 = arith.divf %478, %479 : vector<2x32xf32>
    %481 = vector.extract_strided_slice %468 {offsets = [0, 64], sizes = [2, 32], strides = [1, 1]} : vector<2x128xf32> to vector<2x32xf32>
    %482 = math.tanh %481 : vector<2x32xf32>
    %483 = vector.extract_strided_slice %468 {offsets = [0, 96], sizes = [2, 32], strides = [1, 1]} : vector<2x128xf32> to vector<2x32xf32>
    %484 = arith.negf %483 : vector<2x32xf32>
    %485 = math.exp %484 : vector<2x32xf32>
    %cst_95 = arith.constant 1.000000e+00 : f32
    %486 = vector.broadcast %cst_95 : f32 to vector<2x32xf32>
    %487 = arith.addf %486, %485 : vector<2x32xf32>
    %488 = arith.divf %486, %487 : vector<2x32xf32>
    %489 = arith.mulf %480, %431 : vector<2x32xf32>
    %490 = arith.mulf %474, %482 : vector<2x32xf32>
    %491 = arith.addf %489, %490 : vector<2x32xf32>
    %492 = math.tanh %491 : vector<2x32xf32>
    %493 = arith.mulf %488, %492 : vector<2x32xf32>
    %c14_96 = arith.constant 14 : index
    %c0_97 = arith.constant 0 : index
    %494 = vector.load %arg14[%c14_96, %c0_97] : memref<16x64xf32, #tpu.memory_space<vmem>>, vector<2x32xf32>
    tpu.vector_store %arg14[%c14_96, %c0_97], %466 {strides = array<i32>} : memref<16x64xf32, #tpu.memory_space<vmem>>, vector<2x32xf32>,
    %c0_98 = arith.constant 0 : index
    %c32_99 = arith.constant 32 : index
    %495 = vector.load %arg14[%c0_98, %c32_99] : memref<16x64xf32, #tpu.memory_space<vmem>>, vector<2x32xf32>
    tpu.vector_store %arg14[%c0_98, %c32_99], %493 {strides = array<i32>} : memref<16x64xf32, #tpu.memory_space<vmem>>, vector<2x32xf32>,
    %c0_100 = arith.constant 0 : index
    %c0_101 = arith.constant 0 : index
    %496 = vector.load %arg14[%c0_100, %c0_101] : memref<16x64xf32, #tpu.memory_space<vmem>>, vector<16x64xf32>
    %497 = vector.extract_strided_slice %496 {offsets = [0, 0], sizes = [2, 64], strides = [1, 1]} : vector<16x64xf32> to vector<2x64xf32>
    %c0_102 = arith.constant 0 : index
    %c0_103 = arith.constant 0 : index
    %498 = vector.load %arg6[%c0_102, %c0_103] : memref<64x128xf32, #tpu.memory_space<vmem>>, vector<64x128xf32>
    %cst_104 = arith.constant dense<0.000000e+00> : vector<2x128xf32>
    %499 = tpu.matmul %497, %498, %cst_104 {dimension_numbers = #tpu.dot_dimension_numbers<[1], [0], [0], [1], [0, 0, 1, 1], [], []>} : vector<2x64xf32>, vector<64x128xf32>, vector<2x128xf32> -> vector<2x128xf32>
    %c0_105 = arith.constant 0 : index
    %c0_106 = arith.constant 0 : index
    %500 = vector.load %arg7[%c0_105, %c0_106] : memref<1x128xf32, #tpu.memory_space<vmem>>, vector<1x128xf32>
    %501 = vector.broadcast %500 : vector<1x128xf32> to vector<2x128xf32>
    %502 = arith.addf %499, %501 : vector<2x128xf32>
    %cst_107 = arith.constant 0.000000e+00 : f32
    %503 = vector.broadcast %cst_107 : f32 to vector<2x32xf32>
    %504 = vector.extract_strided_slice %502 {offsets = [0, 0], sizes = [2, 32], strides = [1, 1]} : vector<2x128xf32> to vector<2x32xf32>
    %505 = arith.negf %504 : vector<2x32xf32>
    %506 = math.exp %505 : vector<2x32xf32>
    %cst_108 = arith.constant 1.000000e+00 : f32
    %507 = vector.broadcast %cst_108 : f32 to vector<2x32xf32>
    %508 = arith.addf %507, %506 : vector<2x32xf32>
    %509 = arith.divf %507, %508 : vector<2x32xf32>
    %510 = vector.extract_strided_slice %502 {offsets = [0, 32], sizes = [2, 32], strides = [1, 1]} : vector<2x128xf32> to vector<2x32xf32>
    %511 = arith.negf %510 : vector<2x32xf32>
    %512 = math.exp %511 : vector<2x32xf32>
    %cst_109 = arith.constant 1.000000e+00 : f32
    %513 = vector.broadcast %cst_109 : f32 to vector<2x32xf32>
    %514 = arith.addf %513, %512 : vector<2x32xf32>
    %515 = arith.divf %513, %514 : vector<2x32xf32>
    %516 = vector.extract_strided_slice %502 {offsets = [0, 64], sizes = [2, 32], strides = [1, 1]} : vector<2x128xf32> to vector<2x32xf32>
    %517 = math.tanh %516 : vector<2x32xf32>
    %518 = vector.extract_strided_slice %502 {offsets = [0, 96], sizes = [2, 32], strides = [1, 1]} : vector<2x128xf32> to vector<2x32xf32>
    %519 = arith.negf %518 : vector<2x32xf32>
    %520 = math.exp %519 : vector<2x32xf32>
    %cst_110 = arith.constant 1.000000e+00 : f32
    %521 = vector.broadcast %cst_110 : f32 to vector<2x32xf32>
    %522 = arith.addf %521, %520 : vector<2x32xf32>
    %523 = arith.divf %521, %522 : vector<2x32xf32>
    %524 = arith.mulf %515, %503 : vector<2x32xf32>
    %525 = arith.mulf %509, %517 : vector<2x32xf32>
    %526 = arith.addf %524, %525 : vector<2x32xf32>
    %527 = math.tanh %526 : vector<2x32xf32>
    %528 = arith.mulf %523, %527 : vector<2x32xf32>
    %c0_111 = arith.constant 0 : index
    %c0_112 = arith.constant 0 : index
    %529 = vector.load %arg8[%c0_111, %c0_112] : memref<64x128xf32, #tpu.memory_space<vmem>>, vector<64x128xf32>
    %cst_113 = arith.constant dense<0.000000e+00> : vector<16x128xf32>
    %530 = tpu.matmul %496, %529, %cst_113 {dimension_numbers = #tpu.dot_dimension_numbers<[1], [0], [0], [1], [0, 0, 1, 1], [], []>} : vector<16x64xf32>, vector<64x128xf32>, vector<16x128xf32> -> vector<16x128xf32>
    %c0_114 = arith.constant 0 : index
    %c0_115 = arith.constant 0 : index
    %531 = vector.load %arg10[%c0_114, %c0_115] : memref<1x128xf32, #tpu.memory_space<vmem>>, vector<1x128xf32>
    %532 = vector.broadcast %531 : vector<1x128xf32> to vector<16x128xf32>
    %533 = arith.addf %530, %532 : vector<16x128xf32>
    %c0_116 = arith.constant 0 : index
    %c0_117 = arith.constant 0 : index
    %534 = vector.load %arg9[%c0_116, %c0_117] : memref<32x128xbf16, #tpu.memory_space<vmem>>, vector<32x128xbf16>
    %cst_118 = arith.constant 0.000000e+00 : f32
    %535 = vector.broadcast %cst_118 : f32 to vector<2x32xf32>
    %cst_119 = arith.constant 0.000000e+00 : f32
    %536 = vector.broadcast %cst_119 : f32 to vector<2x32xf32>
    %537 = vector.extract_strided_slice %533 {offsets = [14, 0], sizes = [2, 128], strides = [1, 1]} : vector<16x128xf32> to vector<2x128xf32>
    %538 = arith.truncf %535 : vector<2x32xf32> to vector<2x32xbf16>
    %cst_120 = arith.constant dense<0.000000e+00> : vector<2x128xf32>
    %539 = tpu.matmul %538, %534, %cst_120 {dimension_numbers = #tpu.dot_dimension_numbers<[1], [0], [0], [1], [0, 0, 1, 1], [], []>} : vector<2x32xbf16>, vector<32x128xbf16>, vector<2x128xf32> -> vector<2x128xf32>
    %540 = arith.addf %537, %539 : vector<2x128xf32>
    %541 = vector.extract_strided_slice %540 {offsets = [0, 0], sizes = [2, 32], strides = [1, 1]} : vector<2x128xf32> to vector<2x32xf32>
    %542 = arith.negf %541 : vector<2x32xf32>
    %543 = math.exp %542 : vector<2x32xf32>
    %cst_121 = arith.constant 1.000000e+00 : f32
    %544 = vector.broadcast %cst_121 : f32 to vector<2x32xf32>
    %545 = arith.addf %544, %543 : vector<2x32xf32>
    %546 = arith.divf %544, %545 : vector<2x32xf32>
    %547 = vector.extract_strided_slice %540 {offsets = [0, 32], sizes = [2, 32], strides = [1, 1]} : vector<2x128xf32> to vector<2x32xf32>
    %548 = arith.negf %547 : vector<2x32xf32>
    %549 = math.exp %548 : vector<2x32xf32>
    %cst_122 = arith.constant 1.000000e+00 : f32
    %550 = vector.broadcast %cst_122 : f32 to vector<2x32xf32>
    %551 = arith.addf %550, %549 : vector<2x32xf32>
    %552 = arith.divf %550, %551 : vector<2x32xf32>
    %553 = vector.extract_strided_slice %540 {offsets = [0, 64], sizes = [2, 32], strides = [1, 1]} : vector<2x128xf32> to vector<2x32xf32>
    %554 = math.tanh %553 : vector<2x32xf32>
    %555 = vector.extract_strided_slice %540 {offsets = [0, 96], sizes = [2, 32], strides = [1, 1]} : vector<2x128xf32> to vector<2x32xf32>
    %556 = arith.negf %555 : vector<2x32xf32>
    %557 = math.exp %556 : vector<2x32xf32>
    %cst_123 = arith.constant 1.000000e+00 : f32
    %558 = vector.broadcast %cst_123 : f32 to vector<2x32xf32>
    %559 = arith.addf %558, %557 : vector<2x32xf32>
    %560 = arith.divf %558, %559 : vector<2x32xf32>
    %561 = arith.mulf %552, %536 : vector<2x32xf32>
    %562 = arith.mulf %546, %554 : vector<2x32xf32>
    %563 = arith.addf %561, %562 : vector<2x32xf32>
    %564 = math.tanh %563 : vector<2x32xf32>
    %565 = arith.mulf %560, %564 : vector<2x32xf32>
    %566 = vector.extract_strided_slice %533 {offsets = [12, 0], sizes = [2, 128], strides = [1, 1]} : vector<16x128xf32> to vector<2x128xf32>
    %567 = arith.truncf %565 : vector<2x32xf32> to vector<2x32xbf16>
    %cst_124 = arith.constant dense<0.000000e+00> : vector<2x128xf32>
    %568 = tpu.matmul %567, %534, %cst_124 {dimension_numbers = #tpu.dot_dimension_numbers<[1], [0], [0], [1], [0, 0, 1, 1], [], []>} : vector<2x32xbf16>, vector<32x128xbf16>, vector<2x128xf32> -> vector<2x128xf32>
    %569 = arith.addf %566, %568 : vector<2x128xf32>
    %570 = vector.extract_strided_slice %569 {offsets = [0, 0], sizes = [2, 32], strides = [1, 1]} : vector<2x128xf32> to vector<2x32xf32>
    %571 = arith.negf %570 : vector<2x32xf32>
    %572 = math.exp %571 : vector<2x32xf32>
    %cst_125 = arith.constant 1.000000e+00 : f32
    %573 = vector.broadcast %cst_125 : f32 to vector<2x32xf32>
    %574 = arith.addf %573, %572 : vector<2x32xf32>
    %575 = arith.divf %573, %574 : vector<2x32xf32>
    %576 = vector.extract_strided_slice %569 {offsets = [0, 32], sizes = [2, 32], strides = [1, 1]} : vector<2x128xf32> to vector<2x32xf32>
    %577 = arith.negf %576 : vector<2x32xf32>
    %578 = math.exp %577 : vector<2x32xf32>
    %cst_126 = arith.constant 1.000000e+00 : f32
    %579 = vector.broadcast %cst_126 : f32 to vector<2x32xf32>
    %580 = arith.addf %579, %578 : vector<2x32xf32>
    %581 = arith.divf %579, %580 : vector<2x32xf32>
    %582 = vector.extract_strided_slice %569 {offsets = [0, 64], sizes = [2, 32], strides = [1, 1]} : vector<2x128xf32> to vector<2x32xf32>
    %583 = math.tanh %582 : vector<2x32xf32>
    %584 = vector.extract_strided_slice %569 {offsets = [0, 96], sizes = [2, 32], strides = [1, 1]} : vector<2x128xf32> to vector<2x32xf32>
    %585 = arith.negf %584 : vector<2x32xf32>
    %586 = math.exp %585 : vector<2x32xf32>
    %cst_127 = arith.constant 1.000000e+00 : f32
    %587 = vector.broadcast %cst_127 : f32 to vector<2x32xf32>
    %588 = arith.addf %587, %586 : vector<2x32xf32>
    %589 = arith.divf %587, %588 : vector<2x32xf32>
    %590 = arith.mulf %581, %563 : vector<2x32xf32>
    %591 = arith.mulf %575, %583 : vector<2x32xf32>
    %592 = arith.addf %590, %591 : vector<2x32xf32>
    %593 = math.tanh %592 : vector<2x32xf32>
    %594 = arith.mulf %589, %593 : vector<2x32xf32>
    %595 = vector.extract_strided_slice %533 {offsets = [10, 0], sizes = [2, 128], strides = [1, 1]} : vector<16x128xf32> to vector<2x128xf32>
    %596 = arith.truncf %594 : vector<2x32xf32> to vector<2x32xbf16>
    %cst_128 = arith.constant dense<0.000000e+00> : vector<2x128xf32>
    %597 = tpu.matmul %596, %534, %cst_128 {dimension_numbers = #tpu.dot_dimension_numbers<[1], [0], [0], [1], [0, 0, 1, 1], [], []>} : vector<2x32xbf16>, vector<32x128xbf16>, vector<2x128xf32> -> vector<2x128xf32>
    %598 = arith.addf %595, %597 : vector<2x128xf32>
    %599 = vector.extract_strided_slice %598 {offsets = [0, 0], sizes = [2, 32], strides = [1, 1]} : vector<2x128xf32> to vector<2x32xf32>
    %600 = arith.negf %599 : vector<2x32xf32>
    %601 = math.exp %600 : vector<2x32xf32>
    %cst_129 = arith.constant 1.000000e+00 : f32
    %602 = vector.broadcast %cst_129 : f32 to vector<2x32xf32>
    %603 = arith.addf %602, %601 : vector<2x32xf32>
    %604 = arith.divf %602, %603 : vector<2x32xf32>
    %605 = vector.extract_strided_slice %598 {offsets = [0, 32], sizes = [2, 32], strides = [1, 1]} : vector<2x128xf32> to vector<2x32xf32>
    %606 = arith.negf %605 : vector<2x32xf32>
    %607 = math.exp %606 : vector<2x32xf32>
    %cst_130 = arith.constant 1.000000e+00 : f32
    %608 = vector.broadcast %cst_130 : f32 to vector<2x32xf32>
    %609 = arith.addf %608, %607 : vector<2x32xf32>
    %610 = arith.divf %608, %609 : vector<2x32xf32>
    %611 = vector.extract_strided_slice %598 {offsets = [0, 64], sizes = [2, 32], strides = [1, 1]} : vector<2x128xf32> to vector<2x32xf32>
    %612 = math.tanh %611 : vector<2x32xf32>
    %613 = vector.extract_strided_slice %598 {offsets = [0, 96], sizes = [2, 32], strides = [1, 1]} : vector<2x128xf32> to vector<2x32xf32>
    %614 = arith.negf %613 : vector<2x32xf32>
    %615 = math.exp %614 : vector<2x32xf32>
    %cst_131 = arith.constant 1.000000e+00 : f32
    %616 = vector.broadcast %cst_131 : f32 to vector<2x32xf32>
    %617 = arith.addf %616, %615 : vector<2x32xf32>
    %618 = arith.divf %616, %617 : vector<2x32xf32>
    %619 = arith.mulf %610, %592 : vector<2x32xf32>
    %620 = arith.mulf %604, %612 : vector<2x32xf32>
    %621 = arith.addf %619, %620 : vector<2x32xf32>
    %622 = math.tanh %621 : vector<2x32xf32>
    %623 = arith.mulf %618, %622 : vector<2x32xf32>
    %624 = vector.extract_strided_slice %533 {offsets = [8, 0], sizes = [2, 128], strides = [1, 1]} : vector<16x128xf32> to vector<2x128xf32>
    %625 = arith.truncf %623 : vector<2x32xf32> to vector<2x32xbf16>
    %cst_132 = arith.constant dense<0.000000e+00> : vector<2x128xf32>
    %626 = tpu.matmul %625, %534, %cst_132 {dimension_numbers = #tpu.dot_dimension_numbers<[1], [0], [0], [1], [0, 0, 1, 1], [], []>} : vector<2x32xbf16>, vector<32x128xbf16>, vector<2x128xf32> -> vector<2x128xf32>
    %627 = arith.addf %624, %626 : vector<2x128xf32>
    %628 = vector.extract_strided_slice %627 {offsets = [0, 0], sizes = [2, 32], strides = [1, 1]} : vector<2x128xf32> to vector<2x32xf32>
    %629 = arith.negf %628 : vector<2x32xf32>
    %630 = math.exp %629 : vector<2x32xf32>
    %cst_133 = arith.constant 1.000000e+00 : f32
    %631 = vector.broadcast %cst_133 : f32 to vector<2x32xf32>
    %632 = arith.addf %631, %630 : vector<2x32xf32>
    %633 = arith.divf %631, %632 : vector<2x32xf32>
    %634 = vector.extract_strided_slice %627 {offsets = [0, 32], sizes = [2, 32], strides = [1, 1]} : vector<2x128xf32> to vector<2x32xf32>
    %635 = arith.negf %634 : vector<2x32xf32>
    %636 = math.exp %635 : vector<2x32xf32>
    %cst_134 = arith.constant 1.000000e+00 : f32
    %637 = vector.broadcast %cst_134 : f32 to vector<2x32xf32>
    %638 = arith.addf %637, %636 : vector<2x32xf32>
    %639 = arith.divf %637, %638 : vector<2x32xf32>
    %640 = vector.extract_strided_slice %627 {offsets = [0, 64], sizes = [2, 32], strides = [1, 1]} : vector<2x128xf32> to vector<2x32xf32>
    %641 = math.tanh %640 : vector<2x32xf32>
    %642 = vector.extract_strided_slice %627 {offsets = [0, 96], sizes = [2, 32], strides = [1, 1]} : vector<2x128xf32> to vector<2x32xf32>
    %643 = arith.negf %642 : vector<2x32xf32>
    %644 = math.exp %643 : vector<2x32xf32>
    %cst_135 = arith.constant 1.000000e+00 : f32
    %645 = vector.broadcast %cst_135 : f32 to vector<2x32xf32>
    %646 = arith.addf %645, %644 : vector<2x32xf32>
    %647 = arith.divf %645, %646 : vector<2x32xf32>
    %648 = arith.mulf %639, %621 : vector<2x32xf32>
    %649 = arith.mulf %633, %641 : vector<2x32xf32>
    %650 = arith.addf %648, %649 : vector<2x32xf32>
    %651 = math.tanh %650 : vector<2x32xf32>
    %652 = arith.mulf %647, %651 : vector<2x32xf32>
    %653 = vector.extract_strided_slice %533 {offsets = [6, 0], sizes = [2, 128], strides = [1, 1]} : vector<16x128xf32> to vector<2x128xf32>
    %654 = arith.truncf %652 : vector<2x32xf32> to vector<2x32xbf16>
    %cst_136 = arith.constant dense<0.000000e+00> : vector<2x128xf32>
    %655 = tpu.matmul %654, %534, %cst_136 {dimension_numbers = #tpu.dot_dimension_numbers<[1], [0], [0], [1], [0, 0, 1, 1], [], []>} : vector<2x32xbf16>, vector<32x128xbf16>, vector<2x128xf32> -> vector<2x128xf32>
    %656 = arith.addf %653, %655 : vector<2x128xf32>
    %657 = vector.extract_strided_slice %656 {offsets = [0, 0], sizes = [2, 32], strides = [1, 1]} : vector<2x128xf32> to vector<2x32xf32>
    %658 = arith.negf %657 : vector<2x32xf32>
    %659 = math.exp %658 : vector<2x32xf32>
    %cst_137 = arith.constant 1.000000e+00 : f32
    %660 = vector.broadcast %cst_137 : f32 to vector<2x32xf32>
    %661 = arith.addf %660, %659 : vector<2x32xf32>
    %662 = arith.divf %660, %661 : vector<2x32xf32>
    %663 = vector.extract_strided_slice %656 {offsets = [0, 32], sizes = [2, 32], strides = [1, 1]} : vector<2x128xf32> to vector<2x32xf32>
    %664 = arith.negf %663 : vector<2x32xf32>
    %665 = math.exp %664 : vector<2x32xf32>
    %cst_138 = arith.constant 1.000000e+00 : f32
    %666 = vector.broadcast %cst_138 : f32 to vector<2x32xf32>
    %667 = arith.addf %666, %665 : vector<2x32xf32>
    %668 = arith.divf %666, %667 : vector<2x32xf32>
    %669 = vector.extract_strided_slice %656 {offsets = [0, 64], sizes = [2, 32], strides = [1, 1]} : vector<2x128xf32> to vector<2x32xf32>
    %670 = math.tanh %669 : vector<2x32xf32>
    %671 = vector.extract_strided_slice %656 {offsets = [0, 96], sizes = [2, 32], strides = [1, 1]} : vector<2x128xf32> to vector<2x32xf32>
    %672 = arith.negf %671 : vector<2x32xf32>
    %673 = math.exp %672 : vector<2x32xf32>
    %cst_139 = arith.constant 1.000000e+00 : f32
    %674 = vector.broadcast %cst_139 : f32 to vector<2x32xf32>
    %675 = arith.addf %674, %673 : vector<2x32xf32>
    %676 = arith.divf %674, %675 : vector<2x32xf32>
    %677 = arith.mulf %668, %650 : vector<2x32xf32>
    %678 = arith.mulf %662, %670 : vector<2x32xf32>
    %679 = arith.addf %677, %678 : vector<2x32xf32>
    %680 = math.tanh %679 : vector<2x32xf32>
    %681 = arith.mulf %676, %680 : vector<2x32xf32>
    %682 = vector.extract_strided_slice %533 {offsets = [4, 0], sizes = [2, 128], strides = [1, 1]} : vector<16x128xf32> to vector<2x128xf32>
    %683 = arith.truncf %681 : vector<2x32xf32> to vector<2x32xbf16>
    %cst_140 = arith.constant dense<0.000000e+00> : vector<2x128xf32>
    %684 = tpu.matmul %683, %534, %cst_140 {dimension_numbers = #tpu.dot_dimension_numbers<[1], [0], [0], [1], [0, 0, 1, 1], [], []>} : vector<2x32xbf16>, vector<32x128xbf16>, vector<2x128xf32> -> vector<2x128xf32>
    %685 = arith.addf %682, %684 : vector<2x128xf32>
    %686 = vector.extract_strided_slice %685 {offsets = [0, 0], sizes = [2, 32], strides = [1, 1]} : vector<2x128xf32> to vector<2x32xf32>
    %687 = arith.negf %686 : vector<2x32xf32>
    %688 = math.exp %687 : vector<2x32xf32>
    %cst_141 = arith.constant 1.000000e+00 : f32
    %689 = vector.broadcast %cst_141 : f32 to vector<2x32xf32>
    %690 = arith.addf %689, %688 : vector<2x32xf32>
    %691 = arith.divf %689, %690 : vector<2x32xf32>
    %692 = vector.extract_strided_slice %685 {offsets = [0, 32], sizes = [2, 32], strides = [1, 1]} : vector<2x128xf32> to vector<2x32xf32>
    %693 = arith.negf %692 : vector<2x32xf32>
    %694 = math.exp %693 : vector<2x32xf32>
    %cst_142 = arith.constant 1.000000e+00 : f32
    %695 = vector.broadcast %cst_142 : f32 to vector<2x32xf32>
    %696 = arith.addf %695, %694 : vector<2x32xf32>
    %697 = arith.divf %695, %696 : vector<2x32xf32>
    %698 = vector.extract_strided_slice %685 {offsets = [0, 64], sizes = [2, 32], strides = [1, 1]} : vector<2x128xf32> to vector<2x32xf32>
    %699 = math.tanh %698 : vector<2x32xf32>
    %700 = vector.extract_strided_slice %685 {offsets = [0, 96], sizes = [2, 32], strides = [1, 1]} : vector<2x128xf32> to vector<2x32xf32>
    %701 = arith.negf %700 : vector<2x32xf32>
    %702 = math.exp %701 : vector<2x32xf32>
    %cst_143 = arith.constant 1.000000e+00 : f32
    %703 = vector.broadcast %cst_143 : f32 to vector<2x32xf32>
    %704 = arith.addf %703, %702 : vector<2x32xf32>
    %705 = arith.divf %703, %704 : vector<2x32xf32>
    %706 = arith.mulf %697, %679 : vector<2x32xf32>
    %707 = arith.mulf %691, %699 : vector<2x32xf32>
    %708 = arith.addf %706, %707 : vector<2x32xf32>
    %709 = math.tanh %708 : vector<2x32xf32>
    %710 = arith.mulf %705, %709 : vector<2x32xf32>
    %711 = vector.extract_strided_slice %533 {offsets = [2, 0], sizes = [2, 128], strides = [1, 1]} : vector<16x128xf32> to vector<2x128xf32>
    %712 = arith.truncf %710 : vector<2x32xf32> to vector<2x32xbf16>
    %cst_144 = arith.constant dense<0.000000e+00> : vector<2x128xf32>
    %713 = tpu.matmul %712, %534, %cst_144 {dimension_numbers = #tpu.dot_dimension_numbers<[1], [0], [0], [1], [0, 0, 1, 1], [], []>} : vector<2x32xbf16>, vector<32x128xbf16>, vector<2x128xf32> -> vector<2x128xf32>
    %714 = arith.addf %711, %713 : vector<2x128xf32>
    %715 = vector.extract_strided_slice %714 {offsets = [0, 0], sizes = [2, 32], strides = [1, 1]} : vector<2x128xf32> to vector<2x32xf32>
    %716 = arith.negf %715 : vector<2x32xf32>
    %717 = math.exp %716 : vector<2x32xf32>
    %cst_145 = arith.constant 1.000000e+00 : f32
    %718 = vector.broadcast %cst_145 : f32 to vector<2x32xf32>
    %719 = arith.addf %718, %717 : vector<2x32xf32>
    %720 = arith.divf %718, %719 : vector<2x32xf32>
    %721 = vector.extract_strided_slice %714 {offsets = [0, 32], sizes = [2, 32], strides = [1, 1]} : vector<2x128xf32> to vector<2x32xf32>
    %722 = arith.negf %721 : vector<2x32xf32>
    %723 = math.exp %722 : vector<2x32xf32>
    %cst_146 = arith.constant 1.000000e+00 : f32
    %724 = vector.broadcast %cst_146 : f32 to vector<2x32xf32>
    %725 = arith.addf %724, %723 : vector<2x32xf32>
    %726 = arith.divf %724, %725 : vector<2x32xf32>
    %727 = vector.extract_strided_slice %714 {offsets = [0, 64], sizes = [2, 32], strides = [1, 1]} : vector<2x128xf32> to vector<2x32xf32>
    %728 = math.tanh %727 : vector<2x32xf32>
    %729 = vector.extract_strided_slice %714 {offsets = [0, 96], sizes = [2, 32], strides = [1, 1]} : vector<2x128xf32> to vector<2x32xf32>
    %730 = arith.negf %729 : vector<2x32xf32>
    %731 = math.exp %730 : vector<2x32xf32>
    %cst_147 = arith.constant 1.000000e+00 : f32
    %732 = vector.broadcast %cst_147 : f32 to vector<2x32xf32>
    %733 = arith.addf %732, %731 : vector<2x32xf32>
    %734 = arith.divf %732, %733 : vector<2x32xf32>
    %735 = arith.mulf %726, %708 : vector<2x32xf32>
    %736 = arith.mulf %720, %728 : vector<2x32xf32>
    %737 = arith.addf %735, %736 : vector<2x32xf32>
    %738 = math.tanh %737 : vector<2x32xf32>
    %739 = arith.mulf %734, %738 : vector<2x32xf32>
    %740 = vector.extract_strided_slice %533 {offsets = [0, 0], sizes = [2, 128], strides = [1, 1]} : vector<16x128xf32> to vector<2x128xf32>
    %741 = arith.truncf %739 : vector<2x32xf32> to vector<2x32xbf16>
    %cst_148 = arith.constant dense<0.000000e+00> : vector<2x128xf32>
    %742 = tpu.matmul %741, %534, %cst_148 {dimension_numbers = #tpu.dot_dimension_numbers<[1], [0], [0], [1], [0, 0, 1, 1], [], []>} : vector<2x32xbf16>, vector<32x128xbf16>, vector<2x128xf32> -> vector<2x128xf32>
    %743 = arith.addf %740, %742 : vector<2x128xf32>
    %744 = vector.extract_strided_slice %743 {offsets = [0, 0], sizes = [2, 32], strides = [1, 1]} : vector<2x128xf32> to vector<2x32xf32>
    %745 = arith.negf %744 : vector<2x32xf32>
    %746 = math.exp %745 : vector<2x32xf32>
    %cst_149 = arith.constant 1.000000e+00 : f32
    %747 = vector.broadcast %cst_149 : f32 to vector<2x32xf32>
    %748 = arith.addf %747, %746 : vector<2x32xf32>
    %749 = arith.divf %747, %748 : vector<2x32xf32>
    %750 = vector.extract_strided_slice %743 {offsets = [0, 32], sizes = [2, 32], strides = [1, 1]} : vector<2x128xf32> to vector<2x32xf32>
    %751 = arith.negf %750 : vector<2x32xf32>
    %752 = math.exp %751 : vector<2x32xf32>
    %cst_150 = arith.constant 1.000000e+00 : f32
    %753 = vector.broadcast %cst_150 : f32 to vector<2x32xf32>
    %754 = arith.addf %753, %752 : vector<2x32xf32>
    %755 = arith.divf %753, %754 : vector<2x32xf32>
    %756 = vector.extract_strided_slice %743 {offsets = [0, 64], sizes = [2, 32], strides = [1, 1]} : vector<2x128xf32> to vector<2x32xf32>
    %757 = math.tanh %756 : vector<2x32xf32>
    %758 = vector.extract_strided_slice %743 {offsets = [0, 96], sizes = [2, 32], strides = [1, 1]} : vector<2x128xf32> to vector<2x32xf32>
    %759 = arith.negf %758 : vector<2x32xf32>
    %760 = math.exp %759 : vector<2x32xf32>
    %cst_151 = arith.constant 1.000000e+00 : f32
    %761 = vector.broadcast %cst_151 : f32 to vector<2x32xf32>
    %762 = arith.addf %761, %760 : vector<2x32xf32>
    %763 = arith.divf %761, %762 : vector<2x32xf32>
    %764 = arith.mulf %755, %737 : vector<2x32xf32>
    %765 = arith.mulf %749, %757 : vector<2x32xf32>
    %766 = arith.addf %764, %765 : vector<2x32xf32>
    %767 = math.tanh %766 : vector<2x32xf32>
    %768 = arith.mulf %763, %767 : vector<2x32xf32>
    %c0_152 = arith.constant 0 : index
    %c0_153 = arith.constant 0 : index
    %769 = vector.load %arg11[%c0_152, %c0_153] : memref<64x128xf32, #tpu.memory_space<vmem>>, vector<32x128xf32>
    %cst_154 = arith.constant dense<0.000000e+00> : vector<2x128xf32>
    %770 = tpu.matmul %528, %769, %cst_154 {dimension_numbers = #tpu.dot_dimension_numbers<[1], [0], [0], [1], [0, 0, 1, 1], [], []>} : vector<2x32xf32>, vector<32x128xf32>, vector<2x128xf32> -> vector<2x128xf32>
    %c32_155 = arith.constant 32 : index
    %c0_156 = arith.constant 0 : index
    %771 = vector.load %arg11[%c32_155, %c0_156] : memref<64x128xf32, #tpu.memory_space<vmem>>, vector<32x128xf32>
    %cst_157 = arith.constant dense<0.000000e+00> : vector<2x128xf32>
    %772 = tpu.matmul %768, %771, %cst_157 {dimension_numbers = #tpu.dot_dimension_numbers<[1], [0], [0], [1], [0, 0, 1, 1], [], []>} : vector<2x32xf32>, vector<32x128xf32>, vector<2x128xf32> -> vector<2x128xf32>
    %773 = arith.addf %770, %772 : vector<2x128xf32>
    %c0_158 = arith.constant 0 : index
    %c0_159 = arith.constant 0 : index
    %774 = vector.load %arg12[%c0_158, %c0_159] : memref<1x128xf32, #tpu.memory_space<vmem>>, vector<1x128xf32>
    %775 = vector.broadcast %774 : vector<1x128xf32> to vector<2x128xf32>
    %776 = arith.addf %773, %775 : vector<2x128xf32>
    %c0_160 = arith.constant 0 : index
    %c0_161 = arith.constant 0 : index
    %777 = vector.load %arg13[%c0_160, %c0_161] : memref<2x128xf32, #tpu.memory_space<vmem>>, vector<2x128xf32>
    tpu.vector_store %arg13[%c0_160, %c0_161], %776 {strides = array<i32>} : memref<2x128xf32, #tpu.memory_space<vmem>>, vector<2x128xf32>,
    return
  }
  func.func @transform_0(%arg0: i32) -> (i32, i32) {
    %c0_i32 = arith.constant 0 : i32
    %c0_i32_0 = arith.constant 0 : i32
    %c0_i32_1 = arith.constant 0 : i32
    return %c0_i32, %c0_i32_0 : i32, i32
  }
  func.func @transform_1(%arg0: i32) -> (i32, i32) {
    %c0_i32 = arith.constant 0 : i32
    %c0_i32_0 = arith.constant 0 : i32
    %c0_i32_1 = arith.constant 0 : i32
    return %c0_i32, %c0_i32_0 : i32, i32
  }
  func.func @transform_2(%arg0: i32) -> (i32, i32) {
    %c0_i32 = arith.constant 0 : i32
    %c0_i32_0 = arith.constant 0 : i32
    %c0_i32_1 = arith.constant 0 : i32
    return %c0_i32, %c0_i32_0 : i32, i32
  }
  func.func @transform_3(%arg0: i32) -> (i32, i32) {
    %c0_i32 = arith.constant 0 : i32
    %c0_i32_0 = arith.constant 0 : i32
    %c0_i32_1 = arith.constant 0 : i32
    return %c0_i32, %c0_i32_0 : i32, i32
  }
  func.func @transform_4(%arg0: i32) -> (i32, i32) {
    %c0_i32 = arith.constant 0 : i32
    %c0_i32_0 = arith.constant 0 : i32
    %c0_i32_1 = arith.constant 0 : i32
    return %c0_i32, %c0_i32_0 : i32, i32
  }
  func.func @transform_5(%arg0: i32) -> (i32, i32) {
    %c0_i32 = arith.constant 0 : i32
    %c0_i32_0 = arith.constant 0 : i32
    %c0_i32_1 = arith.constant 0 : i32
    return %c0_i32, %c0_i32_0 : i32, i32
  }
  func.func @transform_6(%arg0: i32) -> (i32, i32) {
    %c0_i32 = arith.constant 0 : i32
    %c0_i32_0 = arith.constant 0 : i32
    %c0_i32_1 = arith.constant 0 : i32
    return %c0_i32, %c0_i32_0 : i32, i32
  }
  func.func @transform_7(%arg0: i32) -> (i32, i32) {
    %c0_i32 = arith.constant 0 : i32
    %c0_i32_0 = arith.constant 0 : i32
    %c0_i32_1 = arith.constant 0 : i32
    return %c0_i32, %c0_i32_0 : i32, i32
  }
  func.func @transform_8(%arg0: i32) -> (i32, i32) {
    %c0_i32 = arith.constant 0 : i32
    %c0_i32_0 = arith.constant 0 : i32
    %c0_i32_1 = arith.constant 0 : i32
    return %c0_i32, %c0_i32_0 : i32, i32
  }
  func.func @transform_9(%arg0: i32) -> (i32, i32) {
    %c0_i32 = arith.constant 0 : i32
    %c0_i32_0 = arith.constant 0 : i32
    %c0_i32_1 = arith.constant 0 : i32
    return %c0_i32, %c0_i32_0 : i32, i32
  }
  func.func @transform_10(%arg0: i32) -> (i32, i32) {
    %c0_i32 = arith.constant 0 : i32
    %c0_i32_0 = arith.constant 0 : i32
    %c0_i32_1 = arith.constant 0 : i32
    return %c0_i32, %c0_i32_0 : i32, i32
  }
  func.func @transform_11(%arg0: i32) -> (i32, i32) {
    %c0_i32 = arith.constant 0 : i32
    %c0_i32_0 = arith.constant 0 : i32
    %c0_i32_1 = arith.constant 0 : i32
    return %c0_i32, %c0_i32_0 : i32, i32
  }
  func.func @transform_12(%arg0: i32) -> (i32, i32) {
    %c0_i32 = arith.constant 0 : i32
    %c0_i32_0 = arith.constant 0 : i32
    %c0_i32_1 = arith.constant 0 : i32
    return %c0_i32, %c0_i32_0 : i32, i32
  }
}

</mosaic_0001>

<llo_original>
// kernel: lstm4ts_forward.1
$region0: #{lstm4ts_forward.1}
  #allocation0 [shape = 'u32[]', space=smem, size = 0x4, offset = 0x4, fixed_abs, tag = 'smem constant byte address 0x4 - core index']
  #allocation1 [shape = 'u32[144,128]{1,0:T(1,128)}', space=vmem, size = 0x12000, scoped, tag = 'internal scratch']
  #allocation2 [shape = 'f32[16,64]{1,0:T(8,128)}', space=vmem, size = 0x2000, scoped, tag = 'scratch operand']
  %s0 = inlined_call_operand.vmem [shape: f32[16,1], index: 0, kind: input, shape index: {}]
  %s1 = inlined_call_operand.vmem [shape: f32[1,256], index: 1, kind: input, shape index: {}]
  %s2 = inlined_call_operand.vmem [shape: f32[1,256], index: 2, kind: input, shape index: {}]
  %s3 = inlined_call_operand.hbm [shape: bf16[32,128], index: 3, kind: input, shape index: {}]
  %s4 = inlined_call_operand.hbm [shape: bf16[32,128], index: 4, kind: input, shape index: {}]
  %s5 = inlined_call_operand.vmem [shape: f32[64,128], index: 5, kind: input, shape index: {}]
  %s6 = inlined_call_operand.hbm [shape: f32[1,128], index: 6, kind: input, shape index: {}]
  %s7 = inlined_call_operand.hbm [shape: f32[64,128], index: 7, kind: input, shape index: {}]
  %s8 = inlined_call_operand.hbm [shape: bf16[32,128], index: 8, kind: input, shape index: {}]
  %s9 = inlined_call_operand.hbm [shape: f32[1,128], index: 9, kind: input, shape index: {}]
  %s10 = inlined_call_operand.hbm [shape: f32[64,128], index: 10, kind: input, shape index: {}]
  %s11 = inlined_call_operand.hbm [shape: f32[1,128], index: 11, kind: input, shape index: {}]
  %s12 = inlined_call_operand.hbm [shape: f32[2,128], index: 12, kind: output, shape index: {}]
  %s13 = sld [smem:[#allocation0]]
  $region90: #{lstm4ts_forward.1} parent=0
    _
  %s15 = ssub.s32 1, %s13
  %s16 = scalar_select 0, %s15, %s13
  $region1: #{lstm4ts_forward.1} parent=0
    #allocation3 [shape = 'u8[8192]{0}', space=vmem, size = 0x2000, scoped, tag = 'input window, operand 3, single buffered']
    #allocation4 [shape = 's32[1]{0}', space=sflag, size = 0x4, scoped, tag = 'scoped memory for lstm4ts_forward.1']
    #allocation5 [shape = 's32[1]{0}', space=sflag, size = 0x4, scoped, tag = 'scoped memory for lstm4ts_forward.1']
    #allocation6 [shape = 'u8[8192]{0}', space=vmem, size = 0x2000, scoped, tag = 'input window, operand 4, single buffered']
    #allocation7 [shape = 's32[1]{0}', space=sflag, size = 0x4, scoped, tag = 'scoped memory for lstm4ts_forward.1']
    #allocation8 [shape = 'u8[512]{0}', space=vmem, size = 0x400, scoped, tag = 'input window, operand 6, single buffered']
    #allocation9 [shape = 'u8[32768]{0}', space=vmem, size = 0x8000, scoped, tag = 'input window, operand 7, single buffered']
    #allocation10 [shape = 's32[1]{0}', space=sflag, size = 0x4, scoped, tag = 'scoped memory for lstm4ts_forward.1']
    #allocation11 [shape = 'u8[8192]{0}', space=vmem, size = 0x2000, scoped, tag = 'input window, operand 8, single buffered']
    #allocation12 [shape = 'u8[512]{0}', space=vmem, size = 0x400, scoped, tag = 'input window, operand 9, single buffered']
    #allocation13 [shape = 's32[1]{0}', space=sflag, size = 0x4, scoped, tag = 'scoped memory for lstm4ts_forward.1']
    #allocation14 [shape = 'u8[32768]{0}', space=vmem, size = 0x8000, scoped, tag = 'input window, operand 10, single buffered']
    #allocation15 [shape = 'u8[512]{0}', space=vmem, size = 0x400, scoped, tag = 'input window, operand 11, single buffered']
    #allocation16 [shape = 's32[1]{0}', space=sflag, size = 0x4, scoped, tag = 'scoped memory for lstm4ts_forward.1']
    #allocation17 [shape = 'u8[1024]{0}', space=vmem, size = 0x400, scoped, tag = 'output window, operand 0, single buffered']
    %17 = vsyncpa [#allocation4], 0
    %18 = vsyncpa [#allocation7], 0
    %19 = vsyncpa [#allocation10], 0
    %20 = vsyncpa [#allocation13], 0
    %21 = vsyncpa [#allocation16], 0
    %22 = vsyncpa [#allocation5], 0
    // Predicated region
    $region2: #{lstm4ts_forward.1} parent=1 // pred_check
      _
    $region3: #{lstm4ts_forward.1} parent=1 // pred_check_branch
      %24 = sbr.rel (0) target = $region5
    $region4: #{lstm4ts_forward.1} parent=1 // pred_region
      _
    $region5: #{lstm4ts_forward.1} parent=1 // pred_fallthru
      _
    // Predicated region
    $region6: #{lstm4ts_forward.1} parent=1 // pred_check
      _
    $region7: #{lstm4ts_forward.1} parent=1 // pred_check_branch
      %26 = sbr.rel (0) target = $region9
    $region8: #{lstm4ts_forward.1} parent=1 // pred_region
      _
    $region9: #{lstm4ts_forward.1} parent=1 // pred_fallthru
      _
    // Predicated region
    $region10: #{lstm4ts_forward.1} parent=1 // pred_check
      _
    $region11: #{lstm4ts_forward.1} parent=1 // pred_check_branch
      %28 = sbr.rel (0) target = $region13
    $region12: #{lstm4ts_forward.1} parent=1 // pred_region
      _
    $region13: #{lstm4ts_forward.1} parent=1 // pred_fallthru
      _
    // Predicated region
    $region14: #{lstm4ts_forward.1} parent=1 // pred_check
      _
    $region15: #{lstm4ts_forward.1} parent=1 // pred_check_branch
      %30 = sbr.rel (0) target = $region17
    $region16: #{lstm4ts_forward.1} parent=1 // pred_region
      %s32 = ssub.s32 256, 256
      %33 = vsyncadd [#allocation4], %s32
      %s34 = sshll.u32 [#allocation3], 4
      %s35 = int_to_ptr.vmem [resolvable:$true] %s34
      %40 = dma.hbm_to_vmem [thread:$0]  %s3, 256, %s35, [#allocation4], 64, 64, 4
    $region17: #{lstm4ts_forward.1} parent=1 // pred_fallthru
      _
    // Predicated region
    $region18: #{lstm4ts_forward.1} parent=1 // pred_check
      _
    $region19: #{lstm4ts_forward.1} parent=1 // pred_check_branch
      %42 = sbr.rel (0) target = $region21
    $region20: #{lstm4ts_forward.1} parent=1 // pred_region
      %s44 = ssub.s32 256, 256
      %45 = vsyncadd [#allocation7], %s44
      %s46 = sshll.u32 [#allocation6], 4
      %s47 = int_to_ptr.vmem [resolvable:$true] %s46
      %52 = dma.hbm_to_vmem [thread:$0]  %s4, 256, %s47, [#allocation7], 64, 64, 4
    $region21: #{lstm4ts_forward.1} parent=1 // pred_fallthru
      _
    // Predicated region
    $region22: #{lstm4ts_forward.1} parent=1 // pred_check
      _
    $region23: #{lstm4ts_forward.1} parent=1 // pred_check_branch
      %54 = sbr.rel (0) target = $region25
    $region24: #{lstm4ts_forward.1} parent=1 // pred_region
      _
    $region25: #{lstm4ts_forward.1} parent=1 // pred_fallthru
      _
    // Predicated region
    $region26: #{lstm4ts_forward.1} parent=1 // pred_check
      _
    $region27: #{lstm4ts_forward.1} parent=1 // pred_check_branch
      %56 = sbr.rel (0) target = $region29
    $region28: #{lstm4ts_forward.1} parent=1 // pred_region
      %s58 = ssub.s32 16, 16
      %59 = vsyncadd [#allocation7], %s58
      %s61 = sshll.u32 [#allocation8], 4
      %s62 = int_to_ptr.vmem [resolvable:$true] %s61
      %64 = dma.hbm_to_vmem [thread:$0]  %s6, 16, %s62, [#allocation7]
    $region29: #{lstm4ts_forward.1} parent=1 // pred_fallthru
      _
    // Predicated region
    $region30: #{lstm4ts_forward.1} parent=1 // pred_check
      _
    $region31: #{lstm4ts_forward.1} parent=1 // pred_check_branch
      %66 = sbr.rel (0) target = $region33
    $region32: #{lstm4ts_forward.1} parent=1 // pred_region
      %s68 = ssub.s32 1024, 1024
      %69 = vsyncadd [#allocation10], %s68
      %s70 = sshll.u32 [#allocation9], 4
      %s71 = int_to_ptr.vmem [resolvable:$true] %s70
      %76 = dma.hbm_to_vmem [thread:$0]  %s7, 1024, %s71, [#allocation10], 128, 128, 8
    $region33: #{lstm4ts_forward.1} parent=1 // pred_fallthru
      _
    // Predicated region
    $region34: #{lstm4ts_forward.1} parent=1 // pred_check
      _
    $region35: #{lstm4ts_forward.1} parent=1 // pred_check_branch
      %78 = sbr.rel (0) target = $region37
    $region36: #{lstm4ts_forward.1} parent=1 // pred_region
      %s80 = ssub.s32 256, 256
      %81 = vsyncadd [#allocation10], %s80
      %s82 = sshll.u32 [#allocation11], 4
      %s83 = int_to_ptr.vmem [resolvable:$true] %s82
      %88 = dma.hbm_to_vmem [thread:$0]  %s8, 256, %s83, [#allocation10], 64, 64, 4
    $region37: #{lstm4ts_forward.1} parent=1 // pred_fallthru
      _
    // Predicated region
    $region38: #{lstm4ts_forward.1} parent=1 // pred_check
      _
    $region39: #{lstm4ts_forward.1} parent=1 // pred_check_branch
      %90 = sbr.rel (0) target = $region41
    $region40: #{lstm4ts_forward.1} parent=1 // pred_region
      %s92 = ssub.s32 16, 16
      %93 = vsyncadd [#allocation13], %s92
      %s95 = sshll.u32 [#allocation12], 4
      %s96 = int_to_ptr.vmem [resolvable:$true] %s95
      %98 = dma.hbm_to_vmem [thread:$0]  %s9, 16, %s96, [#allocation13]
    $region41: #{lstm4ts_forward.1} parent=1 // pred_fallthru
      _
    // Predicated region
    $region42: #{lstm4ts_forward.1} parent=1 // pred_check
      _
    $region43: #{lstm4ts_forward.1} parent=1 // pred_check_branch
      %100 = sbr.rel (0) target = $region45
    $region44: #{lstm4ts_forward.1} parent=1 // pred_region
      %s102 = ssub.s32 1024, 1024
      %103 = vsyncadd [#allocation13], %s102
      %s104 = sshll.u32 [#allocation14], 4
      %s105 = int_to_ptr.vmem [resolvable:$true] %s104
      %110 = dma.hbm_to_vmem [thread:$0]  %s10, 1024, %s105, [#allocation13], 128, 128, 8
    $region45: #{lstm4ts_forward.1} parent=1 // pred_fallthru
      _
    // Predicated region
    $region46: #{lstm4ts_forward.1} parent=1 // pred_check
      _
    $region47: #{lstm4ts_forward.1} parent=1 // pred_check_branch
      %112 = sbr.rel (0) target = $region49
    $region48: #{lstm4ts_forward.1} parent=1 // pred_region
      %s114 = ssub.s32 16, 16
      %115 = vsyncadd [#allocation16], %s114
      %s117 = sshll.u32 [#allocation15], 4
      %s118 = int_to_ptr.vmem [resolvable:$true] %s117
      %120 = dma.hbm_to_vmem [thread:$0]  %s11, 16, %s118, [#allocation16]
    $region49: #{lstm4ts_forward.1} parent=1 // pred_fallthru
      _
    // Predicated region
    $region50: #{lstm4ts_forward.1} parent=1 // pred_check
      _
    $region51: #{lstm4ts_forward.1} parent=1 // pred_check_branch
      %122 = sbr.rel (0) target = $region53
    $region52: #{lstm4ts_forward.1} parent=1 // pred_region
      %123 = dma.done [#allocation4], 256
    $region53: #{lstm4ts_forward.1} parent=1 // pred_fallthru
      _
    // Predicated region
    $region54: #{lstm4ts_forward.1} parent=1 // pred_check
      _
    $region55: #{lstm4ts_forward.1} parent=1 // pred_check_branch
      %125 = sbr.rel (0) target = $region57
    $region56: #{lstm4ts_forward.1} parent=1 // pred_region
      %126 = dma.done [#allocation7], 256
    $region57: #{lstm4ts_forward.1} parent=1 // pred_fallthru
      _
    // Predicated region
    $region58: #{lstm4ts_forward.1} parent=1 // pred_check
      _
    $region59: #{lstm4ts_forward.1} parent=1 // pred_check_branch
      %128 = sbr.rel (0) target = $region61
    $region60: #{lstm4ts_forward.1} parent=1 // pred_region
      %129 = dma.done [#allocation7], 16
    $region61: #{lstm4ts_forward.1} parent=1 // pred_fallthru
      _
    // Predicated region
    $region62: #{lstm4ts_forward.1} parent=1 // pred_check
      _
    $region63: #{lstm4ts_forward.1} parent=1 // pred_check_branch
      %131 = sbr.rel (0) target = $region65
    $region64: #{lstm4ts_forward.1} parent=1 // pred_region
      %132 = dma.done [#allocation10], 1024
    $region65: #{lstm4ts_forward.1} parent=1 // pred_fallthru
      _
    // Predicated region
    $region66: #{lstm4ts_forward.1} parent=1 // pred_check
      _
    $region67: #{lstm4ts_forward.1} parent=1 // pred_check_branch
      %134 = sbr.rel (0) target = $region69
    $region68: #{lstm4ts_forward.1} parent=1 // pred_region
      %135 = dma.done [#allocation10], 256
    $region69: #{lstm4ts_forward.1} parent=1 // pred_fallthru
      _
    // Predicated region
    $region70: #{lstm4ts_forward.1} parent=1 // pred_check
      _
    $region71: #{lstm4ts_forward.1} parent=1 // pred_check_branch
      %137 = sbr.rel (0) target = $region73
    $region72: #{lstm4ts_forward.1} parent=1 // pred_region
      %138 = dma.done [#allocation13], 16
    $region73: #{lstm4ts_forward.1} parent=1 // pred_fallthru
      _
    // Predicated region
    $region74: #{lstm4ts_forward.1} parent=1 // pred_check
      _
    $region75: #{lstm4ts_forward.1} parent=1 // pred_check_branch
      %140 = sbr.rel (0) target = $region77
    $region76: #{lstm4ts_forward.1} parent=1 // pred_region
      %141 = dma.done [#allocation13], 1024
    $region77: #{lstm4ts_forward.1} parent=1 // pred_fallthru
      _
    // Predicated region
    $region78: #{lstm4ts_forward.1} parent=1 // pred_check
      _
    $region79: #{lstm4ts_forward.1} parent=1 // pred_check_branch
      %143 = sbr.rel (0) target = $region81
    $region80: #{lstm4ts_forward.1} parent=1 // pred_region
      %144 = dma.done [#allocation16], 16
    $region81: #{lstm4ts_forward.1} parent=1 // pred_fallthru
      _
    %v146 = vld [vmem:[%s0] sm:$0xff]
    %v147 = vld [vmem:[%s0 + $0x8] sm:$0xff]
    %v148 = vld [vmem:[%s1] sm:$0x3]
    %v149 = vld [vmem:[%s2] sm:$0x3]
    %151 = vset.pattern.permute.xlu0 0
    %152 = vperm.xlu0 %151, %v146
    %v153 = vpop.permute.xlu0 %152
    %156 = vset.pattern.permute.xlu0 0
    %157 = vperm.xlu0 %156, %v147
    %v158 = vpop.permute.xlu0 %157
    %v161 = vlaneseq
    %v162 = vshrl.u32 %v161, 7
    %v163 = vsub.s32 0, %v162
    %v164 = vrot.slane %v148, %v163
    %v165 = vlaneseq
    %v166 = vshrl.u32 %v165, 7
    %v167 = vsub.s32 1, %v166
    %v168 = vrot.slane %v148, %v167
    %v171 = vmul.f32 %v153, %v164
    %v172 = vmul.f32 %v153, %v168
    %v173 = vmul.f32 %v158, %v164
    %v174 = vmul.f32 %v158, %v168
    %v176 = vlaneseq
    %v177 = vshrl.u32 %v176, 7
    %v178 = vsub.s32 0, %v177
    %v179 = vrot.slane %v149, %v178
    %v180 = vlaneseq
    %v181 = vshrl.u32 %v180, 7
    %v182 = vsub.s32 1, %v181
    %v183 = vrot.slane %v149, %v182
    %v186 = vadd.f32 %v171, %v179
    %v187 = vadd.f32 %v172, %v183
    %v188 = vadd.f32 %v173, %v179
    %v189 = vadd.f32 %v174, %v183
    %v190 = vld [vmem:[#allocation3] sm:$0xf]
    %v191 = vld [vmem:[#allocation3 + $0x4] sm:$0xf]
    %v192 = vld [vmem:[#allocation3 + $0x8] sm:$0xf]
    %v193 = vld [vmem:[#allocation3 + $0xc] sm:$0xf]
    %v194 = vld [vmem:[#allocation6] sm:$0xf]
    %v195 = vld [vmem:[#allocation6 + $0x4] sm:$0xf]
    %v196 = vld [vmem:[#allocation6 + $0x8] sm:$0xf]
    %v197 = vld [vmem:[#allocation6 + $0xc] sm:$0xf]
    %v202 = vunpack.c.l.b16 %v190
    %v203 = vunpack.c.l.b16 %v191
    %v204 = vunpack.c.l.b16 %v192
    %v205 = vunpack.c.l.b16 %v193
    %v206 = vpack.c.b16 %v203, %v202
    %v207 = vpack.c.b16 %v205, %v204
    %vm210 = vcmask 261120
    %v212 = vsel %vm210, 0, 0
    %214 = vmatprep.subr.bf16.mxu0 0
    %215 = vmatpush1.bf16.msra.mxu0 %v206
    %216 = vmatprep.subr.bf16.mxu0 0
    %217 = vmatpush1.bf16.msra.mxu0 %v207
    %218 = vmatprep.subr.bf16.mxu0 0
    %219 = vmatpush1.bf16.msra.mxu0 0
    %220 = vmatprep.subr.bf16.mxu0 0
    %221 = vmatpush1.bf16.msra.mxu0 0
    %222 = vmatprep.subr.bf16.mxu0 0
    %223 = vmatpush1.bf16.msra.mxu0 0
    %224 = vmatprep.subr.bf16.mxu0 0
    %225 = vmatpush1.bf16.msra.mxu0 0
    %226 = vmatprep.subr.bf16.mxu0 0
    %227 = vmatpush1.bf16.msra.mxu0 0
    %228 = vmatprep.subr.bf16.mxu0 0
    %229 = vmatpush1.bf16.msra.mxu0 0
    %230 = vmatprep.subr.bf16.mxu0 0
    %231 = vmatpush1.bf16.msra.mxu0 0
    %232 = vmatprep.subr.bf16.mxu0 0
    %233 = vmatpush1.bf16.msra.mxu0 0
    %234 = vmatprep.subr.bf16.mxu0 0
    %235 = vmatpush1.bf16.msra.mxu0 0
    %236 = vmatprep.subr.bf16.mxu0 0
    %237 = vmatpush1.bf16.msra.mxu0 0
    %238 = vmatprep.subr.bf16.mxu0 0
    %239 = vmatpush1.bf16.msra.mxu0 0
    %240 = vmatprep.subr.bf16.mxu0 0
    %241 = vmatpush1.bf16.msra.mxu0 0
    %242 = vmatprep.subr.bf16.mxu0 0
    %243 = vmatpush1.bf16.msra.mxu0 0
    %244 = vmatprep.subr.bf16.mxu0 0
    %245 = vmatpush1.bf16.msra.mxu0 0
    %246 = vmatprep.mubr.bf16.mxu0 0
    %247 = vmatmul.mubr.bf16.gmra.mrb[0].mxu0 %v212
    %v248 = vpop.f32.mrb[0].mxu0
    %v249 = vadd.f32 0.0, %v248
    %v250 = vpop.f32.mrb[0].mxu0
    %v251 = vpop.f32.mrb[0].mxu0
    %v252 = vpop.f32.mrb[0].mxu0
    %253 = vdwg.mxu0
    %v258 = vunpack.c.l.b16 %v194
    %v259 = vunpack.c.l.b16 %v195
    %v260 = vunpack.c.l.b16 %v196
    %v261 = vunpack.c.l.b16 %v197
    %v262 = vpack.c.b16 %v259, %v258
    %v263 = vpack.c.b16 %v261, %v260
    %266 = vmatprep.subr.bf16.mxu0 0
    %267 = vmatpush1.bf16.msra.mxu0 %v262
    %268 = vmatprep.subr.bf16.mxu0 0
    %269 = vmatpush1.bf16.msra.mxu0 %v263
    %270 = vmatprep.subr.bf16.mxu0 0
    %271 = vmatpush1.bf16.msra.mxu0 0
    %272 = vmatprep.subr.bf16.mxu0 0
    %273 = vmatpush1.bf16.msra.mxu0 0
    %274 = vmatprep.subr.bf16.mxu0 0
    %275 = vmatpush1.bf16.msra.mxu0 0
    %276 = vmatprep.subr.bf16.mxu0 0
    %277 = vmatpush1.bf16.msra.mxu0 0
    %278 = vmatprep.subr.bf16.mxu0 0
    %279 = vmatpush1.bf16.msra.mxu0 0
    %280 = vmatprep.subr.bf16.mxu0 0
    %281 = vmatpush1.bf16.msra.mxu0 0
    %282 = vmatprep.subr.bf16.mxu0 0
    %283 = vmatpush1.bf16.msra.mxu0 0
    %284 = vmatprep.subr.bf16.mxu0 0
    %285 = vmatpush1.bf16.msra.mxu0 0
    %286 = vmatprep.subr.bf16.mxu0 0
    %287 = vmatpush1.bf16.msra.mxu0 0
    %288 = vmatprep.subr.bf16.mxu0 0
    %289 = vmatpush1.bf16.msra.mxu0 0
    %290 = vmatprep.subr.bf16.mxu0 0
    %291 = vmatpush1.bf16.msra.mxu0 0
    %292 = vmatprep.subr.bf16.mxu0 0
    %293 = vmatpush1.bf16.msra.mxu0 0
    %294 = vmatprep.subr.bf16.mxu0 0
    %295 = vmatpush1.bf16.msra.mxu0 0
    %296 = vmatprep.subr.bf16.mxu0 0
    %297 = vmatpush1.bf16.msra.mxu0 0
    %298 = vmatprep.mubr.bf16.mxu0 0
    %299 = vmatmul.mubr.bf16.gmra.mrb[0].mxu0 %v212
    %v300 = vpop.f32.mrb[0].mxu0
    %v301 = vadd.f32 0.0, %v300
    %v302 = vpop.f32.mrb[0].mxu0
    %v303 = vpop.f32.mrb[0].mxu0
    %v304 = vpop.f32.mrb[0].mxu0
    %305 = vdwg.mxu0
    %v306 = vadd.f32 %v186, %v249
    %v307 = vxor.u32 %v306, 2147483648
    %v308 = vmul.f32 %v307, 1.442695
    %v309 = vpow.pop %v308
    %v310 = vadd.f32 %v309, 1.0
    %v311 = vrcp.pop %v310
    %v312 = vmul.f32 1.0, %v311
    %v313 = vtanh.pop %v306
    %v314 = vmul.f32 %v312, 0.0
    %316 = vrot.lane.b32.xlu0 %v313, 64
    %v317 = vpop.permute.xlu0 %316
    %v319 = vmul.f32 %v312, %v317
    %321 = vrot.lane.b32.xlu0 %v319, 32
    %v322 = vpop.permute.xlu0 %321
    %v324 = vadd.f32 %v314, %v322
    %v325 = vtanh.pop %v324
    %327 = vrot.lane.b32.xlu0 %v325, 64
    %v328 = vpop.permute.xlu0 %327
    %v330 = vmul.f32 %v312, %v328
    %v332 = vrot.slane %v301, 2
    %v334 = vadd.f32 %v189, %v332
    %v335 = vxor.u32 %v334, 2147483648
    %v336 = vmul.f32 %v335, 1.442695
    %v337 = vpow.pop %v336
    %v338 = vadd.f32 %v337, 1.0
    %v339 = vrcp.pop %v338
    %v340 = vmul.f32 1.0, %v339
    %v341 = vtanh.pop %v334
    %v342 = vmul.f32 %v340, 0.0
    %344 = vrot.lane.b32.xlu0 %v341, 64
    %v345 = vpop.permute.xlu0 %344
    %v347 = vmul.f32 %v340, %v345
    %349 = vrot.lane.b32.xlu0 %v347, 32
    %v350 = vpop.permute.xlu0 %349
    %v352 = vadd.f32 %v342, %v350
    %v353 = vtanh.pop %v352
    %355 = vrot.lane.b32.xlu0 %v353, 64
    %v356 = vpop.permute.xlu0 %355
    %v358 = vmul.f32 %v340, %v356
    %360 = vrot.lane.b32.xlu0 %v330, 32
    %v361 = vpop.permute.xlu0 %360
    %vm363 = vcmask 254976
    %364 = vst.msk [vmem:[#allocation2] sm:$0x3] %vm363, %v361
    %366 = vrot.lane.b32.xlu0 %v358, 64
    %v367 = vpop.permute.xlu0 %366
    %vm369 = vcmask 523526
    %370 = vst.msk [vmem:[#allocation2 + $0x8] sm:$0xc0] %vm369, %v367
    %v371 = vpack.c.bf16 %v330, %v330
    %373 = vrot.lane.b32.xlu0 %v371, 32
    %v374 = vpop.permute.xlu0 %373
    %v376 = vsel %vm210, %v374, 0
    %378 = vmatprep.subr.bf16.mxu0 0
    %379 = vmatpush1.bf16.msra.mxu0 %v206
    %380 = vmatprep.subr.bf16.mxu0 0
    %381 = vmatpush1.bf16.msra.mxu0 %v207
    %382 = vmatprep.subr.bf16.mxu0 0
    %383 = vmatpush1.bf16.msra.mxu0 0
    %384 = vmatprep.subr.bf16.mxu0 0
    %385 = vmatpush1.bf16.msra.mxu0 0
    %386 = vmatprep.subr.bf16.mxu0 0
    %387 = vmatpush1.bf16.msra.mxu0 0
    %388 = vmatprep.subr.bf16.mxu0 0
    %389 = vmatpush1.bf16.msra.mxu0 0
    %390 = vmatprep.subr.bf16.mxu0 0
    %391 = vmatpush1.bf16.msra.mxu0 0
    %392 = vmatprep.subr.bf16.mxu0 0
    %393 = vmatpush1.bf16.msra.mxu0 0
    %394 = vmatprep.subr.bf16.mxu0 0
    %395 = vmatpush1.bf16.msra.mxu0 0
    %396 = vmatprep.subr.bf16.mxu0 0
    %397 = vmatpush1.bf16.msra.mxu0 0
    %398 = vmatprep.subr.bf16.mxu0 0
    %399 = vmatpush1.bf16.msra.mxu0 0
    %400 = vmatprep.subr.bf16.mxu0 0
    %401 = vmatpush1.bf16.msra.mxu0 0
    %402 = vmatprep.subr.bf16.mxu0 0
    %403 = vmatpush1.bf16.msra.mxu0 0
    %404 = vmatprep.subr.bf16.mxu0 0
    %405 = vmatpush1.bf16.msra.mxu0 0
    %406 = vmatprep.subr.bf16.mxu0 0
    %407 = vmatpush1.bf16.msra.mxu0 0
    %408 = vmatprep.subr.bf16.mxu0 0
    %409 = vmatpush1.bf16.msra.mxu0 0
    %410 = vmatprep.mubr.bf16.mxu0 0
    %411 = vmatmul.mubr.bf16.gmra.mrb[0].mxu0 %v376
    %v412 = vpop.f32.mrb[0].mxu0
    %v413 = vadd.f32 0.0, %v412
    %v414 = vpop.f32.mrb[0].mxu0
    %v415 = vpop.f32.mrb[0].mxu0
    %v416 = vpop.f32.mrb[0].mxu0
    %417 = vdwg.mxu0
    %v418 = vpack.c.bf16 %v358, %v358
    %v420 = vrot.slane %v418, 3
    %421 = vrot.lane.b32.xlu0 %v420, 32
    %v422 = vpop.permute.xlu0 %421
    %v424 = vsel %vm210, %v422, 0
    %426 = vmatprep.subr.bf16.mxu0 0
    %427 = vmatpush1.bf16.msra.mxu0 %v262
    %428 = vmatprep.subr.bf16.mxu0 0
    %429 = vmatpush1.bf16.msra.mxu0 %v263
    %430 = vmatprep.subr.bf16.mxu0 0
    %431 = vmatpush1.bf16.msra.mxu0 0
    %432 = vmatprep.subr.bf16.mxu0 0
    %433 = vmatpush1.bf16.msra.mxu0 0
    %434 = vmatprep.subr.bf16.mxu0 0
    %435 = vmatpush1.bf16.msra.mxu0 0
    %436 = vmatprep.subr.bf16.mxu0 0
    %437 = vmatpush1.bf16.msra.mxu0 0
    %438 = vmatprep.subr.bf16.mxu0 0
    %439 = vmatpush1.bf16.msra.mxu0 0
    %440 = vmatprep.subr.bf16.mxu0 0
    %441 = vmatpush1.bf16.msra.mxu0 0
    %442 = vmatprep.subr.bf16.mxu0 0
    %443 = vmatpush1.bf16.msra.mxu0 0
    %444 = vmatprep.subr.bf16.mxu0 0
    %445 = vmatpush1.bf16.msra.mxu0 0
    %446 = vmatprep.subr.bf16.mxu0 0
    %447 = vmatpush1.bf16.msra.mxu0 0
    %448 = vmatprep.subr.bf16.mxu0 0
    %449 = vmatpush1.bf16.msra.mxu0 0
    %450 = vmatprep.subr.bf16.mxu0 0
    %451 = vmatpush1.bf16.msra.mxu0 0
    %452 = vmatprep.subr.bf16.mxu0 0
    %453 = vmatpush1.bf16.msra.mxu0 0
    %454 = vmatprep.subr.bf16.mxu0 0
    %455 = vmatpush1.bf16.msra.mxu0 0
    %456 = vmatprep.subr.bf16.mxu0 0
    %457 = vmatpush1.bf16.msra.mxu0 0
    %458 = vmatprep.mubr.bf16.mxu0 0
    %459 = vmatmul.mubr.bf16.gmra.mrb[0].mxu0 %v424
    %v460 = vpop.f32.mrb[0].mxu0
    %v461 = vadd.f32 0.0, %v460
    %v462 = vpop.f32.mrb[0].mxu0
    %v463 = vpop.f32.mrb[0].mxu0
    %v464 = vpop.f32.mrb[0].mxu0
    %465 = vdwg.mxu0
    %v467 = vrot.slane %v413, 6
    %v469 = vadd.f32 %v186, %v467
    %v470 = vxor.u32 %v469, 2147483648
    %v471 = vmul.f32 %v470, 1.442695
    %v472 = vpow.pop %v471
    %v473 = vadd.f32 %v472, 1.0
    %v474 = vrcp.pop %v473
    %v475 = vmul.f32 1.0, %v474
    %v476 = vtanh.pop %v469
    %v478 = vrot.slane %v324, 6
    %v480 = vmul.f32 %v475, %v478
    %482 = vrot.lane.b32.xlu0 %v476, 64
    %v483 = vpop.permute.xlu0 %482
    %v485 = vmul.f32 %v475, %v483
    %487 = vrot.lane.b32.xlu0 %v485, 32
    %v488 = vpop.permute.xlu0 %487
    %v490 = vadd.f32 %v480, %v488
    %v491 = vtanh.pop %v490
    %493 = vrot.lane.b32.xlu0 %v491, 64
    %v494 = vpop.permute.xlu0 %493
    %v496 = vmul.f32 %v475, %v494
    %v498 = vrot.slane %v461, 4
    %v500 = vadd.f32 %v189, %v498
    %v501 = vxor.u32 %v500, 2147483648
    %v502 = vmul.f32 %v501, 1.442695
    %v503 = vpow.pop %v502
    %v504 = vadd.f32 %v503, 1.0
    %v505 = vrcp.pop %v504
    %v506 = vmul.f32 1.0, %v505
    %v507 = vtanh.pop %v500
    %v509 = vrot.slane %v352, 2
    %v511 = vmul.f32 %v506, %v509
    %513 = vrot.lane.b32.xlu0 %v507, 64
    %v514 = vpop.permute.xlu0 %513
    %v516 = vmul.f32 %v506, %v514
    %518 = vrot.lane.b32.xlu0 %v516, 32
    %v519 = vpop.permute.xlu0 %518
    %v521 = vadd.f32 %v511, %v519
    %v522 = vtanh.pop %v521
    %524 = vrot.lane.b32.xlu0 %v522, 64
    %v525 = vpop.permute.xlu0 %524
    %v527 = vmul.f32 %v506, %v525
    %529 = vrot.lane.b32.xlu0 %v496, 32
    %v530 = vpop.permute.xlu0 %529
    %vm532 = vcmask 257026
    %533 = vst.msk [vmem:[#allocation2] sm:$0xc] %vm532, %v530
    %535 = vrot.lane.b32.xlu0 %v527, 64
    %v536 = vpop.permute.xlu0 %535
    %vm538 = vcmask 521476
    %539 = vst.msk [vmem:[#allocation2 + $0x8] sm:$0x30] %vm538, %v536
    %v540 = vpack.c.bf16 %v496, %v496
    %v542 = vrot.slane %v540, 1
    %543 = vrot.lane.b32.xlu0 %v542, 32
    %v544 = vpop.permute.xlu0 %543
    %v546 = vsel %vm210, %v544, 0
    %548 = vmatprep.subr.bf16.mxu0 0
    %549 = vmatpush1.bf16.msra.mxu0 %v206
    %550 = vmatprep.subr.bf16.mxu0 0
    %551 = vmatpush1.bf16.msra.mxu0 %v207
    %552 = vmatprep.subr.bf16.mxu0 0
    %553 = vmatpush1.bf16.msra.mxu0 0
    %554 = vmatprep.subr.bf16.mxu0 0
    %555 = vmatpush1.bf16.msra.mxu0 0
    %556 = vmatprep.subr.bf16.mxu0 0
    %557 = vmatpush1.bf16.msra.mxu0 0
    %558 = vmatprep.subr.bf16.mxu0 0
    %559 = vmatpush1.bf16.msra.mxu0 0
    %560 = vmatprep.subr.bf16.mxu0 0
    %561 = vmatpush1.bf16.msra.mxu0 0
    %562 = vmatprep.subr.bf16.mxu0 0
    %563 = vmatpush1.bf16.msra.mxu0 0
    %564 = vmatprep.subr.bf16.mxu0 0
    %565 = vmatpush1.bf16.msra.mxu0 0
    %566 = vmatprep.subr.bf16.mxu0 0
    %567 = vmatpush1.bf16.msra.mxu0 0
    %568 = vmatprep.subr.bf16.mxu0 0
    %569 = vmatpush1.bf16.msra.mxu0 0
    %570 = vmatprep.subr.bf16.mxu0 0
    %571 = vmatpush1.bf16.msra.mxu0 0
    %572 = vmatprep.subr.bf16.mxu0 0
    %573 = vmatpush1.bf16.msra.mxu0 0
    %574 = vmatprep.subr.bf16.mxu0 0
    %575 = vmatpush1.bf16.msra.mxu0 0
    %576 = vmatprep.subr.bf16.mxu0 0
    %577 = vmatpush1.bf16.msra.mxu0 0
    %578 = vmatprep.subr.bf16.mxu0 0
    %579 = vmatpush1.bf16.msra.mxu0 0
    %580 = vmatprep.mubr.bf16.mxu0 0
    %581 = vmatmul.mubr.bf16.gmra.mrb[0].mxu0 %v546
    %v582 = vpop.f32.mrb[0].mxu0
    %v583 = vadd.f32 0.0, %v582
    %v584 = vpop.f32.mrb[0].mxu0
    %v585 = vpop.f32.mrb[0].mxu0
    %v586 = vpop.f32.mrb[0].mxu0
    %587 = vdwg.mxu0
    %v588 = vpack.c.bf16 %v527, %v527
    %v590 = vrot.slane %v588, 2
    %591 = vrot.lane.b32.xlu0 %v590, 32
    %v592 = vpop.permute.xlu0 %591
    %v594 = vsel %vm210, %v592, 0
    %596 = vmatprep.subr.bf16.mxu0 0
    %597 = vmatpush1.bf16.msra.mxu0 %v262
    %598 = vmatprep.subr.bf16.mxu0 0
    %599 = vmatpush1.bf16.msra.mxu0 %v263
    %600 = vmatprep.subr.bf16.mxu0 0
    %601 = vmatpush1.bf16.msra.mxu0 0
    %602 = vmatprep.subr.bf16.mxu0 0
    %603 = vmatpush1.bf16.msra.mxu0 0
    %604 = vmatprep.subr.bf16.mxu0 0
    %605 = vmatpush1.bf16.msra.mxu0 0
    %606 = vmatprep.subr.bf16.mxu0 0
    %607 = vmatpush1.bf16.msra.mxu0 0
    %608 = vmatprep.subr.bf16.mxu0 0
    %609 = vmatpush1.bf16.msra.mxu0 0
    %610 = vmatprep.subr.bf16.mxu0 0
    %611 = vmatpush1.bf16.msra.mxu0 0
    %612 = vmatprep.subr.bf16.mxu0 0
    %613 = vmatpush1.bf16.msra.mxu0 0
    %614 = vmatprep.subr.bf16.mxu0 0
    %615 = vmatpush1.bf16.msra.mxu0 0
    %616 = vmatprep.subr.bf16.mxu0 0
    %617 = vmatpush1.bf16.msra.mxu0 0
    %618 = vmatprep.subr.bf16.mxu0 0
    %619 = vmatpush1.bf16.msra.mxu0 0
    %620 = vmatprep.subr.bf16.mxu0 0
    %621 = vmatpush1.bf16.msra.mxu0 0
    %622 = vmatprep.subr.bf16.mxu0 0
    %623 = vmatpush1.bf16.msra.mxu0 0
    %624 = vmatprep.subr.bf16.mxu0 0
    %625 = vmatpush1.bf16.msra.mxu0 0
    %626 = vmatprep.subr.bf16.mxu0 0
    %627 = vmatpush1.bf16.msra.mxu0 0
    %628 = vmatprep.mubr.bf16.mxu0 0
    %629 = vmatmul.mubr.bf16.gmra.mrb[0].mxu0 %v594
    %v630 = vpop.f32.mrb[0].mxu0
    %v631 = vadd.f32 0.0, %v630
    %v632 = vpop.f32.mrb[0].mxu0
    %v633 = vpop.f32.mrb[0].mxu0
    %v634 = vpop.f32.mrb[0].mxu0
    %635 = vdwg.mxu0
    %v637 = vrot.slane %v583, 4
    %v639 = vadd.f32 %v186, %v637
    %v640 = vxor.u32 %v639, 2147483648
    %v641 = vmul.f32 %v640, 1.442695
    %v642 = vpow.pop %v641
    %v643 = vadd.f32 %v642, 1.0
    %v644 = vrcp.pop %v643
    %v645 = vmul.f32 1.0, %v644
    %v646 = vtanh.pop %v639
    %v648 = vrot.slane %v490, 6
    %v650 = vmul.f32 %v645, %v648
    %652 = vrot.lane.b32.xlu0 %v646, 64
    %v653 = vpop.permute.xlu0 %652
    %v655 = vmul.f32 %v645, %v653
    %657 = vrot.lane.b32.xlu0 %v655, 32
    %v658 = vpop.permute.xlu0 %657
    %v660 = vadd.f32 %v650, %v658
    %v661 = vtanh.pop %v660
    %663 = vrot.lane.b32.xlu0 %v661, 64
    %v664 = vpop.permute.xlu0 %663
    %v666 = vmul.f32 %v645, %v664
    %v668 = vrot.slane %v631, 6
    %v670 = vadd.f32 %v189, %v668
    %v671 = vxor.u32 %v670, 2147483648
    %v672 = vmul.f32 %v671, 1.442695
    %v673 = vpow.pop %v672
    %v674 = vadd.f32 %v673, 1.0
    %v675 = vrcp.pop %v674
    %v676 = vmul.f32 1.0, %v675
    %v677 = vtanh.pop %v670
    %v679 = vrot.slane %v521, 2
    %v681 = vmul.f32 %v676, %v679
    %683 = vrot.lane.b32.xlu0 %v677, 64
    %v684 = vpop.permute.xlu0 %683
    %v686 = vmul.f32 %v676, %v684
    %688 = vrot.lane.b32.xlu0 %v686, 32
    %v689 = vpop.permute.xlu0 %688
    %v691 = vadd.f32 %v681, %v689
    %v692 = vtanh.pop %v691
    %694 = vrot.lane.b32.xlu0 %v692, 64
    %v695 = vpop.permute.xlu0 %694
    %v697 = vmul.f32 %v676, %v695
    %699 = vrot.lane.b32.xlu0 %v666, 32
    %v700 = vpop.permute.xlu0 %699
    %vm702 = vcmask 259076
    %703 = vst.msk [vmem:[#allocation2] sm:$0x30] %vm702, %v700
    %705 = vrot.lane.b32.xlu0 %v697, 64
    %v706 = vpop.permute.xlu0 %705
    %vm708 = vcmask 519426
    %709 = vst.msk [vmem:[#allocation2 + $0x8] sm:$0xc] %vm708, %v706
    %v710 = vpack.c.bf16 %v666, %v666
    %v712 = vrot.slane %v710, 2
    %713 = vrot.lane.b32.xlu0 %v712, 32
    %v714 = vpop.permute.xlu0 %713
    %v716 = vsel %vm210, %v714, 0
    %718 = vmatprep.subr.bf16.mxu0 0
    %719 = vmatpush1.bf16.msra.mxu0 %v206
    %720 = vmatprep.subr.bf16.mxu0 0
    %721 = vmatpush1.bf16.msra.mxu0 %v207
    %722 = vmatprep.subr.bf16.mxu0 0
    %723 = vmatpush1.bf16.msra.mxu0 0
    %724 = vmatprep.subr.bf16.mxu0 0
    %725 = vmatpush1.bf16.msra.mxu0 0
    %726 = vmatprep.subr.bf16.mxu0 0
    %727 = vmatpush1.bf16.msra.mxu0 0
    %728 = vmatprep.subr.bf16.mxu0 0
    %729 = vmatpush1.bf16.msra.mxu0 0
    %730 = vmatprep.subr.bf16.mxu0 0
    %731 = vmatpush1.bf16.msra.mxu0 0
    %732 = vmatprep.subr.bf16.mxu0 0
    %733 = vmatpush1.bf16.msra.mxu0 0
    %734 = vmatprep.subr.bf16.mxu0 0
    %735 = vmatpush1.bf16.msra.mxu0 0
    %736 = vmatprep.subr.bf16.mxu0 0
    %737 = vmatpush1.bf16.msra.mxu0 0
    %738 = vmatprep.subr.bf16.mxu0 0
    %739 = vmatpush1.bf16.msra.mxu0 0
    %740 = vmatprep.subr.bf16.mxu0 0
    %741 = vmatpush1.bf16.msra.mxu0 0
    %742 = vmatprep.subr.bf16.mxu0 0
    %743 = vmatpush1.bf16.msra.mxu0 0
    %744 = vmatprep.subr.bf16.mxu0 0
    %745 = vmatpush1.bf16.msra.mxu0 0
    %746 = vmatprep.subr.bf16.mxu0 0
    %747 = vmatpush1.bf16.msra.mxu0 0
    %748 = vmatprep.subr.bf16.mxu0 0
    %749 = vmatpush1.bf16.msra.mxu0 0
    %750 = vmatprep.mubr.bf16.mxu0 0
    %751 = vmatmul.mubr.bf16.gmra.mrb[0].mxu0 %v716
    %v752 = vpop.f32.mrb[0].mxu0
    %v753 = vadd.f32 0.0, %v752
    %v754 = vpop.f32.mrb[0].mxu0
    %v755 = vpop.f32.mrb[0].mxu0
    %v756 = vpop.f32.mrb[0].mxu0
    %757 = vdwg.mxu0
    %v758 = vpack.c.bf16 %v697, %v697
    %v760 = vrot.slane %v758, 1
    %761 = vrot.lane.b32.xlu0 %v760, 32
    %v762 = vpop.permute.xlu0 %761
    %v764 = vsel %vm210, %v762, 0
    %766 = vmatprep.subr.bf16.mxu0 0
    %767 = vmatpush1.bf16.msra.mxu0 %v262
    %768 = vmatprep.subr.bf16.mxu0 0
    %769 = vmatpush1.bf16.msra.mxu0 %v263
    %770 = vmatprep.subr.bf16.mxu0 0
    %771 = vmatpush1.bf16.msra.mxu0 0
    %772 = vmatprep.subr.bf16.mxu0 0
    %773 = vmatpush1.bf16.msra.mxu0 0
    %774 = vmatprep.subr.bf16.mxu0 0
    %775 = vmatpush1.bf16.msra.mxu0 0
    %776 = vmatprep.subr.bf16.mxu0 0
    %777 = vmatpush1.bf16.msra.mxu0 0
    %778 = vmatprep.subr.bf16.mxu0 0
    %779 = vmatpush1.bf16.msra.mxu0 0
    %780 = vmatprep.subr.bf16.mxu0 0
    %781 = vmatpush1.bf16.msra.mxu0 0
    %782 = vmatprep.subr.bf16.mxu0 0
    %783 = vmatpush1.bf16.msra.mxu0 0
    %784 = vmatprep.subr.bf16.mxu0 0
    %785 = vmatpush1.bf16.msra.mxu0 0
    %786 = vmatprep.subr.bf16.mxu0 0
    %787 = vmatpush1.bf16.msra.mxu0 0
    %788 = vmatprep.subr.bf16.mxu0 0
    %789 = vmatpush1.bf16.msra.mxu0 0
    %790 = vmatprep.subr.bf16.mxu0 0
    %791 = vmatpush1.bf16.msra.mxu0 0
    %792 = vmatprep.subr.bf16.mxu0 0
    %793 = vmatpush1.bf16.msra.mxu0 0
    %794 = vmatprep.subr.bf16.mxu0 0
    %795 = vmatpush1.bf16.msra.mxu0 0
    %796 = vmatprep.subr.bf16.mxu0 0
    %797 = vmatpush1.bf16.msra.mxu0 0
    %798 = vmatprep.mubr.bf16.mxu0 0
    %799 = vmatmul.mubr.bf16.gmra.mrb[0].mxu0 %v764
    %v800 = vpop.f32.mrb[0].mxu0
    %v801 = vadd.f32 0.0, %v800
    %v802 = vpop.f32.mrb[0].mxu0
    %v803 = vpop.f32.mrb[0].mxu0
    %v804 = vpop.f32.mrb[0].mxu0
    %805 = vdwg.mxu0
    %v807 = vrot.slane %v753, 2
    %v809 = vadd.f32 %v186, %v807
    %v810 = vxor.u32 %v809, 2147483648
    %v811 = vmul.f32 %v810, 1.442695
    %v812 = vpow.pop %v811
    %v813 = vadd.f32 %v812, 1.0
    %v814 = vrcp.pop %v813
    %v815 = vmul.f32 1.0, %v814
    %v816 = vtanh.pop %v809
    %v818 = vrot.slane %v660, 6
    %v820 = vmul.f32 %v815, %v818
    %822 = vrot.lane.b32.xlu0 %v816, 64
    %v823 = vpop.permute.xlu0 %822
    %v825 = vmul.f32 %v815, %v823
    %827 = vrot.lane.b32.xlu0 %v825, 32
    %v828 = vpop.permute.xlu0 %827
    %v830 = vadd.f32 %v820, %v828
    %v831 = vtanh.pop %v830
    %833 = vrot.lane.b32.xlu0 %v831, 64
    %v834 = vpop.permute.xlu0 %833
    %v836 = vmul.f32 %v815, %v834
    %v837 = vadd.f32 %v189, %v801
    %v838 = vxor.u32 %v837, 2147483648
    %v839 = vmul.f32 %v838, 1.442695
    %v840 = vpow.pop %v839
    %v841 = vadd.f32 %v840, 1.0
    %v842 = vrcp.pop %v841
    %v843 = vmul.f32 1.0, %v842
    %v844 = vtanh.pop %v837
    %v846 = vrot.slane %v691, 2
    %v848 = vmul.f32 %v843, %v846
    %850 = vrot.lane.b32.xlu0 %v844, 64
    %v851 = vpop.permute.xlu0 %850
    %v853 = vmul.f32 %v843, %v851
    %855 = vrot.lane.b32.xlu0 %v853, 32
    %v856 = vpop.permute.xlu0 %855
    %v858 = vadd.f32 %v848, %v856
    %v859 = vtanh.pop %v858
    %861 = vrot.lane.b32.xlu0 %v859, 64
    %v862 = vpop.permute.xlu0 %861
    %v864 = vmul.f32 %v843, %v862
    %866 = vrot.lane.b32.xlu0 %v836, 32
    %v867 = vpop.permute.xlu0 %866
    %vm869 = vcmask 261126
    %870 = vst.msk [vmem:[#allocation2] sm:$0xc0] %vm869, %v867
    %872 = vrot.lane.b32.xlu0 %v864, 64
    %v873 = vpop.permute.xlu0 %872
    %vm875 = vcmask 517376
    %876 = vst.msk [vmem:[#allocation2 + $0x8] sm:$0x3] %vm875, %v873
    %v877 = vpack.c.bf16 %v836, %v836
    %v879 = vrot.slane %v877, 3
    %880 = vrot.lane.b32.xlu0 %v879, 32
    %v881 = vpop.permute.xlu0 %880
    %v883 = vsel %vm210, %v881, 0
    %885 = vmatprep.subr.bf16.mxu0 0
    %886 = vmatpush1.bf16.msra.mxu0 %v206
    %887 = vmatprep.subr.bf16.mxu0 0
    %888 = vmatpush1.bf16.msra.mxu0 %v207
    %889 = vmatprep.subr.bf16.mxu0 0
    %890 = vmatpush1.bf16.msra.mxu0 0
    %891 = vmatprep.subr.bf16.mxu0 0
    %892 = vmatpush1.bf16.msra.mxu0 0
    %893 = vmatprep.subr.bf16.mxu0 0
    %894 = vmatpush1.bf16.msra.mxu0 0
    %895 = vmatprep.subr.bf16.mxu0 0
    %896 = vmatpush1.bf16.msra.mxu0 0
    %897 = vmatprep.subr.bf16.mxu0 0
    %898 = vmatpush1.bf16.msra.mxu0 0
    %899 = vmatprep.subr.bf16.mxu0 0
    %900 = vmatpush1.bf16.msra.mxu0 0
    %901 = vmatprep.subr.bf16.mxu0 0
    %902 = vmatpush1.bf16.msra.mxu0 0
    %903 = vmatprep.subr.bf16.mxu0 0
    %904 = vmatpush1.bf16.msra.mxu0 0
    %905 = vmatprep.subr.bf16.mxu0 0
    %906 = vmatpush1.bf16.msra.mxu0 0
    %907 = vmatprep.subr.bf16.mxu0 0
    %908 = vmatpush1.bf16.msra.mxu0 0
    %909 = vmatprep.subr.bf16.mxu0 0
    %910 = vmatpush1.bf16.msra.mxu0 0
    %911 = vmatprep.subr.bf16.mxu0 0
    %912 = vmatpush1.bf16.msra.mxu0 0
    %913 = vmatprep.subr.bf16.mxu0 0
    %914 = vmatpush1.bf16.msra.mxu0 0
    %915 = vmatprep.subr.bf16.mxu0 0
    %916 = vmatpush1.bf16.msra.mxu0 0
    %917 = vmatprep.mubr.bf16.mxu0 0
    %918 = vmatmul.mubr.bf16.gmra.mrb[0].mxu0 %v883
    %v919 = vpop.f32.mrb[0].mxu0
    %v920 = vadd.f32 0.0, %v919
    %v921 = vpop.f32.mrb[0].mxu0
    %v922 = vpop.f32.mrb[0].mxu0
    %v923 = vpop.f32.mrb[0].mxu0
    %924 = vdwg.mxu0
    %v925 = vpack.c.bf16 %v864, %v864
    %927 = vrot.lane.b32.xlu0 %v925, 32
    %v928 = vpop.permute.xlu0 %927
    %v930 = vsel %vm210, %v928, 0
    %932 = vmatprep.subr.bf16.mxu0 0
    %933 = vmatpush1.bf16.msra.mxu0 %v262
    %934 = vmatprep.subr.bf16.mxu0 0
    %935 = vmatpush1.bf16.msra.mxu0 %v263
    %936 = vmatprep.subr.bf16.mxu0 0
    %937 = vmatpush1.bf16.msra.mxu0 0
    %938 = vmatprep.subr.bf16.mxu0 0
    %939 = vmatpush1.bf16.msra.mxu0 0
    %940 = vmatprep.subr.bf16.mxu0 0
    %941 = vmatpush1.bf16.msra.mxu0 0
    %942 = vmatprep.subr.bf16.mxu0 0
    %943 = vmatpush1.bf16.msra.mxu0 0
    %944 = vmatprep.subr.bf16.mxu0 0
    %945 = vmatpush1.bf16.msra.mxu0 0
    %946 = vmatprep.subr.bf16.mxu0 0
    %947 = vmatpush1.bf16.msra.mxu0 0
    %948 = vmatprep.subr.bf16.mxu0 0
    %949 = vmatpush1.bf16.msra.mxu0 0
    %950 = vmatprep.subr.bf16.mxu0 0
    %951 = vmatpush1.bf16.msra.mxu0 0
    %952 = vmatprep.subr.bf16.mxu0 0
    %953 = vmatpush1.bf16.msra.mxu0 0
    %954 = vmatprep.subr.bf16.mxu0 0
    %955 = vmatpush1.bf16.msra.mxu0 0
    %956 = vmatprep.subr.bf16.mxu0 0
    %957 = vmatpush1.bf16.msra.mxu0 0
    %958 = vmatprep.subr.bf16.mxu0 0
    %959 = vmatpush1.bf16.msra.mxu0 0
    %960 = vmatprep.subr.bf16.mxu0 0
    %961 = vmatpush1.bf16.msra.mxu0 0
    %962 = vmatprep.subr.bf16.mxu0 0
    %963 = vmatpush1.bf16.msra.mxu0 0
    %964 = vmatprep.mubr.bf16.mxu0 0
    %965 = vmatmul.mubr.bf16.gmra.mrb[0].mxu0 %v930
    %v966 = vpop.f32.mrb[0].mxu0
    %v967 = vadd.f32 0.0, %v966
    %v968 = vpop.f32.mrb[0].mxu0
    %v969 = vpop.f32.mrb[0].mxu0
    %v970 = vpop.f32.mrb[0].mxu0
    %971 = vdwg.mxu0
    %v972 = vadd.f32 %v188, %v920
    %v973 = vxor.u32 %v972, 2147483648
    %v974 = vmul.f32 %v973, 1.442695
    %v975 = vpow.pop %v974
    %v976 = vadd.f32 %v975, 1.0
    %v977 = vrcp.pop %v976
    %v978 = vmul.f32 1.0, %v977
    %v979 = vtanh.pop %v972
    %v981 = vrot.slane %v830, 6
    %v983 = vmul.f32 %v978, %v981
    %985 = vrot.lane.b32.xlu0 %v979, 64
    %v986 = vpop.permute.xlu0 %985
    %v988 = vmul.f32 %v978, %v986
    %990 = vrot.lane.b32.xlu0 %v988, 32
    %v991 = vpop.permute.xlu0 %990
    %v993 = vadd.f32 %v983, %v991
    %v994 = vtanh.pop %v993
    %996 = vrot.lane.b32.xlu0 %v994, 64
    %v997 = vpop.permute.xlu0 %996
    %v999 = vmul.f32 %v978, %v997
    %v1001 = vrot.slane %v967, 2
    %v1003 = vadd.f32 %v187, %v1001
    %v1004 = vxor.u32 %v1003, 2147483648
    %v1005 = vmul.f32 %v1004, 1.442695
    %v1006 = vpow.pop %v1005
    %v1007 = vadd.f32 %v1006, 1.0
    %v1008 = vrcp.pop %v1007
    %v1009 = vmul.f32 1.0, %v1008
    %v1010 = vtanh.pop %v1003
    %v1012 = vrot.slane %v858, 2
    %v1014 = vmul.f32 %v1009, %v1012
    %1016 = vrot.lane.b32.xlu0 %v1010, 64
    %v1017 = vpop.permute.xlu0 %1016
    %v1019 = vmul.f32 %v1009, %v1017
    %1021 = vrot.lane.b32.xlu0 %v1019, 32
    %v1022 = vpop.permute.xlu0 %1021
    %v1024 = vadd.f32 %v1014, %v1022
    %v1025 = vtanh.pop %v1024
    %1027 = vrot.lane.b32.xlu0 %v1025, 64
    %v1028 = vpop.permute.xlu0 %1027
    %v1030 = vmul.f32 %v1009, %v1028
    %1032 = vrot.lane.b32.xlu0 %v999, 32
    %v1033 = vpop.permute.xlu0 %1032
    %1035 = vst.msk [vmem:[#allocation2 + $0x8] sm:$0x3] %vm363, %v1033
    %1037 = vrot.lane.b32.xlu0 %v1030, 64
    %v1038 = vpop.permute.xlu0 %1037
    %1040 = vst.msk [vmem:[#allocation2] sm:$0xc0] %vm369, %v1038
    %v1041 = vpack.c.bf16 %v999, %v999
    %1043 = vrot.lane.b32.xlu0 %v1041, 32
    %v1044 = vpop.permute.xlu0 %1043
    %v1046 = vsel %vm210, %v1044, 0
    %1048 = vmatprep.subr.bf16.mxu0 0
    %1049 = vmatpush1.bf16.msra.mxu0 %v206
    %1050 = vmatprep.subr.bf16.mxu0 0
    %1051 = vmatpush1.bf16.msra.mxu0 %v207
    %1052 = vmatprep.subr.bf16.mxu0 0
    %1053 = vmatpush1.bf16.msra.mxu0 0
    %1054 = vmatprep.subr.bf16.mxu0 0
    %1055 = vmatpush1.bf16.msra.mxu0 0
    %1056 = vmatprep.subr.bf16.mxu0 0
    %1057 = vmatpush1.bf16.msra.mxu0 0
    %1058 = vmatprep.subr.bf16.mxu0 0
    %1059 = vmatpush1.bf16.msra.mxu0 0
    %1060 = vmatprep.subr.bf16.mxu0 0
    %1061 = vmatpush1.bf16.msra.mxu0 0
    %1062 = vmatprep.subr.bf16.mxu0 0
    %1063 = vmatpush1.bf16.msra.mxu0 0
    %1064 = vmatprep.subr.bf16.mxu0 0
    %1065 = vmatpush1.bf16.msra.mxu0 0
    %1066 = vmatprep.subr.bf16.mxu0 0
    %1067 = vmatpush1.bf16.msra.mxu0 0
    %1068 = vmatprep.subr.bf16.mxu0 0
    %1069 = vmatpush1.bf16.msra.mxu0 0
    %1070 = vmatprep.subr.bf16.mxu0 0
    %1071 = vmatpush1.bf16.msra.mxu0 0
    %1072 = vmatprep.subr.bf16.mxu0 0
    %1073 = vmatpush1.bf16.msra.mxu0 0
    %1074 = vmatprep.subr.bf16.mxu0 0
    %1075 = vmatpush1.bf16.msra.mxu0 0
    %1076 = vmatprep.subr.bf16.mxu0 0
    %1077 = vmatpush1.bf16.msra.mxu0 0
    %1078 = vmatprep.subr.bf16.mxu0 0
    %1079 = vmatpush1.bf16.msra.mxu0 0
    %1080 = vmatprep.mubr.bf16.mxu0 0
    %1081 = vmatmul.mubr.bf16.gmra.mrb[0].mxu0 %v1046
    %v1082 = vpop.f32.mrb[0].mxu0
    %v1083 = vadd.f32 0.0, %v1082
    %v1084 = vpop.f32.mrb[0].mxu0
    %v1085 = vpop.f32.mrb[0].mxu0
    %v1086 = vpop.f32.mrb[0].mxu0
    %1087 = vdwg.mxu0
    %v1088 = vpack.c.bf16 %v1030, %v1030
    %v1090 = vrot.slane %v1088, 3
    %1091 = vrot.lane.b32.xlu0 %v1090, 32
    %v1092 = vpop.permute.xlu0 %1091
    %v1094 = vsel %vm210, %v1092, 0
    %1096 = vmatprep.subr.bf16.mxu0 0
    %1097 = vmatpush1.bf16.msra.mxu0 %v262
    %1098 = vmatprep.subr.bf16.mxu0 0
    %1099 = vmatpush1.bf16.msra.mxu0 %v263
    %1100 = vmatprep.subr.bf16.mxu0 0
    %1101 = vmatpush1.bf16.msra.mxu0 0
    %1102 = vmatprep.subr.bf16.mxu0 0
    %1103 = vmatpush1.bf16.msra.mxu0 0
    %1104 = vmatprep.subr.bf16.mxu0 0
    %1105 = vmatpush1.bf16.msra.mxu0 0
    %1106 = vmatprep.subr.bf16.mxu0 0
    %1107 = vmatpush1.bf16.msra.mxu0 0
    %1108 = vmatprep.subr.bf16.mxu0 0
    %1109 = vmatpush1.bf16.msra.mxu0 0
    %1110 = vmatprep.subr.bf16.mxu0 0
    %1111 = vmatpush1.bf16.msra.mxu0 0
    %1112 = vmatprep.subr.bf16.mxu0 0
    %1113 = vmatpush1.bf16.msra.mxu0 0
    %1114 = vmatprep.subr.bf16.mxu0 0
    %1115 = vmatpush1.bf16.msra.mxu0 0
    %1116 = vmatprep.subr.bf16.mxu0 0
    %1117 = vmatpush1.bf16.msra.mxu0 0
    %1118 = vmatprep.subr.bf16.mxu0 0
    %1119 = vmatpush1.bf16.msra.mxu0 0
    %1120 = vmatprep.subr.bf16.mxu0 0
    %1121 = vmatpush1.bf16.msra.mxu0 0
    %1122 = vmatprep.subr.bf16.mxu0 0
    %1123 = vmatpush1.bf16.msra.mxu0 0
    %1124 = vmatprep.subr.bf16.mxu0 0
    %1125 = vmatpush1.bf16.msra.mxu0 0
    %1126 = vmatprep.subr.bf16.mxu0 0
    %1127 = vmatpush1.bf16.msra.mxu0 0
    %1128 = vmatprep.mubr.bf16.mxu0 0
    %1129 = vmatmul.mubr.bf16.gmra.mrb[0].mxu0 %v1094
    %v1130 = vpop.f32.mrb[0].mxu0
    %v1131 = vadd.f32 0.0, %v1130
    %v1132 = vpop.f32.mrb[0].mxu0
    %v1133 = vpop.f32.mrb[0].mxu0
    %v1134 = vpop.f32.mrb[0].mxu0
    %1135 = vdwg.mxu0
    %v1137 = vrot.slane %v1083, 6
    %v1139 = vadd.f32 %v188, %v1137
    %v1140 = vxor.u32 %v1139, 2147483648
    %v1141 = vmul.f32 %v1140, 1.442695
    %v1142 = vpow.pop %v1141
    %v1143 = vadd.f32 %v1142, 1.0
    %v1144 = vrcp.pop %v1143
    %v1145 = vmul.f32 1.0, %v1144
    %v1146 = vtanh.pop %v1139
    %v1148 = vrot.slane %v993, 6
    %v1150 = vmul.f32 %v1145, %v1148
    %1152 = vrot.lane.b32.xlu0 %v1146, 64
    %v1153 = vpop.permute.xlu0 %1152
    %v1155 = vmul.f32 %v1145, %v1153
    %1157 = vrot.lane.b32.xlu0 %v1155, 32
    %v1158 = vpop.permute.xlu0 %1157
    %v1160 = vadd.f32 %v1150, %v1158
    %v1161 = vtanh.pop %v1160
    %1163 = vrot.lane.b32.xlu0 %v1161, 64
    %v1164 = vpop.permute.xlu0 %1163
    %v1166 = vmul.f32 %v1145, %v1164
    %v1168 = vrot.slane %v1131, 4
    %v1170 = vadd.f32 %v187, %v1168
    %v1171 = vxor.u32 %v1170, 2147483648
    %v1172 = vmul.f32 %v1171, 1.442695
    %v1173 = vpow.pop %v1172
    %v1174 = vadd.f32 %v1173, 1.0
    %v1175 = vrcp.pop %v1174
    %v1176 = vmul.f32 1.0, %v1175
    %v1177 = vtanh.pop %v1170
    %v1179 = vrot.slane %v1024, 2
    %v1181 = vmul.f32 %v1176, %v1179
    %1183 = vrot.lane.b32.xlu0 %v1177, 64
    %v1184 = vpop.permute.xlu0 %1183
    %v1186 = vmul.f32 %v1176, %v1184
    %1188 = vrot.lane.b32.xlu0 %v1186, 32
    %v1189 = vpop.permute.xlu0 %1188
    %v1191 = vadd.f32 %v1181, %v1189
    %v1192 = vtanh.pop %v1191
    %1194 = vrot.lane.b32.xlu0 %v1192, 64
    %v1195 = vpop.permute.xlu0 %1194
    %v1197 = vmul.f32 %v1176, %v1195
    %1199 = vrot.lane.b32.xlu0 %v1166, 32
    %v1200 = vpop.permute.xlu0 %1199
    %1202 = vst.msk [vmem:[#allocation2 + $0x8] sm:$0xc] %vm532, %v1200
    %1204 = vrot.lane.b32.xlu0 %v1197, 64
    %v1205 = vpop.permute.xlu0 %1204
    %1207 = vst.msk [vmem:[#allocation2] sm:$0x30] %vm538, %v1205
    %v1208 = vpack.c.bf16 %v1166, %v1166
    %v1210 = vrot.slane %v1208, 1
    %1211 = vrot.lane.b32.xlu0 %v1210, 32
    %v1212 = vpop.permute.xlu0 %1211
    %v1214 = vsel %vm210, %v1212, 0
    %1216 = vmatprep.subr.bf16.mxu0 0
    %1217 = vmatpush1.bf16.msra.mxu0 %v206
    %1218 = vmatprep.subr.bf16.mxu0 0
    %1219 = vmatpush1.bf16.msra.mxu0 %v207
    %1220 = vmatprep.subr.bf16.mxu0 0
    %1221 = vmatpush1.bf16.msra.mxu0 0
    %1222 = vmatprep.subr.bf16.mxu0 0
    %1223 = vmatpush1.bf16.msra.mxu0 0
    %1224 = vmatprep.subr.bf16.mxu0 0
    %1225 = vmatpush1.bf16.msra.mxu0 0
    %1226 = vmatprep.subr.bf16.mxu0 0
    %1227 = vmatpush1.bf16.msra.mxu0 0
    %1228 = vmatprep.subr.bf16.mxu0 0
    %1229 = vmatpush1.bf16.msra.mxu0 0
    %1230 = vmatprep.subr.bf16.mxu0 0
    %1231 = vmatpush1.bf16.msra.mxu0 0
    %1232 = vmatprep.subr.bf16.mxu0 0
    %1233 = vmatpush1.bf16.msra.mxu0 0
    %1234 = vmatprep.subr.bf16.mxu0 0
    %1235 = vmatpush1.bf16.msra.mxu0 0
    %1236 = vmatprep.subr.bf16.mxu0 0
    %1237 = vmatpush1.bf16.msra.mxu0 0
    %1238 = vmatprep.subr.bf16.mxu0 0
    %1239 = vmatpush1.bf16.msra.mxu0 0
    %1240 = vmatprep.subr.bf16.mxu0 0
    %1241 = vmatpush1.bf16.msra.mxu0 0
    %1242 = vmatprep.subr.bf16.mxu0 0
    %1243 = vmatpush1.bf16.msra.mxu0 0
    %1244 = vmatprep.subr.bf16.mxu0 0
    %1245 = vmatpush1.bf16.msra.mxu0 0
    %1246 = vmatprep.subr.bf16.mxu0 0
    %1247 = vmatpush1.bf16.msra.mxu0 0
    %1248 = vmatprep.mubr.bf16.mxu0 0
    %1249 = vmatmul.mubr.bf16.gmra.mrb[0].mxu0 %v1214
    %v1250 = vpop.f32.mrb[0].mxu0
    %v1251 = vadd.f32 0.0, %v1250
    %v1252 = vpop.f32.mrb[0].mxu0
    %v1253 = vpop.f32.mrb[0].mxu0
    %v1254 = vpop.f32.mrb[0].mxu0
    %1255 = vdwg.mxu0
    %v1256 = vpack.c.bf16 %v1197, %v1197
    %v1258 = vrot.slane %v1256, 2
    %1259 = vrot.lane.b32.xlu0 %v1258, 32
    %v1260 = vpop.permute.xlu0 %1259
    %v1262 = vsel %vm210, %v1260, 0
    %1264 = vmatprep.subr.bf16.mxu0 0
    %1265 = vmatpush1.bf16.msra.mxu0 %v262
    %1266 = vmatprep.subr.bf16.mxu0 0
    %1267 = vmatpush1.bf16.msra.mxu0 %v263
    %1268 = vmatprep.subr.bf16.mxu0 0
    %1269 = vmatpush1.bf16.msra.mxu0 0
    %1270 = vmatprep.subr.bf16.mxu0 0
    %1271 = vmatpush1.bf16.msra.mxu0 0
    %1272 = vmatprep.subr.bf16.mxu0 0
    %1273 = vmatpush1.bf16.msra.mxu0 0
    %1274 = vmatprep.subr.bf16.mxu0 0
    %1275 = vmatpush1.bf16.msra.mxu0 0
    %1276 = vmatprep.subr.bf16.mxu0 0
    %1277 = vmatpush1.bf16.msra.mxu0 0
    %1278 = vmatprep.subr.bf16.mxu0 0
    %1279 = vmatpush1.bf16.msra.mxu0 0
    %1280 = vmatprep.subr.bf16.mxu0 0
    %1281 = vmatpush1.bf16.msra.mxu0 0
    %1282 = vmatprep.subr.bf16.mxu0 0
    %1283 = vmatpush1.bf16.msra.mxu0 0
    %1284 = vmatprep.subr.bf16.mxu0 0
    %1285 = vmatpush1.bf16.msra.mxu0 0
    %1286 = vmatprep.subr.bf16.mxu0 0
    %1287 = vmatpush1.bf16.msra.mxu0 0
    %1288 = vmatprep.subr.bf16.mxu0 0
    %1289 = vmatpush1.bf16.msra.mxu0 0
    %1290 = vmatprep.subr.bf16.mxu0 0
    %1291 = vmatpush1.bf16.msra.mxu0 0
    %1292 = vmatprep.subr.bf16.mxu0 0
    %1293 = vmatpush1.bf16.msra.mxu0 0
    %1294 = vmatprep.subr.bf16.mxu0 0
    %1295 = vmatpush1.bf16.msra.mxu0 0
    %1296 = vmatprep.mubr.bf16.mxu0 0
    %1297 = vmatmul.mubr.bf16.gmra.mrb[0].mxu0 %v1262
    %v1298 = vpop.f32.mrb[0].mxu0
    %v1299 = vadd.f32 0.0, %v1298
    %v1300 = vpop.f32.mrb[0].mxu0
    %v1301 = vpop.f32.mrb[0].mxu0
    %v1302 = vpop.f32.mrb[0].mxu0
    %1303 = vdwg.mxu0
    %v1305 = vrot.slane %v1251, 4
    %v1307 = vadd.f32 %v188, %v1305
    %v1308 = vxor.u32 %v1307, 2147483648
    %v1309 = vmul.f32 %v1308, 1.442695
    %v1310 = vpow.pop %v1309
    %v1311 = vadd.f32 %v1310, 1.0
    %v1312 = vrcp.pop %v1311
    %v1313 = vmul.f32 1.0, %v1312
    %v1314 = vtanh.pop %v1307
    %v1316 = vrot.slane %v1160, 6
    %v1318 = vmul.f32 %v1313, %v1316
    %1320 = vrot.lane.b32.xlu0 %v1314, 64
    %v1321 = vpop.permute.xlu0 %1320
    %v1323 = vmul.f32 %v1313, %v1321
    %1325 = vrot.lane.b32.xlu0 %v1323, 32
    %v1326 = vpop.permute.xlu0 %1325
    %v1328 = vadd.f32 %v1318, %v1326
    %v1329 = vtanh.pop %v1328
    %1331 = vrot.lane.b32.xlu0 %v1329, 64
    %v1332 = vpop.permute.xlu0 %1331
    %v1334 = vmul.f32 %v1313, %v1332
    %v1336 = vrot.slane %v1299, 6
    %v1338 = vadd.f32 %v187, %v1336
    %v1339 = vxor.u32 %v1338, 2147483648
    %v1340 = vmul.f32 %v1339, 1.442695
    %v1341 = vpow.pop %v1340
    %v1342 = vadd.f32 %v1341, 1.0
    %v1343 = vrcp.pop %v1342
    %v1344 = vmul.f32 1.0, %v1343
    %v1345 = vtanh.pop %v1338
    %v1347 = vrot.slane %v1191, 2
    %v1349 = vmul.f32 %v1344, %v1347
    %1351 = vrot.lane.b32.xlu0 %v1345, 64
    %v1352 = vpop.permute.xlu0 %1351
    %v1354 = vmul.f32 %v1344, %v1352
    %1356 = vrot.lane.b32.xlu0 %v1354, 32
    %v1357 = vpop.permute.xlu0 %1356
    %v1359 = vadd.f32 %v1349, %v1357
    %v1360 = vtanh.pop %v1359
    %1362 = vrot.lane.b32.xlu0 %v1360, 64
    %v1363 = vpop.permute.xlu0 %1362
    %v1365 = vmul.f32 %v1344, %v1363
    %1367 = vrot.lane.b32.xlu0 %v1334, 32
    %v1368 = vpop.permute.xlu0 %1367
    %1370 = vst.msk [vmem:[#allocation2 + $0x8] sm:$0x30] %vm702, %v1368
    %1372 = vrot.lane.b32.xlu0 %v1365, 64
    %v1373 = vpop.permute.xlu0 %1372
    %1375 = vst.msk [vmem:[#allocation2] sm:$0xc] %vm708, %v1373
    %v1376 = vpack.c.bf16 %v1334, %v1334
    %v1378 = vrot.slane %v1376, 2
    %1379 = vrot.lane.b32.xlu0 %v1378, 32
    %v1380 = vpop.permute.xlu0 %1379
    %v1382 = vsel %vm210, %v1380, 0
    %1384 = vmatprep.subr.bf16.mxu0 0
    %1385 = vmatpush1.bf16.msra.mxu0 %v206
    %1386 = vmatprep.subr.bf16.mxu0 0
    %1387 = vmatpush1.bf16.msra.mxu0 %v207
    %1388 = vmatprep.subr.bf16.mxu0 0
    %1389 = vmatpush1.bf16.msra.mxu0 0
    %1390 = vmatprep.subr.bf16.mxu0 0
    %1391 = vmatpush1.bf16.msra.mxu0 0
    %1392 = vmatprep.subr.bf16.mxu0 0
    %1393 = vmatpush1.bf16.msra.mxu0 0
    %1394 = vmatprep.subr.bf16.mxu0 0
    %1395 = vmatpush1.bf16.msra.mxu0 0
    %1396 = vmatprep.subr.bf16.mxu0 0
    %1397 = vmatpush1.bf16.msra.mxu0 0
    %1398 = vmatprep.subr.bf16.mxu0 0
    %1399 = vmatpush1.bf16.msra.mxu0 0
    %1400 = vmatprep.subr.bf16.mxu0 0
    %1401 = vmatpush1.bf16.msra.mxu0 0
    %1402 = vmatprep.subr.bf16.mxu0 0
    %1403 = vmatpush1.bf16.msra.mxu0 0
    %1404 = vmatprep.subr.bf16.mxu0 0
    %1405 = vmatpush1.bf16.msra.mxu0 0
    %1406 = vmatprep.subr.bf16.mxu0 0
    %1407 = vmatpush1.bf16.msra.mxu0 0
    %1408 = vmatprep.subr.bf16.mxu0 0
    %1409 = vmatpush1.bf16.msra.mxu0 0
    %1410 = vmatprep.subr.bf16.mxu0 0
    %1411 = vmatpush1.bf16.msra.mxu0 0
    %1412 = vmatprep.subr.bf16.mxu0 0
    %1413 = vmatpush1.bf16.msra.mxu0 0
    %1414 = vmatprep.subr.bf16.mxu0 0
    %1415 = vmatpush1.bf16.msra.mxu0 0
    %1416 = vmatprep.mubr.bf16.mxu0 0
    %1417 = vmatmul.mubr.bf16.gmra.mrb[0].mxu0 %v1382
    %v1418 = vpop.f32.mrb[0].mxu0
    %v1419 = vadd.f32 0.0, %v1418
    %v1420 = vpop.f32.mrb[0].mxu0
    %v1421 = vpop.f32.mrb[0].mxu0
    %v1422 = vpop.f32.mrb[0].mxu0
    %1423 = vdwg.mxu0
    %v1424 = vpack.c.bf16 %v1365, %v1365
    %v1426 = vrot.slane %v1424, 1
    %1427 = vrot.lane.b32.xlu0 %v1426, 32
    %v1428 = vpop.permute.xlu0 %1427
    %v1430 = vsel %vm210, %v1428, 0
    %1432 = vmatprep.subr.bf16.mxu0 0
    %1433 = vmatpush1.bf16.msra.mxu0 %v262
    %1434 = vmatprep.subr.bf16.mxu0 0
    %1435 = vmatpush1.bf16.msra.mxu0 %v263
    %1436 = vmatprep.subr.bf16.mxu0 0
    %1437 = vmatpush1.bf16.msra.mxu0 0
    %1438 = vmatprep.subr.bf16.mxu0 0
    %1439 = vmatpush1.bf16.msra.mxu0 0
    %1440 = vmatprep.subr.bf16.mxu0 0
    %1441 = vmatpush1.bf16.msra.mxu0 0
    %1442 = vmatprep.subr.bf16.mxu0 0
    %1443 = vmatpush1.bf16.msra.mxu0 0
    %1444 = vmatprep.subr.bf16.mxu0 0
    %1445 = vmatpush1.bf16.msra.mxu0 0
    %1446 = vmatprep.subr.bf16.mxu0 0
    %1447 = vmatpush1.bf16.msra.mxu0 0
    %1448 = vmatprep.subr.bf16.mxu0 0
    %1449 = vmatpush1.bf16.msra.mxu0 0
    %1450 = vmatprep.subr.bf16.mxu0 0
    %1451 = vmatpush1.bf16.msra.mxu0 0
    %1452 = vmatprep.subr.bf16.mxu0 0
    %1453 = vmatpush1.bf16.msra.mxu0 0
    %1454 = vmatprep.subr.bf16.mxu0 0
    %1455 = vmatpush1.bf16.msra.mxu0 0
    %1456 = vmatprep.subr.bf16.mxu0 0
    %1457 = vmatpush1.bf16.msra.mxu0 0
    %1458 = vmatprep.subr.bf16.mxu0 0
    %1459 = vmatpush1.bf16.msra.mxu0 0
    %1460 = vmatprep.subr.bf16.mxu0 0
    %1461 = vmatpush1.bf16.msra.mxu0 0
    %1462 = vmatprep.subr.bf16.mxu0 0
    %1463 = vmatpush1.bf16.msra.mxu0 0
    %1464 = vmatprep.mubr.bf16.mxu0 0
    %1465 = vmatmul.mubr.bf16.gmra.mrb[0].mxu0 %v1430
    %v1466 = vpop.f32.mrb[0].mxu0
    %v1467 = vadd.f32 0.0, %v1466
    %v1468 = vpop.f32.mrb[0].mxu0
    %v1469 = vpop.f32.mrb[0].mxu0
    %v1470 = vpop.f32.mrb[0].mxu0
    %1471 = vdwg.mxu0
    %v1473 = vrot.slane %v1419, 2
    %v1475 = vadd.f32 %v188, %v1473
    %v1476 = vxor.u32 %v1475, 2147483648
    %v1477 = vmul.f32 %v1476, 1.442695
    %v1478 = vpow.pop %v1477
    %v1479 = vadd.f32 %v1478, 1.0
    %v1480 = vrcp.pop %v1479
    %v1481 = vmul.f32 1.0, %v1480
    %v1482 = vtanh.pop %v1475
    %v1484 = vrot.slane %v1328, 6
    %v1486 = vmul.f32 %v1481, %v1484
    %1488 = vrot.lane.b32.xlu0 %v1482, 64
    %v1489 = vpop.permute.xlu0 %1488
    %v1491 = vmul.f32 %v1481, %v1489
    %1493 = vrot.lane.b32.xlu0 %v1491, 32
    %v1494 = vpop.permute.xlu0 %1493
    %v1496 = vadd.f32 %v1486, %v1494
    %v1497 = vtanh.pop %v1496
    %1499 = vrot.lane.b32.xlu0 %v1497, 64
    %v1500 = vpop.permute.xlu0 %1499
    %v1502 = vmul.f32 %v1481, %v1500
    %v1503 = vadd.f32 %v187, %v1467
    %v1504 = vxor.u32 %v1503, 2147483648
    %v1505 = vmul.f32 %v1504, 1.442695
    %v1506 = vpow.pop %v1505
    %v1507 = vadd.f32 %v1506, 1.0
    %v1508 = vrcp.pop %v1507
    %v1509 = vmul.f32 1.0, %v1508
    %v1510 = vtanh.pop %v1503
    %v1512 = vrot.slane %v1359, 2
    %v1514 = vmul.f32 %v1509, %v1512
    %1516 = vrot.lane.b32.xlu0 %v1510, 64
    %v1517 = vpop.permute.xlu0 %1516
    %v1519 = vmul.f32 %v1509, %v1517
    %1521 = vrot.lane.b32.xlu0 %v1519, 32
    %v1522 = vpop.permute.xlu0 %1521
    %v1524 = vadd.f32 %v1514, %v1522
    %v1525 = vtanh.pop %v1524
    %1527 = vrot.lane.b32.xlu0 %v1525, 64
    %v1528 = vpop.permute.xlu0 %1527
    %v1530 = vmul.f32 %v1509, %v1528
    %1532 = vrot.lane.b32.xlu0 %v1502, 32
    %v1533 = vpop.permute.xlu0 %1532
    %1535 = vst.msk [vmem:[#allocation2 + $0x8] sm:$0xc0] %vm869, %v1533
    %1537 = vrot.lane.b32.xlu0 %v1530, 64
    %v1538 = vpop.permute.xlu0 %1537
    %1540 = vst.msk [vmem:[#allocation2] sm:$0x3] %vm875, %v1538
    %v1541 = vld [vmem:[#allocation2] sm:$0xff]
    %v1542 = vld [vmem:[#allocation2 + $0x8] sm:$0xff]
    %v1543 = vld [vmem:[%s5] sm:$0xff]
    %v1544 = vld [vmem:[%s5 + $0x8] sm:$0xff]
    %v1545 = vld [vmem:[%s5 + $0x10] sm:$0xff]
    %v1546 = vld [vmem:[%s5 + $0x18] sm:$0xff]
    %v1547 = vld [vmem:[%s5 + $0x20] sm:$0xff]
    %v1548 = vld [vmem:[%s5 + $0x28] sm:$0xff]
    %v1549 = vld [vmem:[%s5 + $0x30] sm:$0xff]
    %v1550 = vld [vmem:[%s5 + $0x38] sm:$0xff]
    %v1551 = vld [vmem:[#allocation8] sm:$0x1]
    %v1553 = vlaneseq
    %v1554 = vshrl.u32 %v1553, 7
    %v1555 = vsub.s32 0, %v1554
    %v1556 = vrot.slane %v1551, %v1555
    %vm1558 = vcmask 523264
    %v1560 = vsel %vm1558, %v1541, 0
    %1562 = vmatprep.subr.mxu0 0.0
    %1563 = vmatpush1.msra.mxu0 %v1543
    %1564 = vmatprep.subr.mxu0 0.0
    %1565 = vmatpush1.msra.mxu0 %v1544
    %1566 = vmatprep.subr.mxu0 0.0
    %1567 = vmatpush1.msra.mxu0 %v1545
    %1568 = vmatprep.subr.mxu0 0.0
    %1569 = vmatpush1.msra.mxu0 %v1546
    %1570 = vmatprep.subr.mxu0 0.0
    %1571 = vmatpush1.msra.mxu0 %v1547
    %1572 = vmatprep.subr.mxu0 0.0
    %1573 = vmatpush1.msra.mxu0 %v1548
    %1574 = vmatprep.subr.mxu0 0.0
    %1575 = vmatpush1.msra.mxu0 %v1549
    %1576 = vmatprep.subr.mxu0 0.0
    %1577 = vmatpush1.msra.mxu0 %v1550
    %1578 = vmatprep.subr.mxu0 0.0
    %1579 = vmatpush1.msra.mxu0 0.0
    %1580 = vmatprep.subr.mxu0 0.0
    %1581 = vmatpush1.msra.mxu0 0.0
    %1582 = vmatprep.subr.mxu0 0.0
    %1583 = vmatpush1.msra.mxu0 0.0
    %1584 = vmatprep.subr.mxu0 0.0
    %1585 = vmatpush1.msra.mxu0 0.0
    %1586 = vmatprep.subr.mxu0 0.0
    %1587 = vmatpush1.msra.mxu0 0.0
    %1588 = vmatprep.subr.mxu0 0.0
    %1589 = vmatpush1.msra.mxu0 0.0
    %1590 = vmatprep.subr.mxu0 0.0
    %1591 = vmatpush1.msra.mxu0 0.0
    %1592 = vmatprep.subr.mxu0 0.0
    %1593 = vmatpush1.msra.mxu0 0.0
    %1594 = vmatprep.subr.mxu0 0.0
    %1595 = vmatpush1.msra.mxu0 0.0
    %1596 = vmatprep.subr.mxu0 0.0
    %1597 = vmatpush1.msra.mxu0 0.0
    %1598 = vmatprep.subr.mxu0 0.0
    %1599 = vmatpush1.msra.mxu0 0.0
    %1600 = vmatprep.subr.mxu0 0.0
    %1601 = vmatpush1.msra.mxu0 0.0
    %1602 = vmatprep.subr.mxu0 0.0
    %1603 = vmatpush1.msra.mxu0 0.0
    %1604 = vmatprep.subr.mxu0 0.0
    %1605 = vmatpush1.msra.mxu0 0.0
    %1606 = vmatprep.subr.mxu0 0.0
    %1607 = vmatpush1.msra.mxu0 0.0
    %1608 = vmatprep.subr.mxu0 0.0
    %1609 = vmatpush1.msra.mxu0 0.0
    %1610 = vmatprep.subr.mxu0 0.0
    %1611 = vmatpush1.msra.mxu0 0.0
    %1612 = vmatprep.subr.mxu0 0.0
    %1613 = vmatpush1.msra.mxu0 0.0
    %1614 = vmatprep.subr.mxu0 0.0
    %1615 = vmatpush1.msra.mxu0 0.0
    %1616 = vmatprep.subr.mxu0 0.0
    %1617 = vmatpush1.msra.mxu0 0.0
    %1618 = vmatprep.subr.mxu0 0.0
    %1619 = vmatpush1.msra.mxu0 0.0
    %1620 = vmatprep.subr.mxu0 0.0
    %1621 = vmatpush1.msra.mxu0 0.0
    %1622 = vmatprep.subr.mxu0 0.0
    %1623 = vmatpush1.msra.mxu0 0.0
    %1624 = vmatprep.subr.mxu0 0.0
    %1625 = vmatpush1.msra.mxu0 0.0
    %1626 = vmatprep.mubr.f32.mxu0 0.0
    %1627 = vmatmul.mubr.f32.gmra.mrb[0].mxu0 %v1560
    %v1628 = vpop.f32.mrb[0].mxu0
    %v1629 = vadd.f32 %v1556, %v1628
    %v1630 = vpop.f32.mrb[0].mxu0
    %1631 = vdwg.mxu0
    %v1632 = vxor.u32 %v1629, 2147483648
    %v1633 = vmul.f32 %v1632, 1.442695
    %v1634 = vpow.pop %v1633
    %v1635 = vadd.f32 %v1634, 1.0
    %v1636 = vrcp.pop %v1635
    %v1637 = vmul.f32 1.0, %v1636
    %v1638 = vtanh.pop %v1629
    %v1639 = vmul.f32 %v1637, 0.0
    %1641 = vrot.lane.b32.xlu0 %v1638, 64
    %v1642 = vpop.permute.xlu0 %1641
    %v1644 = vmul.f32 %v1637, %v1642
    %1646 = vrot.lane.b32.xlu0 %v1644, 32
    %v1647 = vpop.permute.xlu0 %1646
    %v1649 = vadd.f32 %v1639, %v1647
    %v1650 = vtanh.pop %v1649
    %1652 = vrot.lane.b32.xlu0 %v1650, 64
    %v1653 = vpop.permute.xlu0 %1652
    %v1655 = vmul.f32 %v1637, %v1653
    %v1656 = vld [vmem:[#allocation9] sm:$0xff]
    %v1657 = vld [vmem:[#allocation9 + $0x8] sm:$0xff]
    %v1658 = vld [vmem:[#allocation9 + $0x10] sm:$0xff]
    %v1659 = vld [vmem:[#allocation9 + $0x18] sm:$0xff]
    %v1660 = vld [vmem:[#allocation9 + $0x20] sm:$0xff]
    %v1661 = vld [vmem:[#allocation9 + $0x28] sm:$0xff]
    %v1662 = vld [vmem:[#allocation9 + $0x30] sm:$0xff]
    %v1663 = vld [vmem:[#allocation9 + $0x38] sm:$0xff]
    %v1664 = vld [vmem:[#allocation12] sm:$0x1]
    %v1666 = vlaneseq
    %v1667 = vshrl.u32 %v1666, 7
    %v1668 = vsub.s32 0, %v1667
    %v1669 = vrot.slane %v1664, %v1668
    %v1672 = vsel %vm1558, %v1542, 0
    %1674 = vmatprep.subr.mxu0 0.0
    %1675 = vmatpush1.msra.mxu0 %v1656
    %1676 = vmatprep.subr.mxu0 0.0
    %1677 = vmatpush1.msra.mxu0 %v1657
    %1678 = vmatprep.subr.mxu0 0.0
    %1679 = vmatpush1.msra.mxu0 %v1658
    %1680 = vmatprep.subr.mxu0 0.0
    %1681 = vmatpush1.msra.mxu0 %v1659
    %1682 = vmatprep.subr.mxu0 0.0
    %1683 = vmatpush1.msra.mxu0 %v1660
    %1684 = vmatprep.subr.mxu0 0.0
    %1685 = vmatpush1.msra.mxu0 %v1661
    %1686 = vmatprep.subr.mxu0 0.0
    %1687 = vmatpush1.msra.mxu0 %v1662
    %1688 = vmatprep.subr.mxu0 0.0
    %1689 = vmatpush1.msra.mxu0 %v1663
    %1690 = vmatprep.subr.mxu0 0.0
    %1691 = vmatpush1.msra.mxu0 0.0
    %1692 = vmatprep.subr.mxu0 0.0
    %1693 = vmatpush1.msra.mxu0 0.0
    %1694 = vmatprep.subr.mxu0 0.0
    %1695 = vmatpush1.msra.mxu0 0.0
    %1696 = vmatprep.subr.mxu0 0.0
    %1697 = vmatpush1.msra.mxu0 0.0
    %1698 = vmatprep.subr.mxu0 0.0
    %1699 = vmatpush1.msra.mxu0 0.0
    %1700 = vmatprep.subr.mxu0 0.0
    %1701 = vmatpush1.msra.mxu0 0.0
    %1702 = vmatprep.subr.mxu0 0.0
    %1703 = vmatpush1.msra.mxu0 0.0
    %1704 = vmatprep.subr.mxu0 0.0
    %1705 = vmatpush1.msra.mxu0 0.0
    %1706 = vmatprep.subr.mxu0 0.0
    %1707 = vmatpush1.msra.mxu0 0.0
    %1708 = vmatprep.subr.mxu0 0.0
    %1709 = vmatpush1.msra.mxu0 0.0
    %1710 = vmatprep.subr.mxu0 0.0
    %1711 = vmatpush1.msra.mxu0 0.0
    %1712 = vmatprep.subr.mxu0 0.0
    %1713 = vmatpush1.msra.mxu0 0.0
    %1714 = vmatprep.subr.mxu0 0.0
    %1715 = vmatpush1.msra.mxu0 0.0
    %1716 = vmatprep.subr.mxu0 0.0
    %1717 = vmatpush1.msra.mxu0 0.0
    %1718 = vmatprep.subr.mxu0 0.0
    %1719 = vmatpush1.msra.mxu0 0.0
    %1720 = vmatprep.subr.mxu0 0.0
    %1721 = vmatpush1.msra.mxu0 0.0
    %1722 = vmatprep.subr.mxu0 0.0
    %1723 = vmatpush1.msra.mxu0 0.0
    %1724 = vmatprep.subr.mxu0 0.0
    %1725 = vmatpush1.msra.mxu0 0.0
    %1726 = vmatprep.subr.mxu0 0.0
    %1727 = vmatpush1.msra.mxu0 0.0
    %1728 = vmatprep.subr.mxu0 0.0
    %1729 = vmatpush1.msra.mxu0 0.0
    %1730 = vmatprep.subr.mxu0 0.0
    %1731 = vmatpush1.msra.mxu0 0.0
    %1732 = vmatprep.subr.mxu0 0.0
    %1733 = vmatpush1.msra.mxu0 0.0
    %1734 = vmatprep.subr.mxu0 0.0
    %1735 = vmatpush1.msra.mxu0 0.0
    %1736 = vmatprep.subr.mxu0 0.0
    %1737 = vmatpush1.msra.mxu0 0.0
    %1738 = vmatprep.mubr.f32.mxu0 0.0
    %1739 = vmatmul.mubr.f32.gmra.mrb[0].mxu0 %v1560
    %v1740 = vpop.f32.mrb[0].mxu0
    %v1741 = vadd.f32 %v1669, %v1740
    %v1742 = vpop.f32.mrb[0].mxu0
    %1743 = vmatprep.mubr.f32.mxu0 0.0
    %1744 = vmatmul.mubr.f32.gmra.mrb[0].mxu0 %v1672
    %v1745 = vpop.f32.mrb[0].mxu0
    %v1746 = vadd.f32 %v1669, %v1745
    %v1747 = vpop.f32.mrb[0].mxu0
    %1748 = vdwg.mxu0
    %v1749 = vld [vmem:[#allocation11] sm:$0xf]
    %v1750 = vld [vmem:[#allocation11 + $0x4] sm:$0xf]
    %v1751 = vld [vmem:[#allocation11 + $0x8] sm:$0xf]
    %v1752 = vld [vmem:[#allocation11 + $0xc] sm:$0xf]
    %v1757 = vunpack.c.l.b16 %v1749
    %v1758 = vunpack.c.l.b16 %v1750
    %v1759 = vunpack.c.l.b16 %v1751
    %v1760 = vunpack.c.l.b16 %v1752
    %v1761 = vpack.c.b16 %v1758, %v1757
    %v1762 = vpack.c.b16 %v1760, %v1759
    %1765 = vmatprep.subr.bf16.mxu0 0
    %1766 = vmatpush1.bf16.msra.mxu0 %v1761
    %1767 = vmatprep.subr.bf16.mxu0 0
    %1768 = vmatpush1.bf16.msra.mxu0 %v1762
    %1769 = vmatprep.subr.bf16.mxu0 0
    %1770 = vmatpush1.bf16.msra.mxu0 0
    %1771 = vmatprep.subr.bf16.mxu0 0
    %1772 = vmatpush1.bf16.msra.mxu0 0
    %1773 = vmatprep.subr.bf16.mxu0 0
    %1774 = vmatpush1.bf16.msra.mxu0 0
    %1775 = vmatprep.subr.bf16.mxu0 0
    %1776 = vmatpush1.bf16.msra.mxu0 0
    %1777 = vmatprep.subr.bf16.mxu0 0
    %1778 = vmatpush1.bf16.msra.mxu0 0
    %1779 = vmatprep.subr.bf16.mxu0 0
    %1780 = vmatpush1.bf16.msra.mxu0 0
    %1781 = vmatprep.subr.bf16.mxu0 0
    %1782 = vmatpush1.bf16.msra.mxu0 0
    %1783 = vmatprep.subr.bf16.mxu0 0
    %1784 = vmatpush1.bf16.msra.mxu0 0
    %1785 = vmatprep.subr.bf16.mxu0 0
    %1786 = vmatpush1.bf16.msra.mxu0 0
    %1787 = vmatprep.subr.bf16.mxu0 0
    %1788 = vmatpush1.bf16.msra.mxu0 0
    %1789 = vmatprep.subr.bf16.mxu0 0
    %1790 = vmatpush1.bf16.msra.mxu0 0
    %1791 = vmatprep.subr.bf16.mxu0 0
    %1792 = vmatpush1.bf16.msra.mxu0 0
    %1793 = vmatprep.subr.bf16.mxu0 0
    %1794 = vmatpush1.bf16.msra.mxu0 0
    %1795 = vmatprep.subr.bf16.mxu0 0
    %1796 = vmatpush1.bf16.msra.mxu0 0
    %1797 = vmatprep.mubr.bf16.mxu0 0
    %1798 = vmatmul.mubr.bf16.gmra.mrb[0].mxu0 %v212
    %v1799 = vpop.f32.mrb[0].mxu0
    %v1800 = vadd.f32 0.0, %v1799
    %v1801 = vpop.f32.mrb[0].mxu0
    %v1802 = vpop.f32.mrb[0].mxu0
    %v1803 = vpop.f32.mrb[0].mxu0
    %1804 = vdwg.mxu0
    %v1806 = vrot.slane %v1800, 2
    %v1808 = vadd.f32 %v1746, %v1806
    %v1809 = vxor.u32 %v1808, 2147483648
    %v1810 = vmul.f32 %v1809, 1.442695
    %v1811 = vpow.pop %v1810
    %v1812 = vadd.f32 %v1811, 1.0
    %v1813 = vrcp.pop %v1812
    %v1814 = vmul.f32 1.0, %v1813
    %v1815 = vtanh.pop %v1808
    %v1816 = vmul.f32 %v1814, 0.0
    %1818 = vrot.lane.b32.xlu0 %v1815, 64
    %v1819 = vpop.permute.xlu0 %1818
    %v1821 = vmul.f32 %v1814, %v1819
    %1823 = vrot.lane.b32.xlu0 %v1821, 32
    %v1824 = vpop.permute.xlu0 %1823
    %v1826 = vadd.f32 %v1816, %v1824
    %v1827 = vtanh.pop %v1826
    %1829 = vrot.lane.b32.xlu0 %v1827, 64
    %v1830 = vpop.permute.xlu0 %1829
    %v1832 = vmul.f32 %v1814, %v1830
    %v1833 = vpack.c.bf16 %v1832, %v1832
    %v1835 = vrot.slane %v1833, 3
    %1836 = vrot.lane.b32.xlu0 %v1835, 32
    %v1837 = vpop.permute.xlu0 %1836
    %v1839 = vsel %vm210, %v1837, 0
    %1841 = vmatprep.subr.bf16.mxu0 0
    %1842 = vmatpush1.bf16.msra.mxu0 %v1761
    %1843 = vmatprep.subr.bf16.mxu0 0
    %1844 = vmatpush1.bf16.msra.mxu0 %v1762
    %1845 = vmatprep.subr.bf16.mxu0 0
    %1846 = vmatpush1.bf16.msra.mxu0 0
    %1847 = vmatprep.subr.bf16.mxu0 0
    %1848 = vmatpush1.bf16.msra.mxu0 0
    %1849 = vmatprep.subr.bf16.mxu0 0
    %1850 = vmatpush1.bf16.msra.mxu0 0
    %1851 = vmatprep.subr.bf16.mxu0 0
    %1852 = vmatpush1.bf16.msra.mxu0 0
    %1853 = vmatprep.subr.bf16.mxu0 0
    %1854 = vmatpush1.bf16.msra.mxu0 0
    %1855 = vmatprep.subr.bf16.mxu0 0
    %1856 = vmatpush1.bf16.msra.mxu0 0
    %1857 = vmatprep.subr.bf16.mxu0 0
    %1858 = vmatpush1.bf16.msra.mxu0 0
    %1859 = vmatprep.subr.bf16.mxu0 0
    %1860 = vmatpush1.bf16.msra.mxu0 0
    %1861 = vmatprep.subr.bf16.mxu0 0
    %1862 = vmatpush1.bf16.msra.mxu0 0
    %1863 = vmatprep.subr.bf16.mxu0 0
    %1864 = vmatpush1.bf16.msra.mxu0 0
    %1865 = vmatprep.subr.bf16.mxu0 0
    %1866 = vmatpush1.bf16.msra.mxu0 0
    %1867 = vmatprep.subr.bf16.mxu0 0
    %1868 = vmatpush1.bf16.msra.mxu0 0
    %1869 = vmatprep.subr.bf16.mxu0 0
    %1870 = vmatpush1.bf16.msra.mxu0 0
    %1871 = vmatprep.subr.bf16.mxu0 0
    %1872 = vmatpush1.bf16.msra.mxu0 0
    %1873 = vmatprep.mubr.bf16.mxu0 0
    %1874 = vmatmul.mubr.bf16.gmra.mrb[0].mxu0 %v1839
    %v1875 = vpop.f32.mrb[0].mxu0
    %v1876 = vadd.f32 0.0, %v1875
    %v1877 = vpop.f32.mrb[0].mxu0
    %v1878 = vpop.f32.mrb[0].mxu0
    %v1879 = vpop.f32.mrb[0].mxu0
    %1880 = vdwg.mxu0
    %v1882 = vrot.slane %v1876, 4
    %v1884 = vadd.f32 %v1746, %v1882
    %v1885 = vxor.u32 %v1884, 2147483648
    %v1886 = vmul.f32 %v1885, 1.442695
    %v1887 = vpow.pop %v1886
    %v1888 = vadd.f32 %v1887, 1.0
    %v1889 = vrcp.pop %v1888
    %v1890 = vmul.f32 1.0, %v1889
    %v1891 = vtanh.pop %v1884
    %v1893 = vrot.slane %v1826, 2
    %v1895 = vmul.f32 %v1890, %v1893
    %1897 = vrot.lane.b32.xlu0 %v1891, 64
    %v1898 = vpop.permute.xlu0 %1897
    %v1900 = vmul.f32 %v1890, %v1898
    %1902 = vrot.lane.b32.xlu0 %v1900, 32
    %v1903 = vpop.permute.xlu0 %1902
    %v1905 = vadd.f32 %v1895, %v1903
    %v1906 = vtanh.pop %v1905
    %1908 = vrot.lane.b32.xlu0 %v1906, 64
    %v1909 = vpop.permute.xlu0 %1908
    %v1911 = vmul.f32 %v1890, %v1909
    %v1912 = vpack.c.bf16 %v1911, %v1911
    %v1914 = vrot.slane %v1912, 2
    %1915 = vrot.lane.b32.xlu0 %v1914, 32
    %v1916 = vpop.permute.xlu0 %1915
    %v1918 = vsel %vm210, %v1916, 0
    %1920 = vmatprep.subr.bf16.mxu0 0
    %1921 = vmatpush1.bf16.msra.mxu0 %v1761
    %1922 = vmatprep.subr.bf16.mxu0 0
    %1923 = vmatpush1.bf16.msra.mxu0 %v1762
    %1924 = vmatprep.subr.bf16.mxu0 0
    %1925 = vmatpush1.bf16.msra.mxu0 0
    %1926 = vmatprep.subr.bf16.mxu0 0
    %1927 = vmatpush1.bf16.msra.mxu0 0
    %1928 = vmatprep.subr.bf16.mxu0 0
    %1929 = vmatpush1.bf16.msra.mxu0 0
    %1930 = vmatprep.subr.bf16.mxu0 0
    %1931 = vmatpush1.bf16.msra.mxu0 0
    %1932 = vmatprep.subr.bf16.mxu0 0
    %1933 = vmatpush1.bf16.msra.mxu0 0
    %1934 = vmatprep.subr.bf16.mxu0 0
    %1935 = vmatpush1.bf16.msra.mxu0 0
    %1936 = vmatprep.subr.bf16.mxu0 0
    %1937 = vmatpush1.bf16.msra.mxu0 0
    %1938 = vmatprep.subr.bf16.mxu0 0
    %1939 = vmatpush1.bf16.msra.mxu0 0
    %1940 = vmatprep.subr.bf16.mxu0 0
    %1941 = vmatpush1.bf16.msra.mxu0 0
    %1942 = vmatprep.subr.bf16.mxu0 0
    %1943 = vmatpush1.bf16.msra.mxu0 0
    %1944 = vmatprep.subr.bf16.mxu0 0
    %1945 = vmatpush1.bf16.msra.mxu0 0
    %1946 = vmatprep.subr.bf16.mxu0 0
    %1947 = vmatpush1.bf16.msra.mxu0 0
    %1948 = vmatprep.subr.bf16.mxu0 0
    %1949 = vmatpush1.bf16.msra.mxu0 0
    %1950 = vmatprep.subr.bf16.mxu0 0
    %1951 = vmatpush1.bf16.msra.mxu0 0
    %1952 = vmatprep.mubr.bf16.mxu0 0
    %1953 = vmatmul.mubr.bf16.gmra.mrb[0].mxu0 %v1918
    %v1954 = vpop.f32.mrb[0].mxu0
    %v1955 = vadd.f32 0.0, %v1954
    %v1956 = vpop.f32.mrb[0].mxu0
    %v1957 = vpop.f32.mrb[0].mxu0
    %v1958 = vpop.f32.mrb[0].mxu0
    %1959 = vdwg.mxu0
    %v1961 = vrot.slane %v1955, 6
    %v1963 = vadd.f32 %v1746, %v1961
    %v1964 = vxor.u32 %v1963, 2147483648
    %v1965 = vmul.f32 %v1964, 1.442695
    %v1966 = vpow.pop %v1965
    %v1967 = vadd.f32 %v1966, 1.0
    %v1968 = vrcp.pop %v1967
    %v1969 = vmul.f32 1.0, %v1968
    %v1970 = vtanh.pop %v1963
    %v1972 = vrot.slane %v1905, 2
    %v1974 = vmul.f32 %v1969, %v1972
    %1976 = vrot.lane.b32.xlu0 %v1970, 64
    %v1977 = vpop.permute.xlu0 %1976
    %v1979 = vmul.f32 %v1969, %v1977
    %1981 = vrot.lane.b32.xlu0 %v1979, 32
    %v1982 = vpop.permute.xlu0 %1981
    %v1984 = vadd.f32 %v1974, %v1982
    %v1985 = vtanh.pop %v1984
    %1987 = vrot.lane.b32.xlu0 %v1985, 64
    %v1988 = vpop.permute.xlu0 %1987
    %v1990 = vmul.f32 %v1969, %v1988
    %v1991 = vpack.c.bf16 %v1990, %v1990
    %v1993 = vrot.slane %v1991, 1
    %1994 = vrot.lane.b32.xlu0 %v1993, 32
    %v1995 = vpop.permute.xlu0 %1994
    %v1997 = vsel %vm210, %v1995, 0
    %1999 = vmatprep.subr.bf16.mxu0 0
    %2000 = vmatpush1.bf16.msra.mxu0 %v1761
    %2001 = vmatprep.subr.bf16.mxu0 0
    %2002 = vmatpush1.bf16.msra.mxu0 %v1762
    %2003 = vmatprep.subr.bf16.mxu0 0
    %2004 = vmatpush1.bf16.msra.mxu0 0
    %2005 = vmatprep.subr.bf16.mxu0 0
    %2006 = vmatpush1.bf16.msra.mxu0 0
    %2007 = vmatprep.subr.bf16.mxu0 0
    %2008 = vmatpush1.bf16.msra.mxu0 0
    %2009 = vmatprep.subr.bf16.mxu0 0
    %2010 = vmatpush1.bf16.msra.mxu0 0
    %2011 = vmatprep.subr.bf16.mxu0 0
    %2012 = vmatpush1.bf16.msra.mxu0 0
    %2013 = vmatprep.subr.bf16.mxu0 0
    %2014 = vmatpush1.bf16.msra.mxu0 0
    %2015 = vmatprep.subr.bf16.mxu0 0
    %2016 = vmatpush1.bf16.msra.mxu0 0
    %2017 = vmatprep.subr.bf16.mxu0 0
    %2018 = vmatpush1.bf16.msra.mxu0 0
    %2019 = vmatprep.subr.bf16.mxu0 0
    %2020 = vmatpush1.bf16.msra.mxu0 0
    %2021 = vmatprep.subr.bf16.mxu0 0
    %2022 = vmatpush1.bf16.msra.mxu0 0
    %2023 = vmatprep.subr.bf16.mxu0 0
    %2024 = vmatpush1.bf16.msra.mxu0 0
    %2025 = vmatprep.subr.bf16.mxu0 0
    %2026 = vmatpush1.bf16.msra.mxu0 0
    %2027 = vmatprep.subr.bf16.mxu0 0
    %2028 = vmatpush1.bf16.msra.mxu0 0
    %2029 = vmatprep.subr.bf16.mxu0 0
    %2030 = vmatpush1.bf16.msra.mxu0 0
    %2031 = vmatprep.mubr.bf16.mxu0 0
    %2032 = vmatmul.mubr.bf16.gmra.mrb[0].mxu0 %v1997
    %v2033 = vpop.f32.mrb[0].mxu0
    %v2034 = vadd.f32 0.0, %v2033
    %v2035 = vpop.f32.mrb[0].mxu0
    %v2036 = vpop.f32.mrb[0].mxu0
    %v2037 = vpop.f32.mrb[0].mxu0
    %2038 = vdwg.mxu0
    %v2039 = vadd.f32 %v1746, %v2034
    %v2040 = vxor.u32 %v2039, 2147483648
    %v2041 = vmul.f32 %v2040, 1.442695
    %v2042 = vpow.pop %v2041
    %v2043 = vadd.f32 %v2042, 1.0
    %v2044 = vrcp.pop %v2043
    %v2045 = vmul.f32 1.0, %v2044
    %v2046 = vtanh.pop %v2039
    %v2048 = vrot.slane %v1984, 2
    %v2050 = vmul.f32 %v2045, %v2048
    %2052 = vrot.lane.b32.xlu0 %v2046, 64
    %v2053 = vpop.permute.xlu0 %2052
    %v2055 = vmul.f32 %v2045, %v2053
    %2057 = vrot.lane.b32.xlu0 %v2055, 32
    %v2058 = vpop.permute.xlu0 %2057
    %v2060 = vadd.f32 %v2050, %v2058
    %v2061 = vtanh.pop %v2060
    %2063 = vrot.lane.b32.xlu0 %v2061, 64
    %v2064 = vpop.permute.xlu0 %2063
    %v2066 = vmul.f32 %v2045, %v2064
    %v2067 = vpack.c.bf16 %v2066, %v2066
    %2069 = vrot.lane.b32.xlu0 %v2067, 32
    %v2070 = vpop.permute.xlu0 %2069
    %v2072 = vsel %vm210, %v2070, 0
    %2074 = vmatprep.subr.bf16.mxu0 0
    %2075 = vmatpush1.bf16.msra.mxu0 %v1761
    %2076 = vmatprep.subr.bf16.mxu0 0
    %2077 = vmatpush1.bf16.msra.mxu0 %v1762
    %2078 = vmatprep.subr.bf16.mxu0 0
    %2079 = vmatpush1.bf16.msra.mxu0 0
    %2080 = vmatprep.subr.bf16.mxu0 0
    %2081 = vmatpush1.bf16.msra.mxu0 0
    %2082 = vmatprep.subr.bf16.mxu0 0
    %2083 = vmatpush1.bf16.msra.mxu0 0
    %2084 = vmatprep.subr.bf16.mxu0 0
    %2085 = vmatpush1.bf16.msra.mxu0 0
    %2086 = vmatprep.subr.bf16.mxu0 0
    %2087 = vmatpush1.bf16.msra.mxu0 0
    %2088 = vmatprep.subr.bf16.mxu0 0
    %2089 = vmatpush1.bf16.msra.mxu0 0
    %2090 = vmatprep.subr.bf16.mxu0 0
    %2091 = vmatpush1.bf16.msra.mxu0 0
    %2092 = vmatprep.subr.bf16.mxu0 0
    %2093 = vmatpush1.bf16.msra.mxu0 0
    %2094 = vmatprep.subr.bf16.mxu0 0
    %2095 = vmatpush1.bf16.msra.mxu0 0
    %2096 = vmatprep.subr.bf16.mxu0 0
    %2097 = vmatpush1.bf16.msra.mxu0 0
    %2098 = vmatprep.subr.bf16.mxu0 0
    %2099 = vmatpush1.bf16.msra.mxu0 0
    %2100 = vmatprep.subr.bf16.mxu0 0
    %2101 = vmatpush1.bf16.msra.mxu0 0
    %2102 = vmatprep.subr.bf16.mxu0 0
    %2103 = vmatpush1.bf16.msra.mxu0 0
    %2104 = vmatprep.subr.bf16.mxu0 0
    %2105 = vmatpush1.bf16.msra.mxu0 0
    %2106 = vmatprep.mubr.bf16.mxu0 0
    %2107 = vmatmul.mubr.bf16.gmra.mrb[0].mxu0 %v2072
    %v2108 = vpop.f32.mrb[0].mxu0
    %v2109 = vadd.f32 0.0, %v2108
    %v2110 = vpop.f32.mrb[0].mxu0
    %v2111 = vpop.f32.mrb[0].mxu0
    %v2112 = vpop.f32.mrb[0].mxu0
    %2113 = vdwg.mxu0
    %v2115 = vrot.slane %v2109, 2
    %v2117 = vadd.f32 %v1741, %v2115
    %v2118 = vxor.u32 %v2117, 2147483648
    %v2119 = vmul.f32 %v2118, 1.442695
    %v2120 = vpow.pop %v2119
    %v2121 = vadd.f32 %v2120, 1.0
    %v2122 = vrcp.pop %v2121
    %v2123 = vmul.f32 1.0, %v2122
    %v2124 = vtanh.pop %v2117
    %v2126 = vrot.slane %v2060, 2
    %v2128 = vmul.f32 %v2123, %v2126
    %2130 = vrot.lane.b32.xlu0 %v2124, 64
    %v2131 = vpop.permute.xlu0 %2130
    %v2133 = vmul.f32 %v2123, %v2131
    %2135 = vrot.lane.b32.xlu0 %v2133, 32
    %v2136 = vpop.permute.xlu0 %2135
    %v2138 = vadd.f32 %v2128, %v2136
    %v2139 = vtanh.pop %v2138
    %2141 = vrot.lane.b32.xlu0 %v2139, 64
    %v2142 = vpop.permute.xlu0 %2141
    %v2144 = vmul.f32 %v2123, %v2142
    %v2145 = vpack.c.bf16 %v2144, %v2144
    %v2147 = vrot.slane %v2145, 3
    %2148 = vrot.lane.b32.xlu0 %v2147, 32
    %v2149 = vpop.permute.xlu0 %2148
    %v2151 = vsel %vm210, %v2149, 0
    %2153 = vmatprep.subr.bf16.mxu0 0
    %2154 = vmatpush1.bf16.msra.mxu0 %v1761
    %2155 = vmatprep.subr.bf16.mxu0 0
    %2156 = vmatpush1.bf16.msra.mxu0 %v1762
    %2157 = vmatprep.subr.bf16.mxu0 0
    %2158 = vmatpush1.bf16.msra.mxu0 0
    %2159 = vmatprep.subr.bf16.mxu0 0
    %2160 = vmatpush1.bf16.msra.mxu0 0
    %2161 = vmatprep.subr.bf16.mxu0 0
    %2162 = vmatpush1.bf16.msra.mxu0 0
    %2163 = vmatprep.subr.bf16.mxu0 0
    %2164 = vmatpush1.bf16.msra.mxu0 0
    %2165 = vmatprep.subr.bf16.mxu0 0
    %2166 = vmatpush1.bf16.msra.mxu0 0
    %2167 = vmatprep.subr.bf16.mxu0 0
    %2168 = vmatpush1.bf16.msra.mxu0 0
    %2169 = vmatprep.subr.bf16.mxu0 0
    %2170 = vmatpush1.bf16.msra.mxu0 0
    %2171 = vmatprep.subr.bf16.mxu0 0
    %2172 = vmatpush1.bf16.msra.mxu0 0
    %2173 = vmatprep.subr.bf16.mxu0 0
    %2174 = vmatpush1.bf16.msra.mxu0 0
    %2175 = vmatprep.subr.bf16.mxu0 0
    %2176 = vmatpush1.bf16.msra.mxu0 0
    %2177 = vmatprep.subr.bf16.mxu0 0
    %2178 = vmatpush1.bf16.msra.mxu0 0
    %2179 = vmatprep.subr.bf16.mxu0 0
    %2180 = vmatpush1.bf16.msra.mxu0 0
    %2181 = vmatprep.subr.bf16.mxu0 0
    %2182 = vmatpush1.bf16.msra.mxu0 0
    %2183 = vmatprep.subr.bf16.mxu0 0
    %2184 = vmatpush1.bf16.msra.mxu0 0
    %2185 = vmatprep.mubr.bf16.mxu0 0
    %2186 = vmatmul.mubr.bf16.gmra.mrb[0].mxu0 %v2151
    %v2187 = vpop.f32.mrb[0].mxu0
    %v2188 = vadd.f32 0.0, %v2187
    %v2189 = vpop.f32.mrb[0].mxu0
    %v2190 = vpop.f32.mrb[0].mxu0
    %v2191 = vpop.f32.mrb[0].mxu0
    %2192 = vdwg.mxu0
    %v2194 = vrot.slane %v2188, 4
    %v2196 = vadd.f32 %v1741, %v2194
    %v2197 = vxor.u32 %v2196, 2147483648
    %v2198 = vmul.f32 %v2197, 1.442695
    %v2199 = vpow.pop %v2198
    %v2200 = vadd.f32 %v2199, 1.0
    %v2201 = vrcp.pop %v2200
    %v2202 = vmul.f32 1.0, %v2201
    %v2203 = vtanh.pop %v2196
    %v2205 = vrot.slane %v2138, 2
    %v2207 = vmul.f32 %v2202, %v2205
    %2209 = vrot.lane.b32.xlu0 %v2203, 64
    %v2210 = vpop.permute.xlu0 %2209
    %v2212 = vmul.f32 %v2202, %v2210
    %2214 = vrot.lane.b32.xlu0 %v2212, 32
    %v2215 = vpop.permute.xlu0 %2214
    %v2217 = vadd.f32 %v2207, %v2215
    %v2218 = vtanh.pop %v2217
    %2220 = vrot.lane.b32.xlu0 %v2218, 64
    %v2221 = vpop.permute.xlu0 %2220
    %v2223 = vmul.f32 %v2202, %v2221
    %v2224 = vpack.c.bf16 %v2223, %v2223
    %v2226 = vrot.slane %v2224, 2
    %2227 = vrot.lane.b32.xlu0 %v2226, 32
    %v2228 = vpop.permute.xlu0 %2227
    %v2230 = vsel %vm210, %v2228, 0
    %2232 = vmatprep.subr.bf16.mxu0 0
    %2233 = vmatpush1.bf16.msra.mxu0 %v1761
    %2234 = vmatprep.subr.bf16.mxu0 0
    %2235 = vmatpush1.bf16.msra.mxu0 %v1762
    %2236 = vmatprep.subr.bf16.mxu0 0
    %2237 = vmatpush1.bf16.msra.mxu0 0
    %2238 = vmatprep.subr.bf16.mxu0 0
    %2239 = vmatpush1.bf16.msra.mxu0 0
    %2240 = vmatprep.subr.bf16.mxu0 0
    %2241 = vmatpush1.bf16.msra.mxu0 0
    %2242 = vmatprep.subr.bf16.mxu0 0
    %2243 = vmatpush1.bf16.msra.mxu0 0
    %2244 = vmatprep.subr.bf16.mxu0 0
    %2245 = vmatpush1.bf16.msra.mxu0 0
    %2246 = vmatprep.subr.bf16.mxu0 0
    %2247 = vmatpush1.bf16.msra.mxu0 0
    %2248 = vmatprep.subr.bf16.mxu0 0
    %2249 = vmatpush1.bf16.msra.mxu0 0
    %2250 = vmatprep.subr.bf16.mxu0 0
    %2251 = vmatpush1.bf16.msra.mxu0 0
    %2252 = vmatprep.subr.bf16.mxu0 0
    %2253 = vmatpush1.bf16.msra.mxu0 0
    %2254 = vmatprep.subr.bf16.mxu0 0
    %2255 = vmatpush1.bf16.msra.mxu0 0
    %2256 = vmatprep.subr.bf16.mxu0 0
    %2257 = vmatpush1.bf16.msra.mxu0 0
    %2258 = vmatprep.subr.bf16.mxu0 0
    %2259 = vmatpush1.bf16.msra.mxu0 0
    %2260 = vmatprep.subr.bf16.mxu0 0
    %2261 = vmatpush1.bf16.msra.mxu0 0
    %2262 = vmatprep.subr.bf16.mxu0 0
    %2263 = vmatpush1.bf16.msra.mxu0 0
    %2264 = vmatprep.mubr.bf16.mxu0 0
    %2265 = vmatmul.mubr.bf16.gmra.mrb[0].mxu0 %v2230
    %v2266 = vpop.f32.mrb[0].mxu0
    %v2267 = vadd.f32 0.0, %v2266
    %v2268 = vpop.f32.mrb[0].mxu0
    %v2269 = vpop.f32.mrb[0].mxu0
    %v2270 = vpop.f32.mrb[0].mxu0
    %2271 = vdwg.mxu0
    %v2273 = vrot.slane %v2267, 6
    %v2275 = vadd.f32 %v1741, %v2273
    %v2276 = vxor.u32 %v2275, 2147483648
    %v2277 = vmul.f32 %v2276, 1.442695
    %v2278 = vpow.pop %v2277
    %v2279 = vadd.f32 %v2278, 1.0
    %v2280 = vrcp.pop %v2279
    %v2281 = vmul.f32 1.0, %v2280
    %v2282 = vtanh.pop %v2275
    %v2284 = vrot.slane %v2217, 2
    %v2286 = vmul.f32 %v2281, %v2284
    %2288 = vrot.lane.b32.xlu0 %v2282, 64
    %v2289 = vpop.permute.xlu0 %2288
    %v2291 = vmul.f32 %v2281, %v2289
    %2293 = vrot.lane.b32.xlu0 %v2291, 32
    %v2294 = vpop.permute.xlu0 %2293
    %v2296 = vadd.f32 %v2286, %v2294
    %v2297 = vtanh.pop %v2296
    %2299 = vrot.lane.b32.xlu0 %v2297, 64
    %v2300 = vpop.permute.xlu0 %2299
    %v2302 = vmul.f32 %v2281, %v2300
    %v2303 = vpack.c.bf16 %v2302, %v2302
    %v2305 = vrot.slane %v2303, 1
    %2306 = vrot.lane.b32.xlu0 %v2305, 32
    %v2307 = vpop.permute.xlu0 %2306
    %v2309 = vsel %vm210, %v2307, 0
    %2311 = vmatprep.subr.bf16.mxu0 0
    %2312 = vmatpush1.bf16.msra.mxu0 %v1761
    %2313 = vmatprep.subr.bf16.mxu0 0
    %2314 = vmatpush1.bf16.msra.mxu0 %v1762
    %2315 = vmatprep.subr.bf16.mxu0 0
    %2316 = vmatpush1.bf16.msra.mxu0 0
    %2317 = vmatprep.subr.bf16.mxu0 0
    %2318 = vmatpush1.bf16.msra.mxu0 0
    %2319 = vmatprep.subr.bf16.mxu0 0
    %2320 = vmatpush1.bf16.msra.mxu0 0
    %2321 = vmatprep.subr.bf16.mxu0 0
    %2322 = vmatpush1.bf16.msra.mxu0 0
    %2323 = vmatprep.subr.bf16.mxu0 0
    %2324 = vmatpush1.bf16.msra.mxu0 0
    %2325 = vmatprep.subr.bf16.mxu0 0
    %2326 = vmatpush1.bf16.msra.mxu0 0
    %2327 = vmatprep.subr.bf16.mxu0 0
    %2328 = vmatpush1.bf16.msra.mxu0 0
    %2329 = vmatprep.subr.bf16.mxu0 0
    %2330 = vmatpush1.bf16.msra.mxu0 0
    %2331 = vmatprep.subr.bf16.mxu0 0
    %2332 = vmatpush1.bf16.msra.mxu0 0
    %2333 = vmatprep.subr.bf16.mxu0 0
    %2334 = vmatpush1.bf16.msra.mxu0 0
    %2335 = vmatprep.subr.bf16.mxu0 0
    %2336 = vmatpush1.bf16.msra.mxu0 0
    %2337 = vmatprep.subr.bf16.mxu0 0
    %2338 = vmatpush1.bf16.msra.mxu0 0
    %2339 = vmatprep.subr.bf16.mxu0 0
    %2340 = vmatpush1.bf16.msra.mxu0 0
    %2341 = vmatprep.subr.bf16.mxu0 0
    %2342 = vmatpush1.bf16.msra.mxu0 0
    %2343 = vmatprep.mubr.bf16.mxu0 0
    %2344 = vmatmul.mubr.bf16.gmra.mrb[0].mxu0 %v2309
    %v2345 = vpop.f32.mrb[0].mxu0
    %v2346 = vadd.f32 0.0, %v2345
    %v2347 = vpop.f32.mrb[0].mxu0
    %v2348 = vpop.f32.mrb[0].mxu0
    %v2349 = vpop.f32.mrb[0].mxu0
    %2350 = vdwg.mxu0
    %v2351 = vadd.f32 %v1741, %v2346
    %v2352 = vxor.u32 %v2351, 2147483648
    %v2353 = vmul.f32 %v2352, 1.442695
    %v2354 = vpow.pop %v2353
    %v2355 = vadd.f32 %v2354, 1.0
    %v2356 = vrcp.pop %v2355
    %v2357 = vmul.f32 1.0, %v2356
    %v2358 = vtanh.pop %v2351
    %v2360 = vrot.slane %v2296, 2
    %v2362 = vmul.f32 %v2357, %v2360
    %2364 = vrot.lane.b32.xlu0 %v2358, 64
    %v2365 = vpop.permute.xlu0 %2364
    %v2367 = vmul.f32 %v2357, %v2365
    %2369 = vrot.lane.b32.xlu0 %v2367, 32
    %v2370 = vpop.permute.xlu0 %2369
    %v2372 = vadd.f32 %v2362, %v2370
    %v2373 = vtanh.pop %v2372
    %2375 = vrot.lane.b32.xlu0 %v2373, 64
    %v2376 = vpop.permute.xlu0 %2375
    %v2378 = vmul.f32 %v2357, %v2376
    %v2379 = vld [vmem:[#allocation14] sm:$0xff]
    %v2380 = vld [vmem:[#allocation14 + $0x8] sm:$0xff]
    %v2381 = vld [vmem:[#allocation14 + $0x10] sm:$0xff]
    %v2382 = vld [vmem:[#allocation14 + $0x18] sm:$0xff]
    %v2383 = vld [vmem:[#allocation14 + $0x20] sm:$0xff]
    %v2384 = vld [vmem:[#allocation14 + $0x28] sm:$0xff]
    %v2385 = vld [vmem:[#allocation14 + $0x30] sm:$0xff]
    %v2386 = vld [vmem:[#allocation14 + $0x38] sm:$0xff]
    %2388 = vrot.lane.b32.xlu0 %v2378, 32
    %v2389 = vpop.permute.xlu0 %2388
    %v2390 = vsel %vm210, %v2389, 0
    %2392 = vmatprep.subr.mxu0 0.0
    %2393 = vmatpush1.msra.mxu0 %v2383
    %2394 = vmatprep.subr.mxu0 0.0
    %2395 = vmatpush1.msra.mxu0 %v2384
    %2396 = vmatprep.subr.mxu0 0.0
    %2397 = vmatpush1.msra.mxu0 %v2385
    %2398 = vmatprep.subr.mxu0 0.0
    %2399 = vmatpush1.msra.mxu0 %v2386
    %2400 = vmatprep.subr.mxu0 0.0
    %2401 = vmatpush1.msra.mxu0 0.0
    %2402 = vmatprep.subr.mxu0 0.0
    %2403 = vmatpush1.msra.mxu0 0.0
    %2404 = vmatprep.subr.mxu0 0.0
    %2405 = vmatpush1.msra.mxu0 0.0
    %2406 = vmatprep.subr.mxu0 0.0
    %2407 = vmatpush1.msra.mxu0 0.0
    %2408 = vmatprep.subr.mxu0 0.0
    %2409 = vmatpush1.msra.mxu0 0.0
    %2410 = vmatprep.subr.mxu0 0.0
    %2411 = vmatpush1.msra.mxu0 0.0
    %2412 = vmatprep.subr.mxu0 0.0
    %2413 = vmatpush1.msra.mxu0 0.0
    %2414 = vmatprep.subr.mxu0 0.0
    %2415 = vmatpush1.msra.mxu0 0.0
    %2416 = vmatprep.subr.mxu0 0.0
    %2417 = vmatpush1.msra.mxu0 0.0
    %2418 = vmatprep.subr.mxu0 0.0
    %2419 = vmatpush1.msra.mxu0 0.0
    %2420 = vmatprep.subr.mxu0 0.0
    %2421 = vmatpush1.msra.mxu0 0.0
    %2422 = vmatprep.subr.mxu0 0.0
    %2423 = vmatpush1.msra.mxu0 0.0
    %2424 = vmatprep.subr.mxu0 0.0
    %2425 = vmatpush1.msra.mxu0 0.0
    %2426 = vmatprep.subr.mxu0 0.0
    %2427 = vmatpush1.msra.mxu0 0.0
    %2428 = vmatprep.subr.mxu0 0.0
    %2429 = vmatpush1.msra.mxu0 0.0
    %2430 = vmatprep.subr.mxu0 0.0
    %2431 = vmatpush1.msra.mxu0 0.0
    %2432 = vmatprep.subr.mxu0 0.0
    %2433 = vmatpush1.msra.mxu0 0.0
    %2434 = vmatprep.subr.mxu0 0.0
    %2435 = vmatpush1.msra.mxu0 0.0
    %2436 = vmatprep.subr.mxu0 0.0
    %2437 = vmatpush1.msra.mxu0 0.0
    %2438 = vmatprep.subr.mxu0 0.0
    %2439 = vmatpush1.msra.mxu0 0.0
    %2440 = vmatprep.subr.mxu0 0.0
    %2441 = vmatpush1.msra.mxu0 0.0
    %2442 = vmatprep.subr.mxu0 0.0
    %2443 = vmatpush1.msra.mxu0 0.0
    %2444 = vmatprep.subr.mxu0 0.0
    %2445 = vmatpush1.msra.mxu0 0.0
    %2446 = vmatprep.subr.mxu0 0.0
    %2447 = vmatpush1.msra.mxu0 0.0
    %2448 = vmatprep.subr.mxu0 0.0
    %2449 = vmatpush1.msra.mxu0 0.0
    %2450 = vmatprep.subr.mxu0 0.0
    %2451 = vmatpush1.msra.mxu0 0.0
    %2452 = vmatprep.subr.mxu0 0.0
    %2453 = vmatpush1.msra.mxu0 0.0
    %2454 = vmatprep.subr.mxu0 0.0
    %2455 = vmatpush1.msra.mxu0 0.0
    %2456 = vmatprep.mubr.f32.mxu0 0.0
    %2457 = vmatmul.mubr.f32.gmra.mrb[0].mxu0 %v2390
    %v2458 = vpop.f32.mrb[0].mxu0
    %v2459 = vadd.f32 0.0, %v2458
    %v2460 = vpop.f32.mrb[0].mxu0
    %2461 = vdwg.mxu0
    %2463 = vrot.lane.b32.xlu0 %v1655, 32
    %v2464 = vpop.permute.xlu0 %2463
    %v2465 = vsel %vm210, %v2464, 0
    %2467 = vmatprep.subr.mxu0 0.0
    %2468 = vmatpush1.msra.mxu0 %v2379
    %2469 = vmatprep.subr.mxu0 0.0
    %2470 = vmatpush1.msra.mxu0 %v2380
    %2471 = vmatprep.subr.mxu0 0.0
    %2472 = vmatpush1.msra.mxu0 %v2381
    %2473 = vmatprep.subr.mxu0 0.0
    %2474 = vmatpush1.msra.mxu0 %v2382
    %2475 = vmatprep.subr.mxu0 0.0
    %2476 = vmatpush1.msra.mxu0 0.0
    %2477 = vmatprep.subr.mxu0 0.0
    %2478 = vmatpush1.msra.mxu0 0.0
    %2479 = vmatprep.subr.mxu0 0.0
    %2480 = vmatpush1.msra.mxu0 0.0
    %2481 = vmatprep.subr.mxu0 0.0
    %2482 = vmatpush1.msra.mxu0 0.0
    %2483 = vmatprep.subr.mxu0 0.0
    %2484 = vmatpush1.msra.mxu0 0.0
    %2485 = vmatprep.subr.mxu0 0.0
    %2486 = vmatpush1.msra.mxu0 0.0
    %2487 = vmatprep.subr.mxu0 0.0
    %2488 = vmatpush1.msra.mxu0 0.0
    %2489 = vmatprep.subr.mxu0 0.0
    %2490 = vmatpush1.msra.mxu0 0.0
    %2491 = vmatprep.subr.mxu0 0.0
    %2492 = vmatpush1.msra.mxu0 0.0
    %2493 = vmatprep.subr.mxu0 0.0
    %2494 = vmatpush1.msra.mxu0 0.0
    %2495 = vmatprep.subr.mxu0 0.0
    %2496 = vmatpush1.msra.mxu0 0.0
    %2497 = vmatprep.subr.mxu0 0.0
    %2498 = vmatpush1.msra.mxu0 0.0
    %2499 = vmatprep.subr.mxu0 0.0
    %2500 = vmatpush1.msra.mxu0 0.0
    %2501 = vmatprep.subr.mxu0 0.0
    %2502 = vmatpush1.msra.mxu0 0.0
    %2503 = vmatprep.subr.mxu0 0.0
    %2504 = vmatpush1.msra.mxu0 0.0
    %2505 = vmatprep.subr.mxu0 0.0
    %2506 = vmatpush1.msra.mxu0 0.0
    %2507 = vmatprep.subr.mxu0 0.0
    %2508 = vmatpush1.msra.mxu0 0.0
    %2509 = vmatprep.subr.mxu0 0.0
    %2510 = vmatpush1.msra.mxu0 0.0
    %2511 = vmatprep.subr.mxu0 0.0
    %2512 = vmatpush1.msra.mxu0 0.0
    %2513 = vmatprep.subr.mxu0 0.0
    %2514 = vmatpush1.msra.mxu0 0.0
    %2515 = vmatprep.subr.mxu0 0.0
    %2516 = vmatpush1.msra.mxu0 0.0
    %2517 = vmatprep.subr.mxu0 0.0
    %2518 = vmatpush1.msra.mxu0 0.0
    %2519 = vmatprep.subr.mxu0 0.0
    %2520 = vmatpush1.msra.mxu0 0.0
    %2521 = vmatprep.subr.mxu0 0.0
    %2522 = vmatpush1.msra.mxu0 0.0
    %2523 = vmatprep.subr.mxu0 0.0
    %2524 = vmatpush1.msra.mxu0 0.0
    %2525 = vmatprep.subr.mxu0 0.0
    %2526 = vmatpush1.msra.mxu0 0.0
    %2527 = vmatprep.subr.mxu0 0.0
    %2528 = vmatpush1.msra.mxu0 0.0
    %2529 = vmatprep.subr.mxu0 0.0
    %2530 = vmatpush1.msra.mxu0 0.0
    %2531 = vmatprep.mubr.f32.mxu0 0.0
    %2532 = vmatmul.mubr.f32.gmra.mrb[0].mxu0 %v2465
    %v2533 = vpop.f32.mrb[0].mxu0
    %v2534 = vadd.f32 %v2459, %v2533
    %v2535 = vpop.f32.mrb[0].mxu0
    %2536 = vdwg.mxu0
    %v2537 = vld [vmem:[#allocation15] sm:$0x1]
    %v2539 = vlaneseq
    %v2540 = vshrl.u32 %v2539, 7
    %v2541 = vsub.s32 0, %v2540
    %v2542 = vrot.slane %v2537, %v2541
    %v2544 = vadd.f32 %v2534, %v2542
    %2545 = vst [vmem:[#allocation17] sm:$0x3] %v2544
    // Predicated region
    $region82: #{lstm4ts_forward.1} parent=1 // pred_check
      _
    $region83: #{lstm4ts_forward.1} parent=1 // pred_check_branch
      %2547 = sbr.rel (0) target = $region85
    $region84: #{lstm4ts_forward.1} parent=1 // pred_region
      %s2549 = ssub.s32 32, 32
      %2550 = vsyncadd [#allocation5], %s2549
      %s2552 = sshll.u32 [#allocation17], 4
      %s2553 = int_to_ptr.vmem [resolvable:$true] %s2552
      %2555 = dma.vmem_to_hbm [thread:$0]  %s2553, 32, %s12, [#allocation5]
    $region85: #{lstm4ts_forward.1} parent=1 // pred_fallthru
      _
    // Predicated region
    $region86: #{lstm4ts_forward.1} parent=1 // pred_check
      _
    $region87: #{lstm4ts_forward.1} parent=1 // pred_check_branch
      %2557 = sbr.rel (0) target = $region89
    $region88: #{lstm4ts_forward.1} parent=1 // pred_region
      %2558 = dma.done [#allocation5], 32
    $region89: #{lstm4ts_forward.1} parent=1 // pred_fallthru
      _
    %2559 = vsyncpa [#allocation4], 1
    %2560 = vsyncpa [#allocation7], 1
    %2561 = vsyncpa [#allocation10], 1
    %2562 = vsyncpa [#allocation13], 1
    %2563 = vsyncpa [#allocation16], 1
    %2564 = vsyncpa [#allocation5], 1

</llo_original>
